<compile_context>
chip_gen: v6e
topology: v6e:2x2x1
jax: 0.10.0
libtpu: 0.0.40
codegen_flags: <defaults>
</compile_context>

<pallas_src>
import jax
import jax.numpy as jnp
from jax import lax
from jax.experimental import pallas as pl
from jax.experimental.pallas import tpu as pltpu


def _round_up(x, m):
    return (x + m - 1) // m * m


def _pick_row_tile(h, padded_width, target_rows=1024):
    """Largest divisor of h keeping the matmul M = tile_rows * padded_width near target."""
    bound = max(1, target_rows // padded_width)
    if h % 8 == 0:
        bound = max(bound, 8)          # keep halo duplication <= 25%
    th = 1
    for cand in range(1, h + 1):
        if h % cand == 0 and cand <= bound:
            th = cand
    return th


def _vmem_limit_bytes(th, wpt, w_out, cin, cout):
    """Scoped-VMEM budget derived from the actual block shapes (v7x-safe, <= 48 MiB)."""
    f32 = 4
    x_blk = (th + 2) * wpt * _round_up(cin, 128) * f32
    o_blk = th * _round_up(w_out, 8) * _round_up(cout, 128) * f32
    w_blk = 3 * _round_up(cin, 8) * _round_up(3 * cout, 128) * f32
    y_val = th * wpt * _round_up(3 * cout, 128) * f32
    acc = th * _round_up(w_out, 8) * _round_up(cout, 128) * f32
    est = 2 * (x_blk + o_blk) + w_blk + 2 * y_val + 2 * acc + (2 << 20)
    return int(min(48 * 2**20, max(32 * 2**20, 2 * est)))


def _reflect_conv3x3_kernel(x_ref, w_ref, b_ref, o_ref):
    """One (batch, row-tile) step of reflect-pad(1) + 3x3 conv.

    x_ref: (TH+2, WpT, Cin)  reflection-padded rows for this tile, WpT % 8 == 0
    w_ref: (3, Cin, 3*Cout)  per-dy weights; N axis is (dx, cout), dx-major
    b_ref: (1, Cout)
    o_ref: (TH, W, Cout)
    """
    th, w_out, cout = o_ref.shape
    _, wpt, cin = x_ref.shape

    acc = jnp.zeros((th, w_out, cout), jnp.float32)
    for dy in range(3):
        # Full contiguous padded rows -> one MXU matmul per dy (K=Cin, N=3*Cout).
        # WpT % 8 == 0, so this reshape is a pure view (no VMEM relayout).
        lhs = x_ref[pl.ds(dy, th), :, :].reshape(th * wpt, cin)
        y = jnp.dot(lhs, w_ref[dy], preferred_element_type=jnp.float32)
        y = y.reshape(th, wpt, 3 * cout)
        # dx shift handled with shifted adds on the small per-tile result.
        for dx in range(3):
            acc = acc + lax.slice(
                y, (0, dx, dx * cout), (th, dx + w_out, (dx + 1) * cout))
    acc = acc + b_ref[...].astype(jnp.float32)
    o_ref[...] = acc.astype(o_ref.dtype)


def decoder1_forward(x_nchw, weight_oihw, bias, *, row_tile=None):
    """ReflectionPad2d((1,1,1,1)) + Conv2d(k=3, s=1, p=0), matching Decoder1.forward.

    x_nchw: (B, Cin, H, W); weight_oihw: (Cout, Cin, 3, 3); bias: (Cout,).
    Returns (B, Cout, H, W).
    """
    B, Cin, H, W = x_nchw.shape
    Cout = weight_oihw.shape[0]
    assert weight_oihw.shape == (Cout, Cin, 3, 3)
    assert H >= 2 and W >= 2, "reflection pad of 1 needs spatial dims >= 2"

    # ---- glue: layout change + ONE gather that builds reflection-padded row windows.
    x_nhwc = jnp.transpose(x_nchw, (0, 2, 3, 1))             # channels -> lanes

    wpt = _round_up(W + 2, 8)                                # padded width (view-friendly)
    th = row_tile if row_tile is not None else _pick_row_tile(H, wpt)
    assert H % th == 0
    R = H // th

    # reflection source indices: padded index p -> source index in [0, H) / [0, W)
    row_src = jnp.concatenate(
        [jnp.array([1], jnp.int32), jnp.arange(H, dtype=jnp.int32),
         jnp.array([H - 2], jnp.int32)])
    col_src = jnp.concatenate(
        [jnp.array([1], jnp.int32), jnp.arange(W, dtype=jnp.int32),
         jnp.array([W - 2], jnp.int32),
         jnp.full((wpt - (W + 2),), W - 1, jnp.int32)])      # alignment filler, never read
    # overlapping row windows (1-row halo top/bottom per tile)
    win = (jnp.arange(R, dtype=jnp.int32)[:, None] * th
           + jnp.arange(th + 2, dtype=jnp.int32)[None, :])   # (R, TH+2)
    row_idx = row_src[win]
    xw = x_nhwc[:, row_idx]                                  # (B, R, TH+2, W, Cin)
    xw = xw[:, :, :, col_src, :]                             # (B, R, TH+2, WpT, Cin)

    # weights: (Cout, Cin, ky, kx) -> (ky, Cin, kx*Cout): 3 dx taps share one matmul per dy
    wk = jnp.transpose(weight_oihw, (2, 1, 3, 0)).reshape(3, Cin, 3 * Cout)
    bk = bias.reshape(1, Cout).astype(jnp.float32)

    out_nhwc = pl.pallas_call(
        _reflect_conv3x3_kernel,
        out_shape=jax.ShapeDtypeStruct((B, H, W, Cout), x_nchw.dtype),
        grid_spec=pltpu.PrefetchScalarGridSpec(
            num_scalar_prefetch=0,
            grid=(B, R),
            in_specs=[
                pl.BlockSpec((pl.Squeezed(), pl.Squeezed(), th + 2, wpt, Cin),
                             lambda b, r: (b, r, 0, 0, 0)),
                pl.BlockSpec((3, Cin, 3 * Cout), lambda b, r: (0, 0, 0)),
                pl.BlockSpec((1, Cout), lambda b, r: (0, 0)),
            ],
            out_specs=pl.BlockSpec((pl.Squeezed(), th, W, Cout),
                                   lambda b, r: (b, r, 0, 0)),
        ),
        compiler_params=pltpu.CompilerParams(
            dimension_semantics=("parallel", "parallel"),
            vmem_limit_bytes=_vmem_limit_bytes(th, wpt, W, Cin, Cout),
        ),
    )(xw, wk, bk)

    return jnp.transpose(out_nhwc, (0, 3, 1, 2))


# ---------------- pure-JAX reference (correctness check) ----------------------

def decoder1_ref(x_nchw, weight_oihw, bias):
    x = jnp.transpose(x_nchw, (0, 2, 3, 1))
    xp = jnp.pad(x, ((0, 0), (1, 1), (1, 1), (0, 0)), mode="reflect")
    w_hwio = jnp.transpose(weight_oihw, (2, 3, 1, 0))
    y = lax.conv_general_dilated(
        xp, w_hwio, window_strides=(1, 1), padding="VALID",
        dimension_numbers=("NHWC", "HWIO", "NHWC"))
    y = y + bias
    return jnp.transpose(y, (0, 3, 1, 2))


if __name__ == "__main__":
    key = jax.random.PRNGKey(0)
    kx, kw, kb = jax.random.split(key, 3)
    # Decoder1 fixes Cin=64, Cout=3; small spatial size for the smoke test.
    B, Cin, H, W = 2, 64, 32, 32
    x = jax.random.normal(kx, (B, Cin, H, W), jnp.float32)
    w = jax.random.normal(kw, (3, Cin, 3, 3), jnp.float32) / jnp.sqrt(9.0 * Cin)
    b = jax.random.normal(kb, (3,), jnp.float32) * 0.1

    fwd = jax.jit(decoder1_forward)
    y = jax.block_until_ready(fwd(x, w, b))
    assert y.shape == (B, 3, H, W), y.shape

    y_ref = jax.block_until_ready(jax.jit(decoder1_ref)(x, w, b))
    err = float(jnp.max(jnp.abs(y - y_ref)))
    assert jnp.allclose(y, y_ref, rtol=1e-4, atol=1e-4), err

    print("KERNEL_OK")
</pallas_src>

<mosaic_0001>
module attributes {stable_mosaic.version = 11 : i64} {
  func.func @_reflect_conv3x3_kernel(%arg0: i32, %arg1: i32, %arg2: memref<1x1x18x40x64xf32, #tpu.memory_space<vmem>>, %arg3: memref<3x64x9xf32, #tpu.memory_space<vmem>>, %arg4: memref<1x3xf32, #tpu.memory_space<vmem>>, %arg5: memref<1x16x32x3xf32, #tpu.memory_space<vmem>>) attributes {dimension_semantics = [#tpu.dimension_semantics<parallel>, #tpu.dimension_semantics<parallel>], iteration_bounds = array<i64: 2, 2>, scalar_prefetch = 0 : i64, scratch_operands = 0 : i64, tpu.core_type = #tpu.core_type<tc>, window_params = [{transform_indices = @transform_0, window_bounds = array<i64: 1, 1, 18, 40, 64>}, {pipeline_mode = #tpu.pipeline_mode<synchronous>, transform_indices = @transform_1, window_bounds = array<i64: 3, 64, 9>}, {pipeline_mode = #tpu.pipeline_mode<synchronous>, transform_indices = @transform_2, window_bounds = array<i64: 1, 3>}, {transform_indices = @transform_3, window_bounds = array<i64: 1, 16, 32, 3>}]} {
    %cst = arith.constant 0.000000e+00 : f32
    %0 = vector.broadcast %cst : f32 to vector<16x32x3xf32>
    %c0 = arith.constant 0 : index
    %c0_0 = arith.constant 0 : index
    %c0_1 = arith.constant 0 : index
    %c0_2 = arith.constant 0 : index
    %c0_3 = arith.constant 0 : index
    %1 = vector.load %arg2[%c0, %c0_0, %c0_1, %c0_2, %c0_3] : memref<1x1x18x40x64xf32, #tpu.memory_space<vmem>>, vector<1x1x16x40x64xf32>
    %2 = vector.shape_cast %1 : vector<1x1x16x40x64xf32> to vector<16x40x64xf32>
    %3 = vector.shape_cast %2 : vector<16x40x64xf32> to vector<640x64xf32>
    %c0_4 = arith.constant 0 : index
    %c0_5 = arith.constant 0 : index
    %c0_6 = arith.constant 0 : index
    %4 = vector.load %arg3[%c0_4, %c0_5, %c0_6] : memref<3x64x9xf32, #tpu.memory_space<vmem>>, vector<1x64x9xf32>
    %5 = vector.shape_cast %4 : vector<1x64x9xf32> to vector<64x9xf32>
    %cst_7 = arith.constant dense<0.000000e+00> : vector<640x9xf32>
    %6 = tpu.matmul %3, %5, %cst_7 {dimension_numbers = #tpu.dot_dimension_numbers<[1], [0], [0], [1], [0, 0, 1, 1], [], []>} : vector<640x64xf32>, vector<64x9xf32>, vector<640x9xf32> -> vector<640x9xf32>
    %7 = vector.shape_cast %6 : vector<640x9xf32> to vector<16x40x9xf32>
    %8 = vector.extract_strided_slice %7 {offsets = [0, 0, 0], sizes = [16, 32, 3], strides = [1, 1, 1]} : vector<16x40x9xf32> to vector<16x32x3xf32>
    %9 = arith.addf %0, %8 : vector<16x32x3xf32>
    %10 = vector.extract_strided_slice %7 {offsets = [0, 1, 3], sizes = [16, 32, 3], strides = [1, 1, 1]} : vector<16x40x9xf32> to vector<16x32x3xf32>
    %11 = arith.addf %9, %10 : vector<16x32x3xf32>
    %12 = vector.extract_strided_slice %7 {offsets = [0, 2, 6], sizes = [16, 32, 3], strides = [1, 1, 1]} : vector<16x40x9xf32> to vector<16x32x3xf32>
    %13 = arith.addf %11, %12 : vector<16x32x3xf32>
    %c0_8 = arith.constant 0 : index
    %c0_9 = arith.constant 0 : index
    %c1 = arith.constant 1 : index
    %c0_10 = arith.constant 0 : index
    %c0_11 = arith.constant 0 : index
    %14 = vector.load %arg2[%c0_8, %c0_9, %c1, %c0_10, %c0_11] : memref<1x1x18x40x64xf32, #tpu.memory_space<vmem>>, vector<1x1x16x40x64xf32>
    %15 = vector.shape_cast %14 : vector<1x1x16x40x64xf32> to vector<16x40x64xf32>
    %16 = vector.shape_cast %15 : vector<16x40x64xf32> to vector<640x64xf32>
    %c1_12 = arith.constant 1 : index
    %c0_13 = arith.constant 0 : index
    %c0_14 = arith.constant 0 : index
    %17 = vector.load %arg3[%c1_12, %c0_13, %c0_14] : memref<3x64x9xf32, #tpu.memory_space<vmem>>, vector<1x64x9xf32>
    %18 = vector.shape_cast %17 : vector<1x64x9xf32> to vector<64x9xf32>
    %cst_15 = arith.constant dense<0.000000e+00> : vector<640x9xf32>
    %19 = tpu.matmul %16, %18, %cst_15 {dimension_numbers = #tpu.dot_dimension_numbers<[1], [0], [0], [1], [0, 0, 1, 1], [], []>} : vector<640x64xf32>, vector<64x9xf32>, vector<640x9xf32> -> vector<640x9xf32>
    %20 = vector.shape_cast %19 : vector<640x9xf32> to vector<16x40x9xf32>
    %21 = vector.extract_strided_slice %20 {offsets = [0, 0, 0], sizes = [16, 32, 3], strides = [1, 1, 1]} : vector<16x40x9xf32> to vector<16x32x3xf32>
    %22 = arith.addf %13, %21 : vector<16x32x3xf32>
    %23 = vector.extract_strided_slice %20 {offsets = [0, 1, 3], sizes = [16, 32, 3], strides = [1, 1, 1]} : vector<16x40x9xf32> to vector<16x32x3xf32>
    %24 = arith.addf %22, %23 : vector<16x32x3xf32>
    %25 = vector.extract_strided_slice %20 {offsets = [0, 2, 6], sizes = [16, 32, 3], strides = [1, 1, 1]} : vector<16x40x9xf32> to vector<16x32x3xf32>
    %26 = arith.addf %24, %25 : vector<16x32x3xf32>
    %c0_16 = arith.constant 0 : index
    %c0_17 = arith.constant 0 : index
    %c2 = arith.constant 2 : index
    %c0_18 = arith.constant 0 : index
    %c0_19 = arith.constant 0 : index
    %27 = vector.load %arg2[%c0_16, %c0_17, %c2, %c0_18, %c0_19] : memref<1x1x18x40x64xf32, #tpu.memory_space<vmem>>, vector<1x1x16x40x64xf32>
    %28 = vector.shape_cast %27 : vector<1x1x16x40x64xf32> to vector<16x40x64xf32>
    %29 = vector.shape_cast %28 : vector<16x40x64xf32> to vector<640x64xf32>
    %c2_20 = arith.constant 2 : index
    %c0_21 = arith.constant 0 : index
    %c0_22 = arith.constant 0 : index
    %30 = vector.load %arg3[%c2_20, %c0_21, %c0_22] : memref<3x64x9xf32, #tpu.memory_space<vmem>>, vector<1x64x9xf32>
    %31 = vector.shape_cast %30 : vector<1x64x9xf32> to vector<64x9xf32>
    %cst_23 = arith.constant dense<0.000000e+00> : vector<640x9xf32>
    %32 = tpu.matmul %29, %31, %cst_23 {dimension_numbers = #tpu.dot_dimension_numbers<[1], [0], [0], [1], [0, 0, 1, 1], [], []>} : vector<640x64xf32>, vector<64x9xf32>, vector<640x9xf32> -> vector<640x9xf32>
    %33 = vector.shape_cast %32 : vector<640x9xf32> to vector<16x40x9xf32>
    %34 = vector.extract_strided_slice %33 {offsets = [0, 0, 0], sizes = [16, 32, 3], strides = [1, 1, 1]} : vector<16x40x9xf32> to vector<16x32x3xf32>
    %35 = arith.addf %26, %34 : vector<16x32x3xf32>
    %36 = vector.extract_strided_slice %33 {offsets = [0, 1, 3], sizes = [16, 32, 3], strides = [1, 1, 1]} : vector<16x40x9xf32> to vector<16x32x3xf32>
    %37 = arith.addf %35, %36 : vector<16x32x3xf32>
    %38 = vector.extract_strided_slice %33 {offsets = [0, 2, 6], sizes = [16, 32, 3], strides = [1, 1, 1]} : vector<16x40x9xf32> to vector<16x32x3xf32>
    %39 = arith.addf %37, %38 : vector<16x32x3xf32>
    %c0_24 = arith.constant 0 : index
    %c0_25 = arith.constant 0 : index
    %40 = vector.load %arg4[%c0_24, %c0_25] : memref<1x3xf32, #tpu.memory_space<vmem>>, vector<1x3xf32>
    %41 = vector.shape_cast %40 : vector<1x3xf32> to vector<1x1x3xf32>
    %42 = vector.broadcast %41 : vector<1x1x3xf32> to vector<16x32x3xf32>
    %43 = arith.addf %39, %42 : vector<16x32x3xf32>
    %c0_26 = arith.constant 0 : index
    %c0_27 = arith.constant 0 : index
    %c0_28 = arith.constant 0 : index
    %c0_29 = arith.constant 0 : index
    %44 = vector.load %arg5[%c0_26, %c0_27, %c0_28, %c0_29] : memref<1x16x32x3xf32, #tpu.memory_space<vmem>>, vector<1x16x32x3xf32>
    %45 = vector.shape_cast %44 : vector<1x16x32x3xf32> to vector<16x32x3xf32>
    %46 = vector.shape_cast %43 : vector<16x32x3xf32> to vector<1x16x32x3xf32>
    tpu.vector_store %arg5[%c0_26, %c0_27, %c0_28, %c0_29], %46 {strides = array<i32>} : memref<1x16x32x3xf32, #tpu.memory_space<vmem>>, vector<1x16x32x3xf32>,
    return
  }
  func.func @transform_0(%arg0: i32, %arg1: i32) -> (i32, i32, i32, i32, i32) {
    %c0_i32 = arith.constant 0 : i32
    %c0_i32_0 = arith.constant 0 : i32
    %c0_i32_1 = arith.constant 0 : i32
    %c0_i32_2 = arith.constant 0 : i32
    return %arg0, %arg1, %c0_i32, %c0_i32_0, %c0_i32_1 : i32, i32, i32, i32, i32
  }
  func.func @transform_1(%arg0: i32, %arg1: i32) -> (i32, i32, i32) {
    %c0_i32 = arith.constant 0 : i32
    %c0_i32_0 = arith.constant 0 : i32
    %c0_i32_1 = arith.constant 0 : i32
    %c0_i32_2 = arith.constant 0 : i32
    return %c0_i32, %c0_i32_0, %c0_i32_1 : i32, i32, i32
  }
  func.func @transform_2(%arg0: i32, %arg1: i32) -> (i32, i32) {
    %c0_i32 = arith.constant 0 : i32
    %c0_i32_0 = arith.constant 0 : i32
    %c0_i32_1 = arith.constant 0 : i32
    return %c0_i32, %c0_i32_0 : i32, i32
  }
  func.func @transform_3(%arg0: i32, %arg1: i32) -> (i32, i32, i32, i32) {
    %c0_i32 = arith.constant 0 : i32
    %c0_i32_0 = arith.constant 0 : i32
    %c0_i32_1 = arith.constant 0 : i32
    return %arg0, %arg1, %c0_i32, %c0_i32_0 : i32, i32, i32, i32
  }
}

</mosaic_0001>

<llo_original>
// kernel: decoder1_forward.1
$region0: #{decoder1_forward.1}
  #allocation0 [shape = 'u32[]', space=smem, size = 0x4, offset = 0x4, fixed_abs, tag = 'smem constant byte address 0x4 - core index']
  #allocation1 [shape = 'u32[144,128]{1,0:T(1,128)}', space=vmem, size = 0x12000, scoped, tag = 'internal scratch']
  %s0 = inlined_call_operand.vmem [shape: f32[2,2,18,40,64], index: 0, kind: input, shape index: {}]
  %s1 = inlined_call_operand.vmem [shape: f32[3,64,9], index: 1, kind: input, shape index: {}]
  %s2 = inlined_call_operand.vmem [shape: f32[1,3], index: 2, kind: input, shape index: {}]
  %s3 = inlined_call_operand.vmem [shape: f32[2,32,32,3], index: 3, kind: output, shape index: {}]
  %s4 = sld [smem:[#allocation0]]
  $region45: #{decoder1_forward.1} parent=0
    _
  %s6 = ssub.s32 1, %s4
  %s7 = scalar_select 0, %s6, %s4
  loop: start=0, step=1, limit=6
  $region2: #{decoder1_forward.1} parent=0 // loop_pre_header
    _
  $region3: #{decoder1_forward.1} parent=0 // loop_header
    %s9 = sphi 0, %s13
    %p10 = scmp.ge.s32.totalorder %s9, 6
    %s16 = sphi 0, %s28
    %s17 = sphi 0, %s24
    %s18 = sphi 0, %s16
    %s19 = sphi 0, %s17
    %s20 = sphi 0, %s18
    %s21 = sphi 0, %s19
    %s33 = sphi 0, %s35
    %s36 = sphi 0, %s33
    %s37 = sphi 0, %s36
    %s53 = sphi 0, %s37
    %s57 = sphi 0, %s57
    %s59 = sphi 0, %s57
    %s60 = sphi 0, %s59
    %s74 = sphi 0, %s60
    %s78 = sphi 0, %s78
    %s80 = sphi 0, %s78
    %s81 = sphi 0, %s80
    %s95 = sphi 0, %s81
    %s103 = sphi 0, %s105
    %s106 = sphi 0, %s103
    %s107 = sphi 0, %s106
    %s123 = sphi 0, %s107
  $region4: #{decoder1_forward.1} parent=0 // loop_header_branch
    %12 = sbr.rel (%p10) target = $region8
  $region5: #{decoder1_forward.1} parent=0 // loop_body
    %s14 = ssub.s32 %s9, 1
    %s15 = ssub.s32 %s9, 2
    %s22 = sadd.s32 1, %s17
    %p23 = scmp.ge.s32.totalorder %s22, 2
    %s24 = scalar_select %p23, 0, %s22
    %s25 = sadd.s32 1, %s16
    %s26 = scalar_select %p23, %s25, %s16
    %p27 = scmp.ge.s32.totalorder %s26, 2
    %s28 = scalar_select %p27, 0, %s26
    %s29 = ssub.s32 %s16, %s28
    %s30 = ssub.s32 %s17, %s24
    %s31 = sor.u32 %s29, %s30
    %p32 = scmp.eq.s32.totalorder %s31, 0
    %s34 = sadd.s32 %s33, 1
    %s35 = scalar_select %p32, %s33, %s34
    %p38 = pneg %p32
    %p39 = scmp.eq.s32.totalorder %s9, 3
    %p40 = por %p38, %p39
    %p41 = scmp.ne.s32.totalorder %s33, %s36
    %p42 = scmp.eq.s32.totalorder %s9, 0
    %p43 = por %p41, %p42
    %p44 = scmp.ne.s32.totalorder %s33, %s36
    %p45 = scmp.eq.s32.totalorder %s14, 3
    %p46 = por %p44, %p45
    %p47 = scmp.ne.s32.totalorder %s36, %s37
    %p48 = scmp.eq.s32.totalorder %s14, 0
    %p49 = por %p47, %p48
    %p50 = scmp.ne.s32.totalorder %s36, %s37
    %p51 = scmp.eq.s32.totalorder %s15, 3
    %p52 = por %p50, %p51
    %p54 = scmp.ne.s32.totalorder %s37, %s53
    %p55 = scmp.eq.s32.totalorder %s15, 0
    %p56 = por %p54, %p55
    %s58 = sadd.s32 %s57, 1
    %p61 = scmp.eq.s32.totalorder %s9, 3
    %p62 = scmp.ne.s32.totalorder %s57, %s59
    %p63 = scmp.eq.s32.totalorder %s9, 0
    %p64 = por %p62, %p63
    %p65 = scmp.ne.s32.totalorder %s57, %s59
    %p66 = scmp.eq.s32.totalorder %s14, 3
    %p67 = por %p65, %p66
    %p68 = scmp.ne.s32.totalorder %s59, %s60
    %p69 = scmp.eq.s32.totalorder %s14, 0
    %p70 = por %p68, %p69
    %p71 = scmp.ne.s32.totalorder %s59, %s60
    %p72 = scmp.eq.s32.totalorder %s15, 3
    %p73 = por %p71, %p72
    %p75 = scmp.ne.s32.totalorder %s60, %s74
    %p76 = scmp.eq.s32.totalorder %s15, 0
    %p77 = por %p75, %p76
    %s79 = sadd.s32 %s78, 1
    %p82 = scmp.eq.s32.totalorder %s9, 3
    %p83 = scmp.ne.s32.totalorder %s78, %s80
    %p84 = scmp.eq.s32.totalorder %s9, 0
    %p85 = por %p83, %p84
    %p86 = scmp.ne.s32.totalorder %s78, %s80
    %p87 = scmp.eq.s32.totalorder %s14, 3
    %p88 = por %p86, %p87
    %p89 = scmp.ne.s32.totalorder %s80, %s81
    %p90 = scmp.eq.s32.totalorder %s14, 0
    %p91 = por %p89, %p90
    %p92 = scmp.ne.s32.totalorder %s80, %s81
    %p93 = scmp.eq.s32.totalorder %s15, 3
    %p94 = por %p92, %p93
    %p96 = scmp.ne.s32.totalorder %s81, %s95
    %p97 = scmp.eq.s32.totalorder %s15, 0
    %p98 = por %p96, %p97
    %s99 = ssub.s32 %s16, %s28
    %s100 = ssub.s32 %s17, %s24
    %s101 = sor.u32 %s99, %s100
    %p102 = scmp.eq.s32.totalorder %s101, 0
    %s104 = sadd.s32 %s103, 1
    %s105 = scalar_select %p102, %s103, %s104
    %p108 = pneg %p102
    %p109 = scmp.eq.s32.totalorder %s9, 3
    %p110 = por %p108, %p109
    %p111 = scmp.ne.s32.totalorder %s103, %s106
    %p112 = scmp.eq.s32.totalorder %s9, 0
    %p113 = por %p111, %p112
    %p114 = scmp.ne.s32.totalorder %s103, %s106
    %p115 = scmp.eq.s32.totalorder %s14, 3
    %p116 = por %p114, %p115
    %p117 = scmp.ne.s32.totalorder %s106, %s107
    %p118 = scmp.eq.s32.totalorder %s14, 0
    %p119 = por %p117, %p118
    %p120 = scmp.ne.s32.totalorder %s106, %s107
    %p121 = scmp.eq.s32.totalorder %s15, 3
    %p122 = por %p120, %p121
    %p124 = scmp.ne.s32.totalorder %s107, %s123
    %p125 = scmp.eq.s32.totalorder %s15, 0
    %p126 = por %p124, %p125
    %p127 = scmp.le.s32.totalorder 1, %s9
    %p128 = scmp.lt.s32.totalorder %s9, 5
    %p129 = pnand %p127, %p128
    %p130 = pneg %p129
    // Predicated region
    $region9: #{decoder1_forward.1} parent=5 // pred_check
      _
    $region10: #{decoder1_forward.1} parent=5 // pred_check_branch
      %132 = sbr.rel (%p129) target = $region12
    $region11: #{decoder1_forward.1} parent=5 // pred_region
      %s133 = ssub.s32 %s9, 1
      // Predicated region
      $region13: #{decoder1_forward.1} parent=11 // pred_check
        %p134 = pneg %p70
      $region14: #{decoder1_forward.1} parent=11 // pred_check_branch
        %136 = sbr.rel (%p134) target = $region16
      $region15: #{decoder1_forward.1} parent=11 // pred_region
        _
      $region16: #{decoder1_forward.1} parent=11 // pred_fallthru
        _
      // Predicated region
      $region17: #{decoder1_forward.1} parent=11 // pred_check
        %p137 = pneg %p91
      $region18: #{decoder1_forward.1} parent=11 // pred_check_branch
        %139 = sbr.rel (%p137) target = $region20
      $region19: #{decoder1_forward.1} parent=11 // pred_region
        _
      $region20: #{decoder1_forward.1} parent=11 // pred_fallthru
        _
    $region12: #{decoder1_forward.1} parent=5 // pred_fallthru
      _
    %p140 = scmp.lt.s32.totalorder %s9, 4
    // Predicated region
    $region21: #{decoder1_forward.1} parent=5 // pred_check
      %p141 = pneg %p140
    $region22: #{decoder1_forward.1} parent=5 // pred_check_branch
      %143 = sbr.rel (%p141) target = $region24
    $region23: #{decoder1_forward.1} parent=5 // pred_region
      // Predicated region
      $region25: #{decoder1_forward.1} parent=23 // pred_check
        %p144 = pneg %p43
      $region26: #{decoder1_forward.1} parent=23 // pred_check_branch
        %146 = sbr.rel (%p144) target = $region28
      $region27: #{decoder1_forward.1} parent=23 // pred_region
        %p147 = scmp.lt.s32.totalorder %s16, 1
        %s148 = scalar_select %p147, %s16, 1
        %p149 = scmp.lt.s32.totalorder %s17, 1
        %s150 = scalar_select %p149, %s17, 1
        %s151 = smul.addr %s150, 90
        %s152 = smul.addr %s148, 180
        %s153 = sadd.s32 %s151, %s152
        %s154 = smul.addr %s153, 8
        %s155 = scalar_lea.vmem %s0, %s154
      $region28: #{decoder1_forward.1} parent=23 // pred_fallthru
        _
    $region24: #{decoder1_forward.1} parent=5 // pred_fallthru
      _
    %p156 = scmp.le.s32.totalorder 1, %s9
    %p157 = scmp.lt.s32.totalorder %s9, 5
    %p158 = pnand %p156, %p157
    %p159 = pneg %p158
    // Predicated region
    $region29: #{decoder1_forward.1} parent=5 // pred_check
      _
    $region30: #{decoder1_forward.1} parent=5 // pred_check_branch
      %161 = sbr.rel (%p158) target = $region32
    $region31: #{decoder1_forward.1} parent=5 // pred_region
      %s162 = ssub.s32 %s9, 1
      %p163 = scmp.lt.s32.totalorder %s18, 1
      %s164 = scalar_select %p163, %s18, 1
      %p165 = scmp.lt.s32.totalorder %s19, 1
      %s166 = scalar_select %p165, %s19, 1
      %s167 = smul.addr %s166, 90
      %s168 = smul.addr %s164, 180
      %s169 = sadd.s32 %s167, %s168
      %s170 = smul.addr %s169, 8
      %s171 = scalar_lea.vmem %s0, %s170
      %p172 = pneg %p49
      %p173 = pneg %p46
      %p174 = pneg %p70
      %p175 = pneg %p67
      %p176 = pneg %p91
      %p177 = pneg %p88
      %p178 = pneg %p119
      %p179 = pneg %p116
      %s180 = smul.u32 16, %s19
      %p181 = scmp.lt.s32.totalorder %s18, 1
      %s182 = scalar_select %p181, %s18, 1
      %p183 = scmp.lt.s32.totalorder %s180, 31
      %s184 = scalar_select %p183, %s180, 31
      %s185 = smul.addr %s184, 4
      %s186 = smul.addr %s182, 128
      %s187 = sadd.s32 %s185, %s186
      %s188 = smul.addr %s187, 8
      %s189 = scalar_lea.vmem %s3, %s188
      %p190 = scmp.lt.s32.totalorder %s18, 1
      %s191 = scalar_select %p190, %s18, 1
      %p192 = scmp.lt.s32.totalorder %s19, 1
      %s193 = scalar_select %p192, %s19, 1
      %s194 = smul.addr %s193, 90
      %s195 = smul.addr %s191, 180
      %s196 = sadd.s32 %s194, %s195
      %s197 = smul.addr %s196, 8
      %s198 = scalar_lea.vmem %s0, %s197
      %s199 = smul.u32 16, %s19
      %p200 = scmp.lt.s32.totalorder %s18, 1
      %s201 = scalar_select %p200, %s18, 1
      %p202 = scmp.lt.s32.totalorder %s199, 31
      %s203 = scalar_select %p202, %s199, 31
      %s204 = smul.addr %s203, 4
      %s205 = smul.addr %s201, 128
      %s206 = sadd.s32 %s204, %s205
      %s207 = smul.addr %s206, 8
      %s208 = scalar_lea.vmem %s3, %s207
      %s209 = smul.u32 16, %s19
      %v210 = vld [vmem:[%s198] sm:$0xff]
      %v211 = vld [vmem:[%s198 + $0x8] sm:$0xff]
      %v212 = vld [vmem:[%s198 + $0x10] sm:$0xff]
      %v213 = vld [vmem:[%s198 + $0x18] sm:$0xff]
      %v214 = vld [vmem:[%s198 + $0x20] sm:$0xff]
      %v215 = vld [vmem:[%s198 + $0x28] sm:$0xff]
      %v216 = vld [vmem:[%s198 + $0x30] sm:$0xff]
      %v217 = vld [vmem:[%s198 + $0x38] sm:$0xff]
      %v218 = vld [vmem:[%s198 + $0x40] sm:$0xff]
      %v219 = vld [vmem:[%s198 + $0x48] sm:$0xff]
      %v220 = vld [vmem:[%s198 + $0x50] sm:$0xff]
      %v221 = vld [vmem:[%s198 + $0x58] sm:$0xff]
      %v222 = vld [vmem:[%s198 + $0x60] sm:$0xff]
      %v223 = vld [vmem:[%s198 + $0x68] sm:$0xff]
      %v224 = vld [vmem:[%s198 + $0x70] sm:$0xff]
      %v225 = vld [vmem:[%s198 + $0x78] sm:$0xff]
      %v226 = vld [vmem:[%s198 + $0x80] sm:$0xff]
      %v227 = vld [vmem:[%s198 + $0x88] sm:$0xff]
      %v228 = vld [vmem:[%s198 + $0x90] sm:$0xff]
      %v229 = vld [vmem:[%s198 + $0x98] sm:$0xff]
      %v230 = vld [vmem:[%s198 + $0xa0] sm:$0xff]
      %v231 = vld [vmem:[%s198 + $0xa8] sm:$0xff]
      %v232 = vld [vmem:[%s198 + $0xb0] sm:$0xff]
      %v233 = vld [vmem:[%s198 + $0xb8] sm:$0xff]
      %v234 = vld [vmem:[%s198 + $0xc0] sm:$0xff]
      %v235 = vld [vmem:[%s198 + $0xc8] sm:$0xff]
      %v236 = vld [vmem:[%s198 + $0xd0] sm:$0xff]
      %v237 = vld [vmem:[%s198 + $0xd8] sm:$0xff]
      %v238 = vld [vmem:[%s198 + $0xe0] sm:$0xff]
      %v239 = vld [vmem:[%s198 + $0xe8] sm:$0xff]
      %v240 = vld [vmem:[%s198 + $0xf0] sm:$0xff]
      %v241 = vld [vmem:[%s198 + $0xf8] sm:$0xff]
      %v242 = vld [vmem:[%s198 + $0x100] sm:$0xff]
      %v243 = vld [vmem:[%s198 + $0x108] sm:$0xff]
      %v244 = vld [vmem:[%s198 + $0x110] sm:$0xff]
      %v245 = vld [vmem:[%s198 + $0x118] sm:$0xff]
      %v246 = vld [vmem:[%s198 + $0x120] sm:$0xff]
      %v247 = vld [vmem:[%s198 + $0x128] sm:$0xff]
      %v248 = vld [vmem:[%s198 + $0x130] sm:$0xff]
      %v249 = vld [vmem:[%s198 + $0x138] sm:$0xff]
      %v250 = vld [vmem:[%s198 + $0x140] sm:$0xff]
      %v251 = vld [vmem:[%s198 + $0x148] sm:$0xff]
      %v252 = vld [vmem:[%s198 + $0x150] sm:$0xff]
      %v253 = vld [vmem:[%s198 + $0x158] sm:$0xff]
      %v254 = vld [vmem:[%s198 + $0x160] sm:$0xff]
      %v255 = vld [vmem:[%s198 + $0x168] sm:$0xff]
      %v256 = vld [vmem:[%s198 + $0x170] sm:$0xff]
      %v257 = vld [vmem:[%s198 + $0x178] sm:$0xff]
      %v258 = vld [vmem:[%s198 + $0x180] sm:$0xff]
      %v259 = vld [vmem:[%s198 + $0x188] sm:$0xff]
      %v260 = vld [vmem:[%s198 + $0x190] sm:$0xff]
      %v261 = vld [vmem:[%s198 + $0x198] sm:$0xff]
      %v262 = vld [vmem:[%s198 + $0x1a0] sm:$0xff]
      %v263 = vld [vmem:[%s198 + $0x1a8] sm:$0xff]
      %v264 = vld [vmem:[%s198 + $0x1b0] sm:$0xff]
      %v265 = vld [vmem:[%s198 + $0x1b8] sm:$0xff]
      %v266 = vld [vmem:[%s198 + $0x1c0] sm:$0xff]
      %v267 = vld [vmem:[%s198 + $0x1c8] sm:$0xff]
      %v268 = vld [vmem:[%s198 + $0x1d0] sm:$0xff]
      %v269 = vld [vmem:[%s198 + $0x1d8] sm:$0xff]
      %v270 = vld [vmem:[%s198 + $0x1e0] sm:$0xff]
      %v271 = vld [vmem:[%s198 + $0x1e8] sm:$0xff]
      %v272 = vld [vmem:[%s198 + $0x1f0] sm:$0xff]
      %v273 = vld [vmem:[%s198 + $0x1f8] sm:$0xff]
      %v274 = vld [vmem:[%s198 + $0x200] sm:$0xff]
      %v275 = vld [vmem:[%s198 + $0x208] sm:$0xff]
      %v276 = vld [vmem:[%s198 + $0x210] sm:$0xff]
      %v277 = vld [vmem:[%s198 + $0x218] sm:$0xff]
      %v278 = vld [vmem:[%s198 + $0x220] sm:$0xff]
      %v279 = vld [vmem:[%s198 + $0x228] sm:$0xff]
      %v280 = vld [vmem:[%s198 + $0x230] sm:$0xff]
      %v281 = vld [vmem:[%s198 + $0x238] sm:$0xff]
      %v282 = vld [vmem:[%s198 + $0x240] sm:$0xff]
      %v283 = vld [vmem:[%s198 + $0x248] sm:$0xff]
      %v284 = vld [vmem:[%s198 + $0x250] sm:$0xff]
      %v285 = vld [vmem:[%s198 + $0x258] sm:$0xff]
      %v286 = vld [vmem:[%s198 + $0x260] sm:$0xff]
      %v287 = vld [vmem:[%s198 + $0x268] sm:$0xff]
      %v288 = vld [vmem:[%s198 + $0x270] sm:$0xff]
      %v289 = vld [vmem:[%s198 + $0x278] sm:$0xff]
      %v290 = vld [vmem:[%s1] sm:$0xff]
      %v291 = vld [vmem:[%s1 + $0x8] sm:$0xff]
      %v292 = vld [vmem:[%s1 + $0x10] sm:$0xff]
      %v293 = vld [vmem:[%s1 + $0x18] sm:$0xff]
      %v294 = vld [vmem:[%s1 + $0x20] sm:$0xff]
      %v295 = vld [vmem:[%s1 + $0x28] sm:$0xff]
      %v296 = vld [vmem:[%s1 + $0x30] sm:$0xff]
      %v297 = vld [vmem:[%s1 + $0x38] sm:$0xff]
      %vm298 = vcmask 523264
      %v300 = vsel %vm298, %v210, 0
      %v303 = vsel %vm298, %v211, 0
      %v306 = vsel %vm298, %v212, 0
      %v309 = vsel %vm298, %v213, 0
      %v312 = vsel %vm298, %v214, 0
      %v315 = vsel %vm298, %v215, 0
      %v318 = vsel %vm298, %v216, 0
      %v321 = vsel %vm298, %v217, 0
      %v324 = vsel %vm298, %v218, 0
      %v327 = vsel %vm298, %v219, 0
      %v330 = vsel %vm298, %v220, 0
      %v333 = vsel %vm298, %v221, 0
      %v336 = vsel %vm298, %v222, 0
      %v339 = vsel %vm298, %v223, 0
      %v342 = vsel %vm298, %v224, 0
      %v345 = vsel %vm298, %v225, 0
      %v348 = vsel %vm298, %v226, 0
      %v351 = vsel %vm298, %v227, 0
      %v354 = vsel %vm298, %v228, 0
      %v357 = vsel %vm298, %v229, 0
      %v360 = vsel %vm298, %v230, 0
      %v363 = vsel %vm298, %v231, 0
      %v366 = vsel %vm298, %v232, 0
      %v369 = vsel %vm298, %v233, 0
      %v372 = vsel %vm298, %v234, 0
      %v375 = vsel %vm298, %v235, 0
      %v378 = vsel %vm298, %v236, 0
      %v381 = vsel %vm298, %v237, 0
      %v384 = vsel %vm298, %v238, 0
      %v387 = vsel %vm298, %v239, 0
      %v390 = vsel %vm298, %v240, 0
      %v393 = vsel %vm298, %v241, 0
      %v396 = vsel %vm298, %v242, 0
      %v399 = vsel %vm298, %v243, 0
      %v402 = vsel %vm298, %v244, 0
      %v405 = vsel %vm298, %v245, 0
      %v408 = vsel %vm298, %v246, 0
      %v411 = vsel %vm298, %v247, 0
      %v414 = vsel %vm298, %v248, 0
      %v417 = vsel %vm298, %v249, 0
      %v420 = vsel %vm298, %v250, 0
      %v423 = vsel %vm298, %v251, 0
      %v426 = vsel %vm298, %v252, 0
      %v429 = vsel %vm298, %v253, 0
      %v432 = vsel %vm298, %v254, 0
      %v435 = vsel %vm298, %v255, 0
      %v438 = vsel %vm298, %v256, 0
      %v441 = vsel %vm298, %v257, 0
      %v444 = vsel %vm298, %v258, 0
      %v447 = vsel %vm298, %v259, 0
      %v450 = vsel %vm298, %v260, 0
      %v453 = vsel %vm298, %v261, 0
      %v456 = vsel %vm298, %v262, 0
      %v459 = vsel %vm298, %v263, 0
      %v462 = vsel %vm298, %v264, 0
      %v465 = vsel %vm298, %v265, 0
      %v468 = vsel %vm298, %v266, 0
      %v471 = vsel %vm298, %v267, 0
      %v474 = vsel %vm298, %v268, 0
      %v477 = vsel %vm298, %v269, 0
      %v480 = vsel %vm298, %v270, 0
      %v483 = vsel %vm298, %v271, 0
      %v486 = vsel %vm298, %v272, 0
      %v489 = vsel %vm298, %v273, 0
      %v492 = vsel %vm298, %v274, 0
      %v495 = vsel %vm298, %v275, 0
      %v498 = vsel %vm298, %v276, 0
      %v501 = vsel %vm298, %v277, 0
      %v504 = vsel %vm298, %v278, 0
      %v507 = vsel %vm298, %v279, 0
      %v510 = vsel %vm298, %v280, 0
      %v513 = vsel %vm298, %v281, 0
      %v516 = vsel %vm298, %v282, 0
      %v519 = vsel %vm298, %v283, 0
      %v522 = vsel %vm298, %v284, 0
      %v525 = vsel %vm298, %v285, 0
      %v528 = vsel %vm298, %v286, 0
      %v531 = vsel %vm298, %v287, 0
      %v534 = vsel %vm298, %v288, 0
      %v537 = vsel %vm298, %v289, 0
      %539 = vmatprep.subr.mxu0 0.0
      %540 = vmatpush1.msra.mxu0 0.0
      %541 = vmatprep.subr.mxu0 0.0
      %542 = vmatpush1.msra.mxu0 0.0
      %543 = vmatprep.subr.mxu0 0.0
      %544 = vmatpush1.msra.mxu0 0.0
      %545 = vmatprep.subr.mxu0 0.0
      %546 = vmatpush1.msra.mxu0 0.0
      %547 = vmatprep.subr.mxu0 0.0
      %548 = vmatpush1.msra.mxu0 0.0
      %549 = vmatprep.subr.mxu0 0.0
      %550 = vmatpush1.msra.mxu0 0.0
      %551 = vmatprep.subr.mxu0 0.0
      %552 = vmatpush1.msra.mxu0 0.0
      %553 = vmatprep.subr.mxu0 0.0
      %554 = vmatpush1.msra.mxu0 0.0
      %555 = vmatprep.subr.mxu0 0.0
      %556 = vmatpush1.msra.mxu0 %v297
      %557 = vmatprep.subr.mxu0 0.0
      %558 = vmatpush1.msra.mxu0 %v296
      %559 = vmatprep.subr.mxu0 0.0
      %560 = vmatpush1.msra.mxu0 %v295
      %561 = vmatprep.subr.mxu0 0.0
      %562 = vmatpush1.msra.mxu0 %v294
      %563 = vmatprep.subr.mxu0 0.0
      %564 = vmatpush1.msra.mxu0 %v293
      %565 = vmatprep.subr.mxu0 0.0
      %566 = vmatpush1.msra.mxu0 %v292
      %567 = vmatprep.subr.mxu0 0.0
      %568 = vmatpush1.msra.mxu0 %v291
      %569 = vmatprep.subr.mxu0 0.0
      %570 = vmatpush1.msra.mxu0 %v290
      %571 = vmatprep.subr.mxu0 0.0
      %572 = vmatpush2.msra.mxu0 0.0
      %573 = vmatprep.subr.mxu0 0.0
      %574 = vmatpush2.msra.mxu0 0.0
      %575 = vmatprep.subr.mxu0 0.0
      %576 = vmatpush2.msra.mxu0 0.0
      %577 = vmatprep.subr.mxu0 0.0
      %578 = vmatpush2.msra.mxu0 0.0
      %579 = vmatprep.subr.mxu0 0.0
      %580 = vmatpush2.msra.mxu0 0.0
      %581 = vmatprep.subr.mxu0 0.0
      %582 = vmatpush2.msra.mxu0 0.0
      %583 = vmatprep.subr.mxu0 0.0
      %584 = vmatpush2.msra.mxu0 0.0
      %585 = vmatprep.subr.mxu0 0.0
      %586 = vmatpush2.msra.mxu0 0.0
      %587 = vmatprep.subr.mxu0 0.0
      %588 = vmatpush2.msra.mxu0 0.0
      %589 = vmatprep.subr.mxu0 0.0
      %590 = vmatpush2.msra.mxu0 0.0
      %591 = vmatprep.subr.mxu0 0.0
      %592 = vmatpush2.msra.mxu0 0.0
      %593 = vmatprep.subr.mxu0 0.0
      %594 = vmatpush2.msra.mxu0 0.0
      %595 = vmatprep.subr.mxu0 0.0
      %596 = vmatpush2.msra.mxu0 0.0
      %597 = vmatprep.subr.mxu0 0.0
      %598 = vmatpush2.msra.mxu0 0.0
      %599 = vmatprep.subr.mxu0 0.0
      %600 = vmatpush2.msra.mxu0 0.0
      %601 = vmatprep.subr.mxu0 0.0
      %602 = vmatpush2.msra.mxu0 0.0
      %603 = vmatprep.mubr.f32.mxu0 0.0
      %604 = vmatmul.mubr.f32.gmra.mxu0 %v300
      %v605 = vpop.f32.mrf.mxu0
      %v606 = vadd.f32 0.0, %v605
      %v607 = vpop.f32.mrf.mxu0
      %608 = vmatprep.mubr.f32.mxu0 0.0
      %609 = vmatmul.mubr.f32.gmra.mxu0 %v303
      %v610 = vpop.f32.mrf.mxu0
      %v611 = vadd.f32 0.0, %v610
      %v612 = vpop.f32.mrf.mxu0
      %613 = vmatprep.mubr.f32.mxu0 0.0
      %614 = vmatmul.mubr.f32.gmra.mxu0 %v306
      %v615 = vpop.f32.mrf.mxu0
      %v616 = vadd.f32 0.0, %v615
      %v617 = vpop.f32.mrf.mxu0
      %618 = vmatprep.mubr.f32.mxu0 0.0
      %619 = vmatmul.mubr.f32.gmra.mxu0 %v309
      %v620 = vpop.f32.mrf.mxu0
      %v621 = vadd.f32 0.0, %v620
      %v622 = vpop.f32.mrf.mxu0
      %623 = vmatprep.mubr.f32.mxu0 0.0
      %624 = vmatmul.mubr.f32.gmra.mxu0 %v312
      %v625 = vpop.f32.mrf.mxu0
      %v626 = vadd.f32 0.0, %v625
      %v627 = vpop.f32.mrf.mxu0
      %628 = vmatprep.mubr.f32.mxu0 0.0
      %629 = vmatmul.mubr.f32.gmra.mxu0 %v315
      %v630 = vpop.f32.mrf.mxu0
      %v631 = vadd.f32 0.0, %v630
      %v632 = vpop.f32.mrf.mxu0
      %633 = vmatprep.mubr.f32.mxu0 0.0
      %634 = vmatmul.mubr.f32.gmra.mxu0 %v318
      %v635 = vpop.f32.mrf.mxu0
      %v636 = vadd.f32 0.0, %v635
      %v637 = vpop.f32.mrf.mxu0
      %638 = vmatprep.mubr.f32.mxu0 0.0
      %639 = vmatmul.mubr.f32.gmra.mxu0 %v321
      %v640 = vpop.f32.mrf.mxu0
      %v641 = vadd.f32 0.0, %v640
      %v642 = vpop.f32.mrf.mxu0
      %643 = vmatprep.mubr.f32.mxu0 0.0
      %644 = vmatmul.mubr.f32.gmra.mxu0 %v324
      %v645 = vpop.f32.mrf.mxu0
      %v646 = vadd.f32 0.0, %v645
      %v647 = vpop.f32.mrf.mxu0
      %648 = vmatprep.mubr.f32.mxu0 0.0
      %649 = vmatmul.mubr.f32.gmra.mxu0 %v327
      %v650 = vpop.f32.mrf.mxu0
      %v651 = vadd.f32 0.0, %v650
      %v652 = vpop.f32.mrf.mxu0
      %653 = vmatprep.mubr.f32.mxu0 0.0
      %654 = vmatmul.mubr.f32.gmra.mxu0 %v330
      %v655 = vpop.f32.mrf.mxu0
      %v656 = vadd.f32 0.0, %v655
      %v657 = vpop.f32.mrf.mxu0
      %658 = vmatprep.mubr.f32.mxu0 0.0
      %659 = vmatmul.mubr.f32.gmra.mxu0 %v333
      %v660 = vpop.f32.mrf.mxu0
      %v661 = vadd.f32 0.0, %v660
      %v662 = vpop.f32.mrf.mxu0
      %663 = vmatprep.mubr.f32.mxu0 0.0
      %664 = vmatmul.mubr.f32.gmra.mxu0 %v336
      %v665 = vpop.f32.mrf.mxu0
      %v666 = vadd.f32 0.0, %v665
      %v667 = vpop.f32.mrf.mxu0
      %668 = vmatprep.mubr.f32.mxu0 0.0
      %669 = vmatmul.mubr.f32.gmra.mxu0 %v339
      %v670 = vpop.f32.mrf.mxu0
      %v671 = vadd.f32 0.0, %v670
      %v672 = vpop.f32.mrf.mxu0
      %673 = vmatprep.mubr.f32.mxu0 0.0
      %674 = vmatmul.mubr.f32.gmra.mxu0 %v342
      %v675 = vpop.f32.mrf.mxu0
      %v676 = vadd.f32 0.0, %v675
      %v677 = vpop.f32.mrf.mxu0
      %678 = vmatprep.mubr.f32.mxu0 0.0
      %679 = vmatmul.mubr.f32.gmra.mxu0 %v345
      %v680 = vpop.f32.mrf.mxu0
      %v681 = vadd.f32 0.0, %v680
      %v682 = vpop.f32.mrf.mxu0
      %683 = vmatprep.mubr.f32.mxu0 0.0
      %684 = vmatmul.mubr.f32.gmra.mxu0 %v348
      %v685 = vpop.f32.mrf.mxu0
      %v686 = vadd.f32 0.0, %v685
      %v687 = vpop.f32.mrf.mxu0
      %688 = vmatprep.mubr.f32.mxu0 0.0
      %689 = vmatmul.mubr.f32.gmra.mxu0 %v351
      %v690 = vpop.f32.mrf.mxu0
      %v691 = vadd.f32 0.0, %v690
      %v692 = vpop.f32.mrf.mxu0
      %693 = vmatprep.mubr.f32.mxu0 0.0
      %694 = vmatmul.mubr.f32.gmra.mxu0 %v354
      %v695 = vpop.f32.mrf.mxu0
      %v696 = vadd.f32 0.0, %v695
      %v697 = vpop.f32.mrf.mxu0
      %698 = vmatprep.mubr.f32.mxu0 0.0
      %699 = vmatmul.mubr.f32.gmra.mxu0 %v357
      %v700 = vpop.f32.mrf.mxu0
      %v701 = vadd.f32 0.0, %v700
      %v702 = vpop.f32.mrf.mxu0
      %703 = vmatprep.mubr.f32.mxu0 0.0
      %704 = vmatmul.mubr.f32.gmra.mxu0 %v360
      %v705 = vpop.f32.mrf.mxu0
      %v706 = vadd.f32 0.0, %v705
      %v707 = vpop.f32.mrf.mxu0
      %708 = vmatprep.mubr.f32.mxu0 0.0
      %709 = vmatmul.mubr.f32.gmra.mxu0 %v363
      %v710 = vpop.f32.mrf.mxu0
      %v711 = vadd.f32 0.0, %v710
      %v712 = vpop.f32.mrf.mxu0
      %713 = vmatprep.mubr.f32.mxu0 0.0
      %714 = vmatmul.mubr.f32.gmra.mxu0 %v366
      %v715 = vpop.f32.mrf.mxu0
      %v716 = vadd.f32 0.0, %v715
      %v717 = vpop.f32.mrf.mxu0
      %718 = vmatprep.mubr.f32.mxu0 0.0
      %719 = vmatmul.mubr.f32.gmra.mxu0 %v369
      %v720 = vpop.f32.mrf.mxu0
      %v721 = vadd.f32 0.0, %v720
      %v722 = vpop.f32.mrf.mxu0
      %723 = vmatprep.mubr.f32.mxu0 0.0
      %724 = vmatmul.mubr.f32.gmra.mxu0 %v372
      %v725 = vpop.f32.mrf.mxu0
      %v726 = vadd.f32 0.0, %v725
      %v727 = vpop.f32.mrf.mxu0
      %728 = vmatprep.mubr.f32.mxu0 0.0
      %729 = vmatmul.mubr.f32.gmra.mxu0 %v375
      %v730 = vpop.f32.mrf.mxu0
      %v731 = vadd.f32 0.0, %v730
      %v732 = vpop.f32.mrf.mxu0
      %733 = vmatprep.mubr.f32.mxu0 0.0
      %734 = vmatmul.mubr.f32.gmra.mxu0 %v378
      %v735 = vpop.f32.mrf.mxu0
      %v736 = vadd.f32 0.0, %v735
      %v737 = vpop.f32.mrf.mxu0
      %738 = vmatprep.mubr.f32.mxu0 0.0
      %739 = vmatmul.mubr.f32.gmra.mxu0 %v381
      %v740 = vpop.f32.mrf.mxu0
      %v741 = vadd.f32 0.0, %v740
      %v742 = vpop.f32.mrf.mxu0
      %743 = vmatprep.mubr.f32.mxu0 0.0
      %744 = vmatmul.mubr.f32.gmra.mxu0 %v384
      %v745 = vpop.f32.mrf.mxu0
      %v746 = vadd.f32 0.0, %v745
      %v747 = vpop.f32.mrf.mxu0
      %748 = vmatprep.mubr.f32.mxu0 0.0
      %749 = vmatmul.mubr.f32.gmra.mxu0 %v387
      %v750 = vpop.f32.mrf.mxu0
      %v751 = vadd.f32 0.0, %v750
      %v752 = vpop.f32.mrf.mxu0
      %753 = vmatprep.mubr.f32.mxu0 0.0
      %754 = vmatmul.mubr.f32.gmra.mxu0 %v390
      %v755 = vpop.f32.mrf.mxu0
      %v756 = vadd.f32 0.0, %v755
      %v757 = vpop.f32.mrf.mxu0
      %758 = vmatprep.mubr.f32.mxu0 0.0
      %759 = vmatmul.mubr.f32.gmra.mxu0 %v393
      %v760 = vpop.f32.mrf.mxu0
      %v761 = vadd.f32 0.0, %v760
      %v762 = vpop.f32.mrf.mxu0
      %763 = vmatprep.mubr.f32.mxu0 0.0
      %764 = vmatmul.mubr.f32.gmra.mxu0 %v396
      %v765 = vpop.f32.mrf.mxu0
      %v766 = vadd.f32 0.0, %v765
      %v767 = vpop.f32.mrf.mxu0
      %768 = vmatprep.mubr.f32.mxu0 0.0
      %769 = vmatmul.mubr.f32.gmra.mxu0 %v399
      %v770 = vpop.f32.mrf.mxu0
      %v771 = vadd.f32 0.0, %v770
      %v772 = vpop.f32.mrf.mxu0
      %773 = vmatprep.mubr.f32.mxu0 0.0
      %774 = vmatmul.mubr.f32.gmra.mxu0 %v402
      %v775 = vpop.f32.mrf.mxu0
      %v776 = vadd.f32 0.0, %v775
      %v777 = vpop.f32.mrf.mxu0
      %778 = vmatprep.mubr.f32.mxu0 0.0
      %779 = vmatmul.mubr.f32.gmra.mxu0 %v405
      %v780 = vpop.f32.mrf.mxu0
      %v781 = vadd.f32 0.0, %v780
      %v782 = vpop.f32.mrf.mxu0
      %783 = vmatprep.mubr.f32.mxu0 0.0
      %784 = vmatmul.mubr.f32.gmra.mxu0 %v408
      %v785 = vpop.f32.mrf.mxu0
      %v786 = vadd.f32 0.0, %v785
      %v787 = vpop.f32.mrf.mxu0
      %788 = vmatprep.mubr.f32.mxu0 0.0
      %789 = vmatmul.mubr.f32.gmra.mxu0 %v411
      %v790 = vpop.f32.mrf.mxu0
      %v791 = vadd.f32 0.0, %v790
      %v792 = vpop.f32.mrf.mxu0
      %793 = vmatprep.mubr.f32.mxu0 0.0
      %794 = vmatmul.mubr.f32.gmra.mxu0 %v414
      %v795 = vpop.f32.mrf.mxu0
      %v796 = vadd.f32 0.0, %v795
      %v797 = vpop.f32.mrf.mxu0
      %798 = vmatprep.mubr.f32.mxu0 0.0
      %799 = vmatmul.mubr.f32.gmra.mxu0 %v417
      %v800 = vpop.f32.mrf.mxu0
      %v801 = vadd.f32 0.0, %v800
      %v802 = vpop.f32.mrf.mxu0
      %803 = vmatprep.mubr.f32.mxu0 0.0
      %804 = vmatmul.mubr.f32.gmra.mxu0 %v420
      %v805 = vpop.f32.mrf.mxu0
      %v806 = vadd.f32 0.0, %v805
      %v807 = vpop.f32.mrf.mxu0
      %808 = vmatprep.mubr.f32.mxu0 0.0
      %809 = vmatmul.mubr.f32.gmra.mxu0 %v423
      %v810 = vpop.f32.mrf.mxu0
      %v811 = vadd.f32 0.0, %v810
      %v812 = vpop.f32.mrf.mxu0
      %813 = vmatprep.mubr.f32.mxu0 0.0
      %814 = vmatmul.mubr.f32.gmra.mxu0 %v426
      %v815 = vpop.f32.mrf.mxu0
      %v816 = vadd.f32 0.0, %v815
      %v817 = vpop.f32.mrf.mxu0
      %818 = vmatprep.mubr.f32.mxu0 0.0
      %819 = vmatmul.mubr.f32.gmra.mxu0 %v429
      %v820 = vpop.f32.mrf.mxu0
      %v821 = vadd.f32 0.0, %v820
      %v822 = vpop.f32.mrf.mxu0
      %823 = vmatprep.mubr.f32.mxu0 0.0
      %824 = vmatmul.mubr.f32.gmra.mxu0 %v432
      %v825 = vpop.f32.mrf.mxu0
      %v826 = vadd.f32 0.0, %v825
      %v827 = vpop.f32.mrf.mxu0
      %828 = vmatprep.mubr.f32.mxu0 0.0
      %829 = vmatmul.mubr.f32.gmra.mxu0 %v435
      %v830 = vpop.f32.mrf.mxu0
      %v831 = vadd.f32 0.0, %v830
      %v832 = vpop.f32.mrf.mxu0
      %833 = vmatprep.mubr.f32.mxu0 0.0
      %834 = vmatmul.mubr.f32.gmra.mxu0 %v438
      %v835 = vpop.f32.mrf.mxu0
      %v836 = vadd.f32 0.0, %v835
      %v837 = vpop.f32.mrf.mxu0
      %838 = vmatprep.mubr.f32.mxu0 0.0
      %839 = vmatmul.mubr.f32.gmra.mxu0 %v441
      %v840 = vpop.f32.mrf.mxu0
      %v841 = vadd.f32 0.0, %v840
      %v842 = vpop.f32.mrf.mxu0
      %843 = vmatprep.mubr.f32.mxu0 0.0
      %844 = vmatmul.mubr.f32.gmra.mxu0 %v444
      %v845 = vpop.f32.mrf.mxu0
      %v846 = vadd.f32 0.0, %v845
      %v847 = vpop.f32.mrf.mxu0
      %848 = vmatprep.mubr.f32.mxu0 0.0
      %849 = vmatmul.mubr.f32.gmra.mxu0 %v447
      %v850 = vpop.f32.mrf.mxu0
      %v851 = vadd.f32 0.0, %v850
      %v852 = vpop.f32.mrf.mxu0
      %853 = vmatprep.mubr.f32.mxu0 0.0
      %854 = vmatmul.mubr.f32.gmra.mxu0 %v450
      %v855 = vpop.f32.mrf.mxu0
      %v856 = vadd.f32 0.0, %v855
      %v857 = vpop.f32.mrf.mxu0
      %858 = vmatprep.mubr.f32.mxu0 0.0
      %859 = vmatmul.mubr.f32.gmra.mxu0 %v453
      %v860 = vpop.f32.mrf.mxu0
      %v861 = vadd.f32 0.0, %v860
      %v862 = vpop.f32.mrf.mxu0
      %863 = vmatprep.mubr.f32.mxu0 0.0
      %864 = vmatmul.mubr.f32.gmra.mxu0 %v456
      %v865 = vpop.f32.mrf.mxu0
      %v866 = vadd.f32 0.0, %v865
      %v867 = vpop.f32.mrf.mxu0
      %868 = vmatprep.mubr.f32.mxu0 0.0
      %869 = vmatmul.mubr.f32.gmra.mxu0 %v459
      %v870 = vpop.f32.mrf.mxu0
      %v871 = vadd.f32 0.0, %v870
      %v872 = vpop.f32.mrf.mxu0
      %873 = vmatprep.mubr.f32.mxu0 0.0
      %874 = vmatmul.mubr.f32.gmra.mxu0 %v462
      %v875 = vpop.f32.mrf.mxu0
      %v876 = vadd.f32 0.0, %v875
      %v877 = vpop.f32.mrf.mxu0
      %878 = vmatprep.mubr.f32.mxu0 0.0
      %879 = vmatmul.mubr.f32.gmra.mxu0 %v465
      %v880 = vpop.f32.mrf.mxu0
      %v881 = vadd.f32 0.0, %v880
      %v882 = vpop.f32.mrf.mxu0
      %883 = vmatprep.mubr.f32.mxu0 0.0
      %884 = vmatmul.mubr.f32.gmra.mxu0 %v468
      %v885 = vpop.f32.mrf.mxu0
      %v886 = vadd.f32 0.0, %v885
      %v887 = vpop.f32.mrf.mxu0
      %888 = vmatprep.mubr.f32.mxu0 0.0
      %889 = vmatmul.mubr.f32.gmra.mxu0 %v471
      %v890 = vpop.f32.mrf.mxu0
      %v891 = vadd.f32 0.0, %v890
      %v892 = vpop.f32.mrf.mxu0
      %893 = vmatprep.mubr.f32.mxu0 0.0
      %894 = vmatmul.mubr.f32.gmra.mxu0 %v474
      %v895 = vpop.f32.mrf.mxu0
      %v896 = vadd.f32 0.0, %v895
      %v897 = vpop.f32.mrf.mxu0
      %898 = vmatprep.mubr.f32.mxu0 0.0
      %899 = vmatmul.mubr.f32.gmra.mxu0 %v477
      %v900 = vpop.f32.mrf.mxu0
      %v901 = vadd.f32 0.0, %v900
      %v902 = vpop.f32.mrf.mxu0
      %903 = vmatprep.mubr.f32.mxu0 0.0
      %904 = vmatmul.mubr.f32.gmra.mxu0 %v480
      %v905 = vpop.f32.mrf.mxu0
      %v906 = vadd.f32 0.0, %v905
      %v907 = vpop.f32.mrf.mxu0
      %908 = vmatprep.mubr.f32.mxu0 0.0
      %909 = vmatmul.mubr.f32.gmra.mxu0 %v483
      %v910 = vpop.f32.mrf.mxu0
      %v911 = vadd.f32 0.0, %v910
      %v912 = vpop.f32.mrf.mxu0
      %913 = vmatprep.mubr.f32.mxu0 0.0
      %914 = vmatmul.mubr.f32.gmra.mxu0 %v486
      %v915 = vpop.f32.mrf.mxu0
      %v916 = vadd.f32 0.0, %v915
      %v917 = vpop.f32.mrf.mxu0
      %918 = vmatprep.mubr.f32.mxu0 0.0
      %919 = vmatmul.mubr.f32.gmra.mxu0 %v489
      %v920 = vpop.f32.mrf.mxu0
      %v921 = vadd.f32 0.0, %v920
      %v922 = vpop.f32.mrf.mxu0
      %923 = vmatprep.mubr.f32.mxu0 0.0
      %924 = vmatmul.mubr.f32.gmra.mxu0 %v492
      %v925 = vpop.f32.mrf.mxu0
      %v926 = vadd.f32 0.0, %v925
      %v927 = vpop.f32.mrf.mxu0
      %928 = vmatprep.mubr.f32.mxu0 0.0
      %929 = vmatmul.mubr.f32.gmra.mxu0 %v495
      %v930 = vpop.f32.mrf.mxu0
      %v931 = vadd.f32 0.0, %v930
      %v932 = vpop.f32.mrf.mxu0
      %933 = vmatprep.mubr.f32.mxu0 0.0
      %934 = vmatmul.mubr.f32.gmra.mxu0 %v498
      %v935 = vpop.f32.mrf.mxu0
      %v936 = vadd.f32 0.0, %v935
      %v937 = vpop.f32.mrf.mxu0
      %938 = vmatprep.mubr.f32.mxu0 0.0
      %939 = vmatmul.mubr.f32.gmra.mxu0 %v501
      %v940 = vpop.f32.mrf.mxu0
      %v941 = vadd.f32 0.0, %v940
      %v942 = vpop.f32.mrf.mxu0
      %943 = vmatprep.mubr.f32.mxu0 0.0
      %944 = vmatmul.mubr.f32.gmra.mxu0 %v504
      %v945 = vpop.f32.mrf.mxu0
      %v946 = vadd.f32 0.0, %v945
      %v947 = vpop.f32.mrf.mxu0
      %948 = vmatprep.mubr.f32.mxu0 0.0
      %949 = vmatmul.mubr.f32.gmra.mxu0 %v507
      %v950 = vpop.f32.mrf.mxu0
      %v951 = vadd.f32 0.0, %v950
      %v952 = vpop.f32.mrf.mxu0
      %953 = vmatprep.mubr.f32.mxu0 0.0
      %954 = vmatmul.mubr.f32.gmra.mxu0 %v510
      %v955 = vpop.f32.mrf.mxu0
      %v956 = vadd.f32 0.0, %v955
      %v957 = vpop.f32.mrf.mxu0
      %958 = vmatprep.mubr.f32.mxu0 0.0
      %959 = vmatmul.mubr.f32.gmra.mxu0 %v513
      %v960 = vpop.f32.mrf.mxu0
      %v961 = vadd.f32 0.0, %v960
      %v962 = vpop.f32.mrf.mxu0
      %963 = vmatprep.mubr.f32.mxu0 0.0
      %964 = vmatmul.mubr.f32.gmra.mxu0 %v516
      %v965 = vpop.f32.mrf.mxu0
      %v966 = vadd.f32 0.0, %v965
      %v967 = vpop.f32.mrf.mxu0
      %968 = vmatprep.mubr.f32.mxu0 0.0
      %969 = vmatmul.mubr.f32.gmra.mxu0 %v519
      %v970 = vpop.f32.mrf.mxu0
      %v971 = vadd.f32 0.0, %v970
      %v972 = vpop.f32.mrf.mxu0
      %973 = vmatprep.mubr.f32.mxu0 0.0
      %974 = vmatmul.mubr.f32.gmra.mxu0 %v522
      %v975 = vpop.f32.mrf.mxu0
      %v976 = vadd.f32 0.0, %v975
      %v977 = vpop.f32.mrf.mxu0
      %978 = vmatprep.mubr.f32.mxu0 0.0
      %979 = vmatmul.mubr.f32.gmra.mxu0 %v525
      %v980 = vpop.f32.mrf.mxu0
      %v981 = vadd.f32 0.0, %v980
      %v982 = vpop.f32.mrf.mxu0
      %983 = vmatprep.mubr.f32.mxu0 0.0
      %984 = vmatmul.mubr.f32.gmra.mxu0 %v528
      %v985 = vpop.f32.mrf.mxu0
      %v986 = vadd.f32 0.0, %v985
      %v987 = vpop.f32.mrf.mxu0
      %988 = vmatprep.mubr.f32.mxu0 0.0
      %989 = vmatmul.mubr.f32.gmra.mxu0 %v531
      %v990 = vpop.f32.mrf.mxu0
      %v991 = vadd.f32 0.0, %v990
      %v992 = vpop.f32.mrf.mxu0
      %993 = vmatprep.mubr.f32.mxu0 0.0
      %994 = vmatmul.mubr.f32.gmra.mxu0 %v534
      %v995 = vpop.f32.mrf.mxu0
      %v996 = vadd.f32 0.0, %v995
      %v997 = vpop.f32.mrf.mxu0
      %998 = vmatprep.mubr.f32.mxu0 0.0
      %999 = vmatmul.mubr.f32.gmra.mxu0 %v537
      %v1000 = vpop.f32.mrf.mxu0
      %v1001 = vadd.f32 0.0, %v1000
      %v1002 = vpop.f32.mrf.mxu0
      %1003 = vdwg.mxu0
      %v1004 = vadd.f32 %v606, 0.0
      %v1005 = vadd.f32 %v611, 0.0
      %v1006 = vadd.f32 %v616, 0.0
      %v1007 = vadd.f32 %v621, 0.0
      %v1008 = vadd.f32 %v631, 0.0
      %v1009 = vadd.f32 %v636, 0.0
      %v1010 = vadd.f32 %v641, 0.0
      %v1011 = vadd.f32 %v646, 0.0
      %v1012 = vadd.f32 %v656, 0.0
      %v1013 = vadd.f32 %v661, 0.0
      %v1014 = vadd.f32 %v666, 0.0
      %v1015 = vadd.f32 %v671, 0.0
      %v1016 = vadd.f32 %v681, 0.0
      %v1017 = vadd.f32 %v686, 0.0
      %v1018 = vadd.f32 %v691, 0.0
      %v1019 = vadd.f32 %v696, 0.0
      %v1020 = vadd.f32 %v706, 0.0
      %v1021 = vadd.f32 %v711, 0.0
      %v1022 = vadd.f32 %v716, 0.0
      %v1023 = vadd.f32 %v721, 0.0
      %v1024 = vadd.f32 %v731, 0.0
      %v1025 = vadd.f32 %v736, 0.0
      %v1026 = vadd.f32 %v741, 0.0
      %v1027 = vadd.f32 %v746, 0.0
      %v1028 = vadd.f32 %v756, 0.0
      %v1029 = vadd.f32 %v761, 0.0
      %v1030 = vadd.f32 %v766, 0.0
      %v1031 = vadd.f32 %v771, 0.0
      %v1032 = vadd.f32 %v781, 0.0
      %v1033 = vadd.f32 %v786, 0.0
      %v1034 = vadd.f32 %v791, 0.0
      %v1035 = vadd.f32 %v796, 0.0
      %v1036 = vadd.f32 %v806, 0.0
      %v1037 = vadd.f32 %v811, 0.0
      %v1038 = vadd.f32 %v816, 0.0
      %v1039 = vadd.f32 %v821, 0.0
      %v1040 = vadd.f32 %v831, 0.0
      %v1041 = vadd.f32 %v836, 0.0
      %v1042 = vadd.f32 %v841, 0.0
      %v1043 = vadd.f32 %v846, 0.0
      %v1044 = vadd.f32 %v856, 0.0
      %v1045 = vadd.f32 %v861, 0.0
      %v1046 = vadd.f32 %v866, 0.0
      %v1047 = vadd.f32 %v871, 0.0
      %v1048 = vadd.f32 %v881, 0.0
      %v1049 = vadd.f32 %v886, 0.0
      %v1050 = vadd.f32 %v891, 0.0
      %v1051 = vadd.f32 %v896, 0.0
      %v1052 = vadd.f32 %v906, 0.0
      %v1053 = vadd.f32 %v911, 0.0
      %v1054 = vadd.f32 %v916, 0.0
      %v1055 = vadd.f32 %v921, 0.0
      %v1056 = vadd.f32 %v931, 0.0
      %v1057 = vadd.f32 %v936, 0.0
      %v1058 = vadd.f32 %v941, 0.0
      %v1059 = vadd.f32 %v946, 0.0
      %v1060 = vadd.f32 %v956, 0.0
      %v1061 = vadd.f32 %v961, 0.0
      %v1062 = vadd.f32 %v966, 0.0
      %v1063 = vadd.f32 %v971, 0.0
      %v1064 = vadd.f32 %v981, 0.0
      %v1065 = vadd.f32 %v986, 0.0
      %v1066 = vadd.f32 %v991, 0.0
      %v1067 = vadd.f32 %v996, 0.0
      %vm1148 = vcmask 1046528
      %v1149 = vrot.slane %v606, 1
      %v1150 = vrot.slane %v611, 1
      %v1151 = vsel %vm1148, %v1149, %v1150
      %v1152 = vrot.slane %v616, 1
      %v1153 = vsel %vm1148, %v1150, %v1152
      %v1154 = vrot.slane %v621, 1
      %v1155 = vsel %vm1148, %v1152, %v1154
      %v1156 = vrot.slane %v626, 1
      %v1157 = vsel %vm1148, %v1154, %v1156
      %v1158 = vrot.slane %v631, 1
      %v1159 = vrot.slane %v636, 1
      %v1160 = vsel %vm1148, %v1158, %v1159
      %v1161 = vrot.slane %v641, 1
      %v1162 = vsel %vm1148, %v1159, %v1161
      %v1163 = vrot.slane %v646, 1
      %v1164 = vsel %vm1148, %v1161, %v1163
      %v1165 = vrot.slane %v651, 1
      %v1166 = vsel %vm1148, %v1163, %v1165
      %v1167 = vrot.slane %v656, 1
      %v1168 = vrot.slane %v661, 1
      %v1169 = vsel %vm1148, %v1167, %v1168
      %v1170 = vrot.slane %v666, 1
      %v1171 = vsel %vm1148, %v1168, %v1170
      %v1172 = vrot.slane %v671, 1
      %v1173 = vsel %vm1148, %v1170, %v1172
      %v1174 = vrot.slane %v676, 1
      %v1175 = vsel %vm1148, %v1172, %v1174
      %v1176 = vrot.slane %v681, 1
      %v1177 = vrot.slane %v686, 1
      %v1178 = vsel %vm1148, %v1176, %v1177
      %v1179 = vrot.slane %v691, 1
      %v1180 = vsel %vm1148, %v1177, %v1179
      %v1181 = vrot.slane %v696, 1
      %v1182 = vsel %vm1148, %v1179, %v1181
      %v1183 = vrot.slane %v701, 1
      %v1184 = vsel %vm1148, %v1181, %v1183
      %v1185 = vrot.slane %v706, 1
      %v1186 = vrot.slane %v711, 1
      %v1187 = vsel %vm1148, %v1185, %v1186
      %v1188 = vrot.slane %v716, 1
      %v1189 = vsel %vm1148, %v1186, %v1188
      %v1190 = vrot.slane %v721, 1
      %v1191 = vsel %vm1148, %v1188, %v1190
      %v1192 = vrot.slane %v726, 1
      %v1193 = vsel %vm1148, %v1190, %v1192
      %v1194 = vrot.slane %v731, 1
      %v1195 = vrot.slane %v736, 1
      %v1196 = vsel %vm1148, %v1194, %v1195
      %v1197 = vrot.slane %v741, 1
      %v1198 = vsel %vm1148, %v1195, %v1197
      %v1199 = vrot.slane %v746, 1
      %v1200 = vsel %vm1148, %v1197, %v1199
      %v1201 = vrot.slane %v751, 1
      %v1202 = vsel %vm1148, %v1199, %v1201
      %v1203 = vrot.slane %v756, 1
      %v1204 = vrot.slane %v761, 1
      %v1205 = vsel %vm1148, %v1203, %v1204
      %v1206 = vrot.slane %v766, 1
      %v1207 = vsel %vm1148, %v1204, %v1206
      %v1208 = vrot.slane %v771, 1
      %v1209 = vsel %vm1148, %v1206, %v1208
      %v1210 = vrot.slane %v776, 1
      %v1211 = vsel %vm1148, %v1208, %v1210
      %v1212 = vrot.slane %v781, 1
      %v1213 = vrot.slane %v786, 1
      %v1214 = vsel %vm1148, %v1212, %v1213
      %v1215 = vrot.slane %v791, 1
      %v1216 = vsel %vm1148, %v1213, %v1215
      %v1217 = vrot.slane %v796, 1
      %v1218 = vsel %vm1148, %v1215, %v1217
      %v1219 = vrot.slane %v801, 1
      %v1220 = vsel %vm1148, %v1217, %v1219
      %v1221 = vrot.slane %v806, 1
      %v1222 = vrot.slane %v811, 1
      %v1223 = vsel %vm1148, %v1221, %v1222
      %v1224 = vrot.slane %v816, 1
      %v1225 = vsel %vm1148, %v1222, %v1224
      %v1226 = vrot.slane %v821, 1
      %v1227 = vsel %vm1148, %v1224, %v1226
      %v1228 = vrot.slane %v826, 1
      %v1229 = vsel %vm1148, %v1226, %v1228
      %v1230 = vrot.slane %v831, 1
      %v1231 = vrot.slane %v836, 1
      %v1232 = vsel %vm1148, %v1230, %v1231
      %v1233 = vrot.slane %v841, 1
      %v1234 = vsel %vm1148, %v1231, %v1233
      %v1235 = vrot.slane %v846, 1
      %v1236 = vsel %vm1148, %v1233, %v1235
      %v1237 = vrot.slane %v851, 1
      %v1238 = vsel %vm1148, %v1235, %v1237
      %v1239 = vrot.slane %v856, 1
      %v1240 = vrot.slane %v861, 1
      %v1241 = vsel %vm1148, %v1239, %v1240
      %v1242 = vrot.slane %v866, 1
      %v1243 = vsel %vm1148, %v1240, %v1242
      %v1244 = vrot.slane %v871, 1
      %v1245 = vsel %vm1148, %v1242, %v1244
      %v1246 = vrot.slane %v876, 1
      %v1247 = vsel %vm1148, %v1244, %v1246
      %v1248 = vrot.slane %v881, 1
      %v1249 = vrot.slane %v886, 1
      %v1250 = vsel %vm1148, %v1248, %v1249
      %v1251 = vrot.slane %v891, 1
      %v1252 = vsel %vm1148, %v1249, %v1251
      %v1253 = vrot.slane %v896, 1
      %v1254 = vsel %vm1148, %v1251, %v1253
      %v1255 = vrot.slane %v901, 1
      %v1256 = vsel %vm1148, %v1253, %v1255
      %v1257 = vrot.slane %v906, 1
      %v1258 = vrot.slane %v911, 1
      %v1259 = vsel %vm1148, %v1257, %v1258
      %v1260 = vrot.slane %v916, 1
      %v1261 = vsel %vm1148, %v1258, %v1260
      %v1262 = vrot.slane %v921, 1
      %v1263 = vsel %vm1148, %v1260, %v1262
      %v1264 = vrot.slane %v926, 1
      %v1265 = vsel %vm1148, %v1262, %v1264
      %v1266 = vrot.slane %v931, 1
      %v1267 = vrot.slane %v936, 1
      %v1268 = vsel %vm1148, %v1266, %v1267
      %v1269 = vrot.slane %v941, 1
      %v1270 = vsel %vm1148, %v1267, %v1269
      %v1271 = vrot.slane %v946, 1
      %v1272 = vsel %vm1148, %v1269, %v1271
      %v1273 = vrot.slane %v951, 1
      %v1274 = vsel %vm1148, %v1271, %v1273
      %v1275 = vrot.slane %v956, 1
      %v1276 = vrot.slane %v961, 1
      %v1277 = vsel %vm1148, %v1275, %v1276
      %v1278 = vrot.slane %v966, 1
      %v1279 = vsel %vm1148, %v1276, %v1278
      %v1280 = vrot.slane %v971, 1
      %v1281 = vsel %vm1148, %v1278, %v1280
      %v1282 = vrot.slane %v976, 1
      %v1283 = vsel %vm1148, %v1280, %v1282
      %v1284 = vrot.slane %v981, 1
      %v1285 = vrot.slane %v986, 1
      %v1286 = vsel %vm1148, %v1284, %v1285
      %v1287 = vrot.slane %v991, 1
      %v1288 = vsel %vm1148, %v1285, %v1287
      %v1289 = vrot.slane %v996, 1
      %v1290 = vsel %vm1148, %v1287, %v1289
      %v1291 = vrot.slane %v1001, 1
      %v1292 = vsel %vm1148, %v1289, %v1291
      %1293 = vrot.lane.b32.xlu0 %v1151, 125
      %v1294 = vpop.permute.xlu0 %1293
      %1295 = vrot.lane.b32.xlu0 %v1153, 125
      %v1296 = vpop.permute.xlu0 %1295
      %1297 = vrot.lane.b32.xlu0 %v1155, 125
      %v1298 = vpop.permute.xlu0 %1297
      %1299 = vrot.lane.b32.xlu0 %v1157, 125
      %v1300 = vpop.permute.xlu0 %1299
      %1301 = vrot.lane.b32.xlu0 %v1160, 125
      %v1302 = vpop.permute.xlu0 %1301
      %1303 = vrot.lane.b32.xlu0 %v1162, 125
      %v1304 = vpop.permute.xlu0 %1303
      %1305 = vrot.lane.b32.xlu0 %v1164, 125
      %v1306 = vpop.permute.xlu0 %1305
      %1307 = vrot.lane.b32.xlu0 %v1166, 125
      %v1308 = vpop.permute.xlu0 %1307
      %1309 = vrot.lane.b32.xlu0 %v1169, 125
      %v1310 = vpop.permute.xlu0 %1309
      %1311 = vrot.lane.b32.xlu0 %v1171, 125
      %v1312 = vpop.permute.xlu0 %1311
      %1313 = vrot.lane.b32.xlu0 %v1173, 125
      %v1314 = vpop.permute.xlu0 %1313
      %1315 = vrot.lane.b32.xlu0 %v1175, 125
      %v1316 = vpop.permute.xlu0 %1315
      %1317 = vrot.lane.b32.xlu0 %v1178, 125
      %v1318 = vpop.permute.xlu0 %1317
      %1319 = vrot.lane.b32.xlu0 %v1180, 125
      %v1320 = vpop.permute.xlu0 %1319
      %1321 = vrot.lane.b32.xlu0 %v1182, 125
      %v1322 = vpop.permute.xlu0 %1321
      %1323 = vrot.lane.b32.xlu0 %v1184, 125
      %v1324 = vpop.permute.xlu0 %1323
      %1325 = vrot.lane.b32.xlu0 %v1187, 125
      %v1326 = vpop.permute.xlu0 %1325
      %1327 = vrot.lane.b32.xlu0 %v1189, 125
      %v1328 = vpop.permute.xlu0 %1327
      %1329 = vrot.lane.b32.xlu0 %v1191, 125
      %v1330 = vpop.permute.xlu0 %1329
      %1331 = vrot.lane.b32.xlu0 %v1193, 125
      %v1332 = vpop.permute.xlu0 %1331
      %1333 = vrot.lane.b32.xlu0 %v1196, 125
      %v1334 = vpop.permute.xlu0 %1333
      %1335 = vrot.lane.b32.xlu0 %v1198, 125
      %v1336 = vpop.permute.xlu0 %1335
      %1337 = vrot.lane.b32.xlu0 %v1200, 125
      %v1338 = vpop.permute.xlu0 %1337
      %1339 = vrot.lane.b32.xlu0 %v1202, 125
      %v1340 = vpop.permute.xlu0 %1339
      %1341 = vrot.lane.b32.xlu0 %v1205, 125
      %v1342 = vpop.permute.xlu0 %1341
      %1343 = vrot.lane.b32.xlu0 %v1207, 125
      %v1344 = vpop.permute.xlu0 %1343
      %1345 = vrot.lane.b32.xlu0 %v1209, 125
      %v1346 = vpop.permute.xlu0 %1345
      %1347 = vrot.lane.b32.xlu0 %v1211, 125
      %v1348 = vpop.permute.xlu0 %1347
      %1349 = vrot.lane.b32.xlu0 %v1214, 125
      %v1350 = vpop.permute.xlu0 %1349
      %1351 = vrot.lane.b32.xlu0 %v1216, 125
      %v1352 = vpop.permute.xlu0 %1351
      %1353 = vrot.lane.b32.xlu0 %v1218, 125
      %v1354 = vpop.permute.xlu0 %1353
      %1355 = vrot.lane.b32.xlu0 %v1220, 125
      %v1356 = vpop.permute.xlu0 %1355
      %1357 = vrot.lane.b32.xlu0 %v1223, 125
      %v1358 = vpop.permute.xlu0 %1357
      %1359 = vrot.lane.b32.xlu0 %v1225, 125
      %v1360 = vpop.permute.xlu0 %1359
      %1361 = vrot.lane.b32.xlu0 %v1227, 125
      %v1362 = vpop.permute.xlu0 %1361
      %1363 = vrot.lane.b32.xlu0 %v1229, 125
      %v1364 = vpop.permute.xlu0 %1363
      %1365 = vrot.lane.b32.xlu0 %v1232, 125
      %v1366 = vpop.permute.xlu0 %1365
      %1367 = vrot.lane.b32.xlu0 %v1234, 125
      %v1368 = vpop.permute.xlu0 %1367
      %1369 = vrot.lane.b32.xlu0 %v1236, 125
      %v1370 = vpop.permute.xlu0 %1369
      %1371 = vrot.lane.b32.xlu0 %v1238, 125
      %v1372 = vpop.permute.xlu0 %1371
      %1373 = vrot.lane.b32.xlu0 %v1241, 125
      %v1374 = vpop.permute.xlu0 %1373
      %1375 = vrot.lane.b32.xlu0 %v1243, 125
      %v1376 = vpop.permute.xlu0 %1375
      %1377 = vrot.lane.b32.xlu0 %v1245, 125
      %v1378 = vpop.permute.xlu0 %1377
      %1379 = vrot.lane.b32.xlu0 %v1247, 125
      %v1380 = vpop.permute.xlu0 %1379
      %1381 = vrot.lane.b32.xlu0 %v1250, 125
      %v1382 = vpop.permute.xlu0 %1381
      %1383 = vrot.lane.b32.xlu0 %v1252, 125
      %v1384 = vpop.permute.xlu0 %1383
      %1385 = vrot.lane.b32.xlu0 %v1254, 125
      %v1386 = vpop.permute.xlu0 %1385
      %1387 = vrot.lane.b32.xlu0 %v1256, 125
      %v1388 = vpop.permute.xlu0 %1387
      %1389 = vrot.lane.b32.xlu0 %v1259, 125
      %v1390 = vpop.permute.xlu0 %1389
      %1391 = vrot.lane.b32.xlu0 %v1261, 125
      %v1392 = vpop.permute.xlu0 %1391
      %1393 = vrot.lane.b32.xlu0 %v1263, 125
      %v1394 = vpop.permute.xlu0 %1393
      %1395 = vrot.lane.b32.xlu0 %v1265, 125
      %v1396 = vpop.permute.xlu0 %1395
      %1397 = vrot.lane.b32.xlu0 %v1268, 125
      %v1398 = vpop.permute.xlu0 %1397
      %1399 = vrot.lane.b32.xlu0 %v1270, 125
      %v1400 = vpop.permute.xlu0 %1399
      %1401 = vrot.lane.b32.xlu0 %v1272, 125
      %v1402 = vpop.permute.xlu0 %1401
      %1403 = vrot.lane.b32.xlu0 %v1274, 125
      %v1404 = vpop.permute.xlu0 %1403
      %1405 = vrot.lane.b32.xlu0 %v1277, 125
      %v1406 = vpop.permute.xlu0 %1405
      %1407 = vrot.lane.b32.xlu0 %v1279, 125
      %v1408 = vpop.permute.xlu0 %1407
      %1409 = vrot.lane.b32.xlu0 %v1281, 125
      %v1410 = vpop.permute.xlu0 %1409
      %1411 = vrot.lane.b32.xlu0 %v1283, 125
      %v1412 = vpop.permute.xlu0 %1411
      %1413 = vrot.lane.b32.xlu0 %v1286, 125
      %v1414 = vpop.permute.xlu0 %1413
      %1415 = vrot.lane.b32.xlu0 %v1288, 125
      %v1416 = vpop.permute.xlu0 %1415
      %1417 = vrot.lane.b32.xlu0 %v1290, 125
      %v1418 = vpop.permute.xlu0 %1417
      %1419 = vrot.lane.b32.xlu0 %v1292, 125
      %v1420 = vpop.permute.xlu0 %1419
      %v1485 = vadd.f32 %v1004, %v1294
      %v1486 = vadd.f32 %v1005, %v1296
      %v1487 = vadd.f32 %v1006, %v1298
      %v1488 = vadd.f32 %v1007, %v1300
      %v1489 = vadd.f32 %v1008, %v1302
      %v1490 = vadd.f32 %v1009, %v1304
      %v1491 = vadd.f32 %v1010, %v1306
      %v1492 = vadd.f32 %v1011, %v1308
      %v1493 = vadd.f32 %v1012, %v1310
      %v1494 = vadd.f32 %v1013, %v1312
      %v1495 = vadd.f32 %v1014, %v1314
      %v1496 = vadd.f32 %v1015, %v1316
      %v1497 = vadd.f32 %v1016, %v1318
      %v1498 = vadd.f32 %v1017, %v1320
      %v1499 = vadd.f32 %v1018, %v1322
      %v1500 = vadd.f32 %v1019, %v1324
      %v1501 = vadd.f32 %v1020, %v1326
      %v1502 = vadd.f32 %v1021, %v1328
      %v1503 = vadd.f32 %v1022, %v1330
      %v1504 = vadd.f32 %v1023, %v1332
      %v1505 = vadd.f32 %v1024, %v1334
      %v1506 = vadd.f32 %v1025, %v1336
      %v1507 = vadd.f32 %v1026, %v1338
      %v1508 = vadd.f32 %v1027, %v1340
      %v1509 = vadd.f32 %v1028, %v1342
      %v1510 = vadd.f32 %v1029, %v1344
      %v1511 = vadd.f32 %v1030, %v1346
      %v1512 = vadd.f32 %v1031, %v1348
      %v1513 = vadd.f32 %v1032, %v1350
      %v1514 = vadd.f32 %v1033, %v1352
      %v1515 = vadd.f32 %v1034, %v1354
      %v1516 = vadd.f32 %v1035, %v1356
      %v1517 = vadd.f32 %v1036, %v1358
      %v1518 = vadd.f32 %v1037, %v1360
      %v1519 = vadd.f32 %v1038, %v1362
      %v1520 = vadd.f32 %v1039, %v1364
      %v1521 = vadd.f32 %v1040, %v1366
      %v1522 = vadd.f32 %v1041, %v1368
      %v1523 = vadd.f32 %v1042, %v1370
      %v1524 = vadd.f32 %v1043, %v1372
      %v1525 = vadd.f32 %v1044, %v1374
      %v1526 = vadd.f32 %v1045, %v1376
      %v1527 = vadd.f32 %v1046, %v1378
      %v1528 = vadd.f32 %v1047, %v1380
      %v1529 = vadd.f32 %v1048, %v1382
      %v1530 = vadd.f32 %v1049, %v1384
      %v1531 = vadd.f32 %v1050, %v1386
      %v1532 = vadd.f32 %v1051, %v1388
      %v1533 = vadd.f32 %v1052, %v1390
      %v1534 = vadd.f32 %v1053, %v1392
      %v1535 = vadd.f32 %v1054, %v1394
      %v1536 = vadd.f32 %v1055, %v1396
      %v1537 = vadd.f32 %v1056, %v1398
      %v1538 = vadd.f32 %v1057, %v1400
      %v1539 = vadd.f32 %v1058, %v1402
      %v1540 = vadd.f32 %v1059, %v1404
      %v1541 = vadd.f32 %v1060, %v1406
      %v1542 = vadd.f32 %v1061, %v1408
      %v1543 = vadd.f32 %v1062, %v1410
      %v1544 = vadd.f32 %v1063, %v1412
      %v1545 = vadd.f32 %v1064, %v1414
      %v1546 = vadd.f32 %v1065, %v1416
      %v1547 = vadd.f32 %v1066, %v1418
      %v1548 = vadd.f32 %v1067, %v1420
      %vm1549 = vcmask 1045504
      %v1550 = vrot.slane %v606, 2
      %v1551 = vrot.slane %v611, 2
      %v1552 = vsel %vm1549, %v1550, %v1551
      %v1553 = vrot.slane %v616, 2
      %v1554 = vsel %vm1549, %v1551, %v1553
      %v1555 = vrot.slane %v621, 2
      %v1556 = vsel %vm1549, %v1553, %v1555
      %v1557 = vrot.slane %v626, 2
      %v1558 = vsel %vm1549, %v1555, %v1557
      %v1559 = vrot.slane %v631, 2
      %v1560 = vrot.slane %v636, 2
      %v1561 = vsel %vm1549, %v1559, %v1560
      %v1562 = vrot.slane %v641, 2
      %v1563 = vsel %vm1549, %v1560, %v1562
      %v1564 = vrot.slane %v646, 2
      %v1565 = vsel %vm1549, %v1562, %v1564
      %v1566 = vrot.slane %v651, 2
      %v1567 = vsel %vm1549, %v1564, %v1566
      %v1568 = vrot.slane %v656, 2
      %v1569 = vrot.slane %v661, 2
      %v1570 = vsel %vm1549, %v1568, %v1569
      %v1571 = vrot.slane %v666, 2
      %v1572 = vsel %vm1549, %v1569, %v1571
      %v1573 = vrot.slane %v671, 2
      %v1574 = vsel %vm1549, %v1571, %v1573
      %v1575 = vrot.slane %v676, 2
      %v1576 = vsel %vm1549, %v1573, %v1575
      %v1577 = vrot.slane %v681, 2
      %v1578 = vrot.slane %v686, 2
      %v1579 = vsel %vm1549, %v1577, %v1578
      %v1580 = vrot.slane %v691, 2
      %v1581 = vsel %vm1549, %v1578, %v1580
      %v1582 = vrot.slane %v696, 2
      %v1583 = vsel %vm1549, %v1580, %v1582
      %v1584 = vrot.slane %v701, 2
      %v1585 = vsel %vm1549, %v1582, %v1584
      %v1586 = vrot.slane %v706, 2
      %v1587 = vrot.slane %v711, 2
      %v1588 = vsel %vm1549, %v1586, %v1587
      %v1589 = vrot.slane %v716, 2
      %v1590 = vsel %vm1549, %v1587, %v1589
      %v1591 = vrot.slane %v721, 2
      %v1592 = vsel %vm1549, %v1589, %v1591
      %v1593 = vrot.slane %v726, 2
      %v1594 = vsel %vm1549, %v1591, %v1593
      %v1595 = vrot.slane %v731, 2
      %v1596 = vrot.slane %v736, 2
      %v1597 = vsel %vm1549, %v1595, %v1596
      %v1598 = vrot.slane %v741, 2
      %v1599 = vsel %vm1549, %v1596, %v1598
      %v1600 = vrot.slane %v746, 2
      %v1601 = vsel %vm1549, %v1598, %v1600
      %v1602 = vrot.slane %v751, 2
      %v1603 = vsel %vm1549, %v1600, %v1602
      %v1604 = vrot.slane %v756, 2
      %v1605 = vrot.slane %v761, 2
      %v1606 = vsel %vm1549, %v1604, %v1605
      %v1607 = vrot.slane %v766, 2
      %v1608 = vsel %vm1549, %v1605, %v1607
      %v1609 = vrot.slane %v771, 2
      %v1610 = vsel %vm1549, %v1607, %v1609
      %v1611 = vrot.slane %v776, 2
      %v1612 = vsel %vm1549, %v1609, %v1611
      %v1613 = vrot.slane %v781, 2
      %v1614 = vrot.slane %v786, 2
      %v1615 = vsel %vm1549, %v1613, %v1614
      %v1616 = vrot.slane %v791, 2
      %v1617 = vsel %vm1549, %v1614, %v1616
      %v1618 = vrot.slane %v796, 2
      %v1619 = vsel %vm1549, %v1616, %v1618
      %v1620 = vrot.slane %v801, 2
      %v1621 = vsel %vm1549, %v1618, %v1620
      %v1622 = vrot.slane %v806, 2
      %v1623 = vrot.slane %v811, 2
      %v1624 = vsel %vm1549, %v1622, %v1623
      %v1625 = vrot.slane %v816, 2
      %v1626 = vsel %vm1549, %v1623, %v1625
      %v1627 = vrot.slane %v821, 2
      %v1628 = vsel %vm1549, %v1625, %v1627
      %v1629 = vrot.slane %v826, 2
      %v1630 = vsel %vm1549, %v1627, %v1629
      %v1631 = vrot.slane %v831, 2
      %v1632 = vrot.slane %v836, 2
      %v1633 = vsel %vm1549, %v1631, %v1632
      %v1634 = vrot.slane %v841, 2
      %v1635 = vsel %vm1549, %v1632, %v1634
      %v1636 = vrot.slane %v846, 2
      %v1637 = vsel %vm1549, %v1634, %v1636
      %v1638 = vrot.slane %v851, 2
      %v1639 = vsel %vm1549, %v1636, %v1638
      %v1640 = vrot.slane %v856, 2
      %v1641 = vrot.slane %v861, 2
      %v1642 = vsel %vm1549, %v1640, %v1641
      %v1643 = vrot.slane %v866, 2
      %v1644 = vsel %vm1549, %v1641, %v1643
      %v1645 = vrot.slane %v871, 2
      %v1646 = vsel %vm1549, %v1643, %v1645
      %v1647 = vrot.slane %v876, 2
      %v1648 = vsel %vm1549, %v1645, %v1647
      %v1649 = vrot.slane %v881, 2
      %v1650 = vrot.slane %v886, 2
      %v1651 = vsel %vm1549, %v1649, %v1650
      %v1652 = vrot.slane %v891, 2
      %v1653 = vsel %vm1549, %v1650, %v1652
      %v1654 = vrot.slane %v896, 2
      %v1655 = vsel %vm1549, %v1652, %v1654
      %v1656 = vrot.slane %v901, 2
      %v1657 = vsel %vm1549, %v1654, %v1656
      %v1658 = vrot.slane %v906, 2
      %v1659 = vrot.slane %v911, 2
      %v1660 = vsel %vm1549, %v1658, %v1659
      %v1661 = vrot.slane %v916, 2
      %v1662 = vsel %vm1549, %v1659, %v1661
      %v1663 = vrot.slane %v921, 2
      %v1664 = vsel %vm1549, %v1661, %v1663
      %v1665 = vrot.slane %v926, 2
      %v1666 = vsel %vm1549, %v1663, %v1665
      %v1667 = vrot.slane %v931, 2
      %v1668 = vrot.slane %v936, 2
      %v1669 = vsel %vm1549, %v1667, %v1668
      %v1670 = vrot.slane %v941, 2
      %v1671 = vsel %vm1549, %v1668, %v1670
      %v1672 = vrot.slane %v946, 2
      %v1673 = vsel %vm1549, %v1670, %v1672
      %v1674 = vrot.slane %v951, 2
      %v1675 = vsel %vm1549, %v1672, %v1674
      %v1676 = vrot.slane %v956, 2
      %v1677 = vrot.slane %v961, 2
      %v1678 = vsel %vm1549, %v1676, %v1677
      %v1679 = vrot.slane %v966, 2
      %v1680 = vsel %vm1549, %v1677, %v1679
      %v1681 = vrot.slane %v971, 2
      %v1682 = vsel %vm1549, %v1679, %v1681
      %v1683 = vrot.slane %v976, 2
      %v1684 = vsel %vm1549, %v1681, %v1683
      %v1685 = vrot.slane %v981, 2
      %v1686 = vrot.slane %v986, 2
      %v1687 = vsel %vm1549, %v1685, %v1686
      %v1688 = vrot.slane %v991, 2
      %v1689 = vsel %vm1549, %v1686, %v1688
      %v1690 = vrot.slane %v996, 2
      %v1691 = vsel %vm1549, %v1688, %v1690
      %v1692 = vrot.slane %v1001, 2
      %v1693 = vsel %vm1549, %v1690, %v1692
      %1694 = vrot.lane.b32.xlu0 %v1552, 122
      %v1695 = vpop.permute.xlu0 %1694
      %1696 = vrot.lane.b32.xlu0 %v1554, 122
      %v1697 = vpop.permute.xlu0 %1696
      %1698 = vrot.lane.b32.xlu0 %v1556, 122
      %v1699 = vpop.permute.xlu0 %1698
      %1700 = vrot.lane.b32.xlu0 %v1558, 122
      %v1701 = vpop.permute.xlu0 %1700
      %1702 = vrot.lane.b32.xlu0 %v1561, 122
      %v1703 = vpop.permute.xlu0 %1702
      %1704 = vrot.lane.b32.xlu0 %v1563, 122
      %v1705 = vpop.permute.xlu0 %1704
      %1706 = vrot.lane.b32.xlu0 %v1565, 122
      %v1707 = vpop.permute.xlu0 %1706
      %1708 = vrot.lane.b32.xlu0 %v1567, 122
      %v1709 = vpop.permute.xlu0 %1708
      %1710 = vrot.lane.b32.xlu0 %v1570, 122
      %v1711 = vpop.permute.xlu0 %1710
      %1712 = vrot.lane.b32.xlu0 %v1572, 122
      %v1713 = vpop.permute.xlu0 %1712
      %1714 = vrot.lane.b32.xlu0 %v1574, 122
      %v1715 = vpop.permute.xlu0 %1714
      %1716 = vrot.lane.b32.xlu0 %v1576, 122
      %v1717 = vpop.permute.xlu0 %1716
      %1718 = vrot.lane.b32.xlu0 %v1579, 122
      %v1719 = vpop.permute.xlu0 %1718
      %1720 = vrot.lane.b32.xlu0 %v1581, 122
      %v1721 = vpop.permute.xlu0 %1720
      %1722 = vrot.lane.b32.xlu0 %v1583, 122
      %v1723 = vpop.permute.xlu0 %1722
      %1724 = vrot.lane.b32.xlu0 %v1585, 122
      %v1725 = vpop.permute.xlu0 %1724
      %1726 = vrot.lane.b32.xlu0 %v1588, 122
      %v1727 = vpop.permute.xlu0 %1726
      %1728 = vrot.lane.b32.xlu0 %v1590, 122
      %v1729 = vpop.permute.xlu0 %1728
      %1730 = vrot.lane.b32.xlu0 %v1592, 122
      %v1731 = vpop.permute.xlu0 %1730
      %1732 = vrot.lane.b32.xlu0 %v1594, 122
      %v1733 = vpop.permute.xlu0 %1732
      %1734 = vrot.lane.b32.xlu0 %v1597, 122
      %v1735 = vpop.permute.xlu0 %1734
      %1736 = vrot.lane.b32.xlu0 %v1599, 122
      %v1737 = vpop.permute.xlu0 %1736
      %1738 = vrot.lane.b32.xlu0 %v1601, 122
      %v1739 = vpop.permute.xlu0 %1738
      %1740 = vrot.lane.b32.xlu0 %v1603, 122
      %v1741 = vpop.permute.xlu0 %1740
      %1742 = vrot.lane.b32.xlu0 %v1606, 122
      %v1743 = vpop.permute.xlu0 %1742
      %1744 = vrot.lane.b32.xlu0 %v1608, 122
      %v1745 = vpop.permute.xlu0 %1744
      %1746 = vrot.lane.b32.xlu0 %v1610, 122
      %v1747 = vpop.permute.xlu0 %1746
      %1748 = vrot.lane.b32.xlu0 %v1612, 122
      %v1749 = vpop.permute.xlu0 %1748
      %1750 = vrot.lane.b32.xlu0 %v1615, 122
      %v1751 = vpop.permute.xlu0 %1750
      %1752 = vrot.lane.b32.xlu0 %v1617, 122
      %v1753 = vpop.permute.xlu0 %1752
      %1754 = vrot.lane.b32.xlu0 %v1619, 122
      %v1755 = vpop.permute.xlu0 %1754
      %1756 = vrot.lane.b32.xlu0 %v1621, 122
      %v1757 = vpop.permute.xlu0 %1756
      %1758 = vrot.lane.b32.xlu0 %v1624, 122
      %v1759 = vpop.permute.xlu0 %1758
      %1760 = vrot.lane.b32.xlu0 %v1626, 122
      %v1761 = vpop.permute.xlu0 %1760
      %1762 = vrot.lane.b32.xlu0 %v1628, 122
      %v1763 = vpop.permute.xlu0 %1762
      %1764 = vrot.lane.b32.xlu0 %v1630, 122
      %v1765 = vpop.permute.xlu0 %1764
      %1766 = vrot.lane.b32.xlu0 %v1633, 122
      %v1767 = vpop.permute.xlu0 %1766
      %1768 = vrot.lane.b32.xlu0 %v1635, 122
      %v1769 = vpop.permute.xlu0 %1768
      %1770 = vrot.lane.b32.xlu0 %v1637, 122
      %v1771 = vpop.permute.xlu0 %1770
      %1772 = vrot.lane.b32.xlu0 %v1639, 122
      %v1773 = vpop.permute.xlu0 %1772
      %1774 = vrot.lane.b32.xlu0 %v1642, 122
      %v1775 = vpop.permute.xlu0 %1774
      %1776 = vrot.lane.b32.xlu0 %v1644, 122
      %v1777 = vpop.permute.xlu0 %1776
      %1778 = vrot.lane.b32.xlu0 %v1646, 122
      %v1779 = vpop.permute.xlu0 %1778
      %1780 = vrot.lane.b32.xlu0 %v1648, 122
      %v1781 = vpop.permute.xlu0 %1780
      %1782 = vrot.lane.b32.xlu0 %v1651, 122
      %v1783 = vpop.permute.xlu0 %1782
      %1784 = vrot.lane.b32.xlu0 %v1653, 122
      %v1785 = vpop.permute.xlu0 %1784
      %1786 = vrot.lane.b32.xlu0 %v1655, 122
      %v1787 = vpop.permute.xlu0 %1786
      %1788 = vrot.lane.b32.xlu0 %v1657, 122
      %v1789 = vpop.permute.xlu0 %1788
      %1790 = vrot.lane.b32.xlu0 %v1660, 122
      %v1791 = vpop.permute.xlu0 %1790
      %1792 = vrot.lane.b32.xlu0 %v1662, 122
      %v1793 = vpop.permute.xlu0 %1792
      %1794 = vrot.lane.b32.xlu0 %v1664, 122
      %v1795 = vpop.permute.xlu0 %1794
      %1796 = vrot.lane.b32.xlu0 %v1666, 122
      %v1797 = vpop.permute.xlu0 %1796
      %1798 = vrot.lane.b32.xlu0 %v1669, 122
      %v1799 = vpop.permute.xlu0 %1798
      %1800 = vrot.lane.b32.xlu0 %v1671, 122
      %v1801 = vpop.permute.xlu0 %1800
      %1802 = vrot.lane.b32.xlu0 %v1673, 122
      %v1803 = vpop.permute.xlu0 %1802
      %1804 = vrot.lane.b32.xlu0 %v1675, 122
      %v1805 = vpop.permute.xlu0 %1804
      %1806 = vrot.lane.b32.xlu0 %v1678, 122
      %v1807 = vpop.permute.xlu0 %1806
      %1808 = vrot.lane.b32.xlu0 %v1680, 122
      %v1809 = vpop.permute.xlu0 %1808
      %1810 = vrot.lane.b32.xlu0 %v1682, 122
      %v1811 = vpop.permute.xlu0 %1810
      %1812 = vrot.lane.b32.xlu0 %v1684, 122
      %v1813 = vpop.permute.xlu0 %1812
      %1814 = vrot.lane.b32.xlu0 %v1687, 122
      %v1815 = vpop.permute.xlu0 %1814
      %1816 = vrot.lane.b32.xlu0 %v1689, 122
      %v1817 = vpop.permute.xlu0 %1816
      %1818 = vrot.lane.b32.xlu0 %v1691, 122
      %v1819 = vpop.permute.xlu0 %1818
      %1820 = vrot.lane.b32.xlu0 %v1693, 122
      %v1821 = vpop.permute.xlu0 %1820
      %v1886 = vadd.f32 %v1485, %v1695
      %v1887 = vadd.f32 %v1486, %v1697
      %v1888 = vadd.f32 %v1487, %v1699
      %v1889 = vadd.f32 %v1488, %v1701
      %v1890 = vadd.f32 %v1489, %v1703
      %v1891 = vadd.f32 %v1490, %v1705
      %v1892 = vadd.f32 %v1491, %v1707
      %v1893 = vadd.f32 %v1492, %v1709
      %v1894 = vadd.f32 %v1493, %v1711
      %v1895 = vadd.f32 %v1494, %v1713
      %v1896 = vadd.f32 %v1495, %v1715
      %v1897 = vadd.f32 %v1496, %v1717
      %v1898 = vadd.f32 %v1497, %v1719
      %v1899 = vadd.f32 %v1498, %v1721
      %v1900 = vadd.f32 %v1499, %v1723
      %v1901 = vadd.f32 %v1500, %v1725
      %v1902 = vadd.f32 %v1501, %v1727
      %v1903 = vadd.f32 %v1502, %v1729
      %v1904 = vadd.f32 %v1503, %v1731
      %v1905 = vadd.f32 %v1504, %v1733
      %v1906 = vadd.f32 %v1505, %v1735
      %v1907 = vadd.f32 %v1506, %v1737
      %v1908 = vadd.f32 %v1507, %v1739
      %v1909 = vadd.f32 %v1508, %v1741
      %v1910 = vadd.f32 %v1509, %v1743
      %v1911 = vadd.f32 %v1510, %v1745
      %v1912 = vadd.f32 %v1511, %v1747
      %v1913 = vadd.f32 %v1512, %v1749
      %v1914 = vadd.f32 %v1513, %v1751
      %v1915 = vadd.f32 %v1514, %v1753
      %v1916 = vadd.f32 %v1515, %v1755
      %v1917 = vadd.f32 %v1516, %v1757
      %v1918 = vadd.f32 %v1517, %v1759
      %v1919 = vadd.f32 %v1518, %v1761
      %v1920 = vadd.f32 %v1519, %v1763
      %v1921 = vadd.f32 %v1520, %v1765
      %v1922 = vadd.f32 %v1521, %v1767
      %v1923 = vadd.f32 %v1522, %v1769
      %v1924 = vadd.f32 %v1523, %v1771
      %v1925 = vadd.f32 %v1524, %v1773
      %v1926 = vadd.f32 %v1525, %v1775
      %v1927 = vadd.f32 %v1526, %v1777
      %v1928 = vadd.f32 %v1527, %v1779
      %v1929 = vadd.f32 %v1528, %v1781
      %v1930 = vadd.f32 %v1529, %v1783
      %v1931 = vadd.f32 %v1530, %v1785
      %v1932 = vadd.f32 %v1531, %v1787
      %v1933 = vadd.f32 %v1532, %v1789
      %v1934 = vadd.f32 %v1533, %v1791
      %v1935 = vadd.f32 %v1534, %v1793
      %v1936 = vadd.f32 %v1535, %v1795
      %v1937 = vadd.f32 %v1536, %v1797
      %v1938 = vadd.f32 %v1537, %v1799
      %v1939 = vadd.f32 %v1538, %v1801
      %v1940 = vadd.f32 %v1539, %v1803
      %v1941 = vadd.f32 %v1540, %v1805
      %v1942 = vadd.f32 %v1541, %v1807
      %v1943 = vadd.f32 %v1542, %v1809
      %v1944 = vadd.f32 %v1543, %v1811
      %v1945 = vadd.f32 %v1544, %v1813
      %v1946 = vadd.f32 %v1545, %v1815
      %v1947 = vadd.f32 %v1546, %v1817
      %v1948 = vadd.f32 %v1547, %v1819
      %v1949 = vadd.f32 %v1548, %v1821
      %s1950 = scalar_lea.vmem %s198, 40
      %v1951 = vld [vmem:[%s1950] sm:$0xff]
      %v1952 = vld [vmem:[%s1950 + $0x8] sm:$0xff]
      %v1953 = vld [vmem:[%s1950 + $0x10] sm:$0xff]
      %v1954 = vld [vmem:[%s1950 + $0x18] sm:$0xff]
      %v1955 = vld [vmem:[%s1950 + $0x20] sm:$0xff]
      %v1956 = vld [vmem:[%s1950 + $0x28] sm:$0xff]
      %v1957 = vld [vmem:[%s1950 + $0x30] sm:$0xff]
      %v1958 = vld [vmem:[%s1950 + $0x38] sm:$0xff]
      %v1959 = vld [vmem:[%s1950 + $0x40] sm:$0xff]
      %v1960 = vld [vmem:[%s1950 + $0x48] sm:$0xff]
      %v1961 = vld [vmem:[%s1950 + $0x50] sm:$0xff]
      %v1962 = vld [vmem:[%s1950 + $0x58] sm:$0xff]
      %v1963 = vld [vmem:[%s1950 + $0x60] sm:$0xff]
      %v1964 = vld [vmem:[%s1950 + $0x68] sm:$0xff]
      %v1965 = vld [vmem:[%s1950 + $0x70] sm:$0xff]
      %v1966 = vld [vmem:[%s1950 + $0x78] sm:$0xff]
      %v1967 = vld [vmem:[%s1950 + $0x80] sm:$0xff]
      %v1968 = vld [vmem:[%s1950 + $0x88] sm:$0xff]
      %v1969 = vld [vmem:[%s1950 + $0x90] sm:$0xff]
      %v1970 = vld [vmem:[%s1950 + $0x98] sm:$0xff]
      %v1971 = vld [vmem:[%s1950 + $0xa0] sm:$0xff]
      %v1972 = vld [vmem:[%s1950 + $0xa8] sm:$0xff]
      %v1973 = vld [vmem:[%s1950 + $0xb0] sm:$0xff]
      %v1974 = vld [vmem:[%s1950 + $0xb8] sm:$0xff]
      %v1975 = vld [vmem:[%s1950 + $0xc0] sm:$0xff]
      %v1976 = vld [vmem:[%s1950 + $0xc8] sm:$0xff]
      %v1977 = vld [vmem:[%s1950 + $0xd0] sm:$0xff]
      %v1978 = vld [vmem:[%s1950 + $0xd8] sm:$0xff]
      %v1979 = vld [vmem:[%s1950 + $0xe0] sm:$0xff]
      %v1980 = vld [vmem:[%s1950 + $0xe8] sm:$0xff]
      %v1981 = vld [vmem:[%s1950 + $0xf0] sm:$0xff]
      %v1982 = vld [vmem:[%s1950 + $0xf8] sm:$0xff]
      %v1983 = vld [vmem:[%s1950 + $0x100] sm:$0xff]
      %v1984 = vld [vmem:[%s1950 + $0x108] sm:$0xff]
      %v1985 = vld [vmem:[%s1950 + $0x110] sm:$0xff]
      %v1986 = vld [vmem:[%s1950 + $0x118] sm:$0xff]
      %v1987 = vld [vmem:[%s1950 + $0x120] sm:$0xff]
      %v1988 = vld [vmem:[%s1950 + $0x128] sm:$0xff]
      %v1989 = vld [vmem:[%s1950 + $0x130] sm:$0xff]
      %v1990 = vld [vmem:[%s1950 + $0x138] sm:$0xff]
      %v1991 = vld [vmem:[%s1950 + $0x140] sm:$0xff]
      %v1992 = vld [vmem:[%s1950 + $0x148] sm:$0xff]
      %v1993 = vld [vmem:[%s1950 + $0x150] sm:$0xff]
      %v1994 = vld [vmem:[%s1950 + $0x158] sm:$0xff]
      %v1995 = vld [vmem:[%s1950 + $0x160] sm:$0xff]
      %v1996 = vld [vmem:[%s1950 + $0x168] sm:$0xff]
      %v1997 = vld [vmem:[%s1950 + $0x170] sm:$0xff]
      %v1998 = vld [vmem:[%s1950 + $0x178] sm:$0xff]
      %v1999 = vld [vmem:[%s1950 + $0x180] sm:$0xff]
      %v2000 = vld [vmem:[%s1950 + $0x188] sm:$0xff]
      %v2001 = vld [vmem:[%s1950 + $0x190] sm:$0xff]
      %v2002 = vld [vmem:[%s1950 + $0x198] sm:$0xff]
      %v2003 = vld [vmem:[%s1950 + $0x1a0] sm:$0xff]
      %v2004 = vld [vmem:[%s1950 + $0x1a8] sm:$0xff]
      %v2005 = vld [vmem:[%s1950 + $0x1b0] sm:$0xff]
      %v2006 = vld [vmem:[%s1950 + $0x1b8] sm:$0xff]
      %v2007 = vld [vmem:[%s1950 + $0x1c0] sm:$0xff]
      %v2008 = vld [vmem:[%s1950 + $0x1c8] sm:$0xff]
      %v2009 = vld [vmem:[%s1950 + $0x1d0] sm:$0xff]
      %v2010 = vld [vmem:[%s1950 + $0x1d8] sm:$0xff]
      %v2011 = vld [vmem:[%s1950 + $0x1e0] sm:$0xff]
      %v2012 = vld [vmem:[%s1950 + $0x1e8] sm:$0xff]
      %v2013 = vld [vmem:[%s1950 + $0x1f0] sm:$0xff]
      %v2014 = vld [vmem:[%s1950 + $0x1f8] sm:$0xff]
      %v2015 = vld [vmem:[%s1950 + $0x200] sm:$0xff]
      %v2016 = vld [vmem:[%s1950 + $0x208] sm:$0xff]
      %v2017 = vld [vmem:[%s1950 + $0x210] sm:$0xff]
      %v2018 = vld [vmem:[%s1950 + $0x218] sm:$0xff]
      %v2019 = vld [vmem:[%s1950 + $0x220] sm:$0xff]
      %v2020 = vld [vmem:[%s1950 + $0x228] sm:$0xff]
      %v2021 = vld [vmem:[%s1950 + $0x230] sm:$0xff]
      %v2022 = vld [vmem:[%s1950 + $0x238] sm:$0xff]
      %v2023 = vld [vmem:[%s1950 + $0x240] sm:$0xff]
      %v2024 = vld [vmem:[%s1950 + $0x248] sm:$0xff]
      %v2025 = vld [vmem:[%s1950 + $0x250] sm:$0xff]
      %v2026 = vld [vmem:[%s1950 + $0x258] sm:$0xff]
      %v2027 = vld [vmem:[%s1950 + $0x260] sm:$0xff]
      %v2028 = vld [vmem:[%s1950 + $0x268] sm:$0xff]
      %v2029 = vld [vmem:[%s1950 + $0x270] sm:$0xff]
      %v2030 = vld [vmem:[%s1950 + $0x278] sm:$0xff]
      %s2031 = scalar_lea.vmem %s1, 64
      %v2032 = vld [vmem:[%s2031] sm:$0xff]
      %v2033 = vld [vmem:[%s2031 + $0x8] sm:$0xff]
      %v2034 = vld [vmem:[%s2031 + $0x10] sm:$0xff]
      %v2035 = vld [vmem:[%s2031 + $0x18] sm:$0xff]
      %v2036 = vld [vmem:[%s2031 + $0x20] sm:$0xff]
      %v2037 = vld [vmem:[%s2031 + $0x28] sm:$0xff]
      %v2038 = vld [vmem:[%s2031 + $0x30] sm:$0xff]
      %v2039 = vld [vmem:[%s2031 + $0x38] sm:$0xff]
      %v2041 = vsel %vm298, %v1951, 0
      %v2044 = vsel %vm298, %v1952, 0
      %v2047 = vsel %vm298, %v1953, 0
      %v2050 = vsel %vm298, %v1954, 0
      %v2053 = vsel %vm298, %v1955, 0
      %v2056 = vsel %vm298, %v1956, 0
      %v2059 = vsel %vm298, %v1957, 0
      %v2062 = vsel %vm298, %v1958, 0
      %v2065 = vsel %vm298, %v1959, 0
      %v2068 = vsel %vm298, %v1960, 0
      %v2071 = vsel %vm298, %v1961, 0
      %v2074 = vsel %vm298, %v1962, 0
      %v2077 = vsel %vm298, %v1963, 0
      %v2080 = vsel %vm298, %v1964, 0
      %v2083 = vsel %vm298, %v1965, 0
      %v2086 = vsel %vm298, %v1966, 0
      %v2089 = vsel %vm298, %v1967, 0
      %v2092 = vsel %vm298, %v1968, 0
      %v2095 = vsel %vm298, %v1969, 0
      %v2098 = vsel %vm298, %v1970, 0
      %v2101 = vsel %vm298, %v1971, 0
      %v2104 = vsel %vm298, %v1972, 0
      %v2107 = vsel %vm298, %v1973, 0
      %v2110 = vsel %vm298, %v1974, 0
      %v2113 = vsel %vm298, %v1975, 0
      %v2116 = vsel %vm298, %v1976, 0
      %v2119 = vsel %vm298, %v1977, 0
      %v2122 = vsel %vm298, %v1978, 0
      %v2125 = vsel %vm298, %v1979, 0
      %v2128 = vsel %vm298, %v1980, 0
      %v2131 = vsel %vm298, %v1981, 0
      %v2134 = vsel %vm298, %v1982, 0
      %v2137 = vsel %vm298, %v1983, 0
      %v2140 = vsel %vm298, %v1984, 0
      %v2143 = vsel %vm298, %v1985, 0
      %v2146 = vsel %vm298, %v1986, 0
      %v2149 = vsel %vm298, %v1987, 0
      %v2152 = vsel %vm298, %v1988, 0
      %v2155 = vsel %vm298, %v1989, 0
      %v2158 = vsel %vm298, %v1990, 0
      %v2161 = vsel %vm298, %v1991, 0
      %v2164 = vsel %vm298, %v1992, 0
      %v2167 = vsel %vm298, %v1993, 0
      %v2170 = vsel %vm298, %v1994, 0
      %v2173 = vsel %vm298, %v1995, 0
      %v2176 = vsel %vm298, %v1996, 0
      %v2179 = vsel %vm298, %v1997, 0
      %v2182 = vsel %vm298, %v1998, 0
      %v2185 = vsel %vm298, %v1999, 0
      %v2188 = vsel %vm298, %v2000, 0
      %v2191 = vsel %vm298, %v2001, 0
      %v2194 = vsel %vm298, %v2002, 0
      %v2197 = vsel %vm298, %v2003, 0
      %v2200 = vsel %vm298, %v2004, 0
      %v2203 = vsel %vm298, %v2005, 0
      %v2206 = vsel %vm298, %v2006, 0
      %v2209 = vsel %vm298, %v2007, 0
      %v2212 = vsel %vm298, %v2008, 0
      %v2215 = vsel %vm298, %v2009, 0
      %v2218 = vsel %vm298, %v2010, 0
      %v2221 = vsel %vm298, %v2011, 0
      %v2224 = vsel %vm298, %v2012, 0
      %v2227 = vsel %vm298, %v2013, 0
      %v2230 = vsel %vm298, %v2014, 0
      %v2233 = vsel %vm298, %v2015, 0
      %v2236 = vsel %vm298, %v2016, 0
      %v2239 = vsel %vm298, %v2017, 0
      %v2242 = vsel %vm298, %v2018, 0
      %v2245 = vsel %vm298, %v2019, 0
      %v2248 = vsel %vm298, %v2020, 0
      %v2251 = vsel %vm298, %v2021, 0
      %v2254 = vsel %vm298, %v2022, 0
      %v2257 = vsel %vm298, %v2023, 0
      %v2260 = vsel %vm298, %v2024, 0
      %v2263 = vsel %vm298, %v2025, 0
      %v2266 = vsel %vm298, %v2026, 0
      %v2269 = vsel %vm298, %v2027, 0
      %v2272 = vsel %vm298, %v2028, 0
      %v2275 = vsel %vm298, %v2029, 0
      %v2278 = vsel %vm298, %v2030, 0
      %2280 = vmatprep.subr.mxu0 0.0
      %2281 = vmatpush1.msra.mxu0 0.0
      %2282 = vmatprep.subr.mxu0 0.0
      %2283 = vmatpush1.msra.mxu0 0.0
      %2284 = vmatprep.subr.mxu0 0.0
      %2285 = vmatpush1.msra.mxu0 0.0
      %2286 = vmatprep.subr.mxu0 0.0
      %2287 = vmatpush1.msra.mxu0 0.0
      %2288 = vmatprep.subr.mxu0 0.0
      %2289 = vmatpush1.msra.mxu0 0.0
      %2290 = vmatprep.subr.mxu0 0.0
      %2291 = vmatpush1.msra.mxu0 0.0
      %2292 = vmatprep.subr.mxu0 0.0
      %2293 = vmatpush1.msra.mxu0 0.0
      %2294 = vmatprep.subr.mxu0 0.0
      %2295 = vmatpush1.msra.mxu0 0.0
      %2296 = vmatprep.subr.mxu0 0.0
      %2297 = vmatpush1.msra.mxu0 %v2039
      %2298 = vmatprep.subr.mxu0 0.0
      %2299 = vmatpush1.msra.mxu0 %v2038
      %2300 = vmatprep.subr.mxu0 0.0
      %2301 = vmatpush1.msra.mxu0 %v2037
      %2302 = vmatprep.subr.mxu0 0.0
      %2303 = vmatpush1.msra.mxu0 %v2036
      %2304 = vmatprep.subr.mxu0 0.0
      %2305 = vmatpush1.msra.mxu0 %v2035
      %2306 = vmatprep.subr.mxu0 0.0
      %2307 = vmatpush1.msra.mxu0 %v2034
      %2308 = vmatprep.subr.mxu0 0.0
      %2309 = vmatpush1.msra.mxu0 %v2033
      %2310 = vmatprep.subr.mxu0 0.0
      %2311 = vmatpush1.msra.mxu0 %v2032
      %2312 = vmatprep.subr.mxu0 0.0
      %2313 = vmatpush2.msra.mxu0 0.0
      %2314 = vmatprep.subr.mxu0 0.0
      %2315 = vmatpush2.msra.mxu0 0.0
      %2316 = vmatprep.subr.mxu0 0.0
      %2317 = vmatpush2.msra.mxu0 0.0
      %2318 = vmatprep.subr.mxu0 0.0
      %2319 = vmatpush2.msra.mxu0 0.0
      %2320 = vmatprep.subr.mxu0 0.0
      %2321 = vmatpush2.msra.mxu0 0.0
      %2322 = vmatprep.subr.mxu0 0.0
      %2323 = vmatpush2.msra.mxu0 0.0
      %2324 = vmatprep.subr.mxu0 0.0
      %2325 = vmatpush2.msra.mxu0 0.0
      %2326 = vmatprep.subr.mxu0 0.0
      %2327 = vmatpush2.msra.mxu0 0.0
      %2328 = vmatprep.subr.mxu0 0.0
      %2329 = vmatpush2.msra.mxu0 0.0
      %2330 = vmatprep.subr.mxu0 0.0
      %2331 = vmatpush2.msra.mxu0 0.0
      %2332 = vmatprep.subr.mxu0 0.0
      %2333 = vmatpush2.msra.mxu0 0.0
      %2334 = vmatprep.subr.mxu0 0.0
      %2335 = vmatpush2.msra.mxu0 0.0
      %2336 = vmatprep.subr.mxu0 0.0
      %2337 = vmatpush2.msra.mxu0 0.0
      %2338 = vmatprep.subr.mxu0 0.0
      %2339 = vmatpush2.msra.mxu0 0.0
      %2340 = vmatprep.subr.mxu0 0.0
      %2341 = vmatpush2.msra.mxu0 0.0
      %2342 = vmatprep.subr.mxu0 0.0
      %2343 = vmatpush2.msra.mxu0 0.0
      %2344 = vmatprep.mubr.f32.mxu0 0.0
      %2345 = vmatmul.mubr.f32.gmra.mxu0 %v2041
      %v2346 = vpop.f32.mrf.mxu0
      %v2347 = vadd.f32 0.0, %v2346
      %v2348 = vpop.f32.mrf.mxu0
      %2349 = vmatprep.mubr.f32.mxu0 0.0
      %2350 = vmatmul.mubr.f32.gmra.mxu0 %v2044
      %v2351 = vpop.f32.mrf.mxu0
      %v2352 = vadd.f32 0.0, %v2351
      %v2353 = vpop.f32.mrf.mxu0
      %2354 = vmatprep.mubr.f32.mxu0 0.0
      %2355 = vmatmul.mubr.f32.gmra.mxu0 %v2047
      %v2356 = vpop.f32.mrf.mxu0
      %v2357 = vadd.f32 0.0, %v2356
      %v2358 = vpop.f32.mrf.mxu0
      %2359 = vmatprep.mubr.f32.mxu0 0.0
      %2360 = vmatmul.mubr.f32.gmra.mxu0 %v2050
      %v2361 = vpop.f32.mrf.mxu0
      %v2362 = vadd.f32 0.0, %v2361
      %v2363 = vpop.f32.mrf.mxu0
      %2364 = vmatprep.mubr.f32.mxu0 0.0
      %2365 = vmatmul.mubr.f32.gmra.mxu0 %v2053
      %v2366 = vpop.f32.mrf.mxu0
      %v2367 = vadd.f32 0.0, %v2366
      %v2368 = vpop.f32.mrf.mxu0
      %2369 = vmatprep.mubr.f32.mxu0 0.0
      %2370 = vmatmul.mubr.f32.gmra.mxu0 %v2056
      %v2371 = vpop.f32.mrf.mxu0
      %v2372 = vadd.f32 0.0, %v2371
      %v2373 = vpop.f32.mrf.mxu0
      %2374 = vmatprep.mubr.f32.mxu0 0.0
      %2375 = vmatmul.mubr.f32.gmra.mxu0 %v2059
      %v2376 = vpop.f32.mrf.mxu0
      %v2377 = vadd.f32 0.0, %v2376
      %v2378 = vpop.f32.mrf.mxu0
      %2379 = vmatprep.mubr.f32.mxu0 0.0
      %2380 = vmatmul.mubr.f32.gmra.mxu0 %v2062
      %v2381 = vpop.f32.mrf.mxu0
      %v2382 = vadd.f32 0.0, %v2381
      %v2383 = vpop.f32.mrf.mxu0
      %2384 = vmatprep.mubr.f32.mxu0 0.0
      %2385 = vmatmul.mubr.f32.gmra.mxu0 %v2065
      %v2386 = vpop.f32.mrf.mxu0
      %v2387 = vadd.f32 0.0, %v2386
      %v2388 = vpop.f32.mrf.mxu0
      %2389 = vmatprep.mubr.f32.mxu0 0.0
      %2390 = vmatmul.mubr.f32.gmra.mxu0 %v2068
      %v2391 = vpop.f32.mrf.mxu0
      %v2392 = vadd.f32 0.0, %v2391
      %v2393 = vpop.f32.mrf.mxu0
      %2394 = vmatprep.mubr.f32.mxu0 0.0
      %2395 = vmatmul.mubr.f32.gmra.mxu0 %v2071
      %v2396 = vpop.f32.mrf.mxu0
      %v2397 = vadd.f32 0.0, %v2396
      %v2398 = vpop.f32.mrf.mxu0
      %2399 = vmatprep.mubr.f32.mxu0 0.0
      %2400 = vmatmul.mubr.f32.gmra.mxu0 %v2074
      %v2401 = vpop.f32.mrf.mxu0
      %v2402 = vadd.f32 0.0, %v2401
      %v2403 = vpop.f32.mrf.mxu0
      %2404 = vmatprep.mubr.f32.mxu0 0.0
      %2405 = vmatmul.mubr.f32.gmra.mxu0 %v2077
      %v2406 = vpop.f32.mrf.mxu0
      %v2407 = vadd.f32 0.0, %v2406
      %v2408 = vpop.f32.mrf.mxu0
      %2409 = vmatprep.mubr.f32.mxu0 0.0
      %2410 = vmatmul.mubr.f32.gmra.mxu0 %v2080
      %v2411 = vpop.f32.mrf.mxu0
      %v2412 = vadd.f32 0.0, %v2411
      %v2413 = vpop.f32.mrf.mxu0
      %2414 = vmatprep.mubr.f32.mxu0 0.0
      %2415 = vmatmul.mubr.f32.gmra.mxu0 %v2083
      %v2416 = vpop.f32.mrf.mxu0
      %v2417 = vadd.f32 0.0, %v2416
      %v2418 = vpop.f32.mrf.mxu0
      %2419 = vmatprep.mubr.f32.mxu0 0.0
      %2420 = vmatmul.mubr.f32.gmra.mxu0 %v2086
      %v2421 = vpop.f32.mrf.mxu0
      %v2422 = vadd.f32 0.0, %v2421
      %v2423 = vpop.f32.mrf.mxu0
      %2424 = vmatprep.mubr.f32.mxu0 0.0
      %2425 = vmatmul.mubr.f32.gmra.mxu0 %v2089
      %v2426 = vpop.f32.mrf.mxu0
      %v2427 = vadd.f32 0.0, %v2426
      %v2428 = vpop.f32.mrf.mxu0
      %2429 = vmatprep.mubr.f32.mxu0 0.0
      %2430 = vmatmul.mubr.f32.gmra.mxu0 %v2092
      %v2431 = vpop.f32.mrf.mxu0
      %v2432 = vadd.f32 0.0, %v2431
      %v2433 = vpop.f32.mrf.mxu0
      %2434 = vmatprep.mubr.f32.mxu0 0.0
      %2435 = vmatmul.mubr.f32.gmra.mxu0 %v2095
      %v2436 = vpop.f32.mrf.mxu0
      %v2437 = vadd.f32 0.0, %v2436
      %v2438 = vpop.f32.mrf.mxu0
      %2439 = vmatprep.mubr.f32.mxu0 0.0
      %2440 = vmatmul.mubr.f32.gmra.mxu0 %v2098
      %v2441 = vpop.f32.mrf.mxu0
      %v2442 = vadd.f32 0.0, %v2441
      %v2443 = vpop.f32.mrf.mxu0
      %2444 = vmatprep.mubr.f32.mxu0 0.0
      %2445 = vmatmul.mubr.f32.gmra.mxu0 %v2101
      %v2446 = vpop.f32.mrf.mxu0
      %v2447 = vadd.f32 0.0, %v2446
      %v2448 = vpop.f32.mrf.mxu0
      %2449 = vmatprep.mubr.f32.mxu0 0.0
      %2450 = vmatmul.mubr.f32.gmra.mxu0 %v2104
      %v2451 = vpop.f32.mrf.mxu0
      %v2452 = vadd.f32 0.0, %v2451
      %v2453 = vpop.f32.mrf.mxu0
      %2454 = vmatprep.mubr.f32.mxu0 0.0
      %2455 = vmatmul.mubr.f32.gmra.mxu0 %v2107
      %v2456 = vpop.f32.mrf.mxu0
      %v2457 = vadd.f32 0.0, %v2456
      %v2458 = vpop.f32.mrf.mxu0
      %2459 = vmatprep.mubr.f32.mxu0 0.0
      %2460 = vmatmul.mubr.f32.gmra.mxu0 %v2110
      %v2461 = vpop.f32.mrf.mxu0
      %v2462 = vadd.f32 0.0, %v2461
      %v2463 = vpop.f32.mrf.mxu0
      %2464 = vmatprep.mubr.f32.mxu0 0.0
      %2465 = vmatmul.mubr.f32.gmra.mxu0 %v2113
      %v2466 = vpop.f32.mrf.mxu0
      %v2467 = vadd.f32 0.0, %v2466
      %v2468 = vpop.f32.mrf.mxu0
      %2469 = vmatprep.mubr.f32.mxu0 0.0
      %2470 = vmatmul.mubr.f32.gmra.mxu0 %v2116
      %v2471 = vpop.f32.mrf.mxu0
      %v2472 = vadd.f32 0.0, %v2471
      %v2473 = vpop.f32.mrf.mxu0
      %2474 = vmatprep.mubr.f32.mxu0 0.0
      %2475 = vmatmul.mubr.f32.gmra.mxu0 %v2119
      %v2476 = vpop.f32.mrf.mxu0
      %v2477 = vadd.f32 0.0, %v2476
      %v2478 = vpop.f32.mrf.mxu0
      %2479 = vmatprep.mubr.f32.mxu0 0.0
      %2480 = vmatmul.mubr.f32.gmra.mxu0 %v2122
      %v2481 = vpop.f32.mrf.mxu0
      %v2482 = vadd.f32 0.0, %v2481
      %v2483 = vpop.f32.mrf.mxu0
      %2484 = vmatprep.mubr.f32.mxu0 0.0
      %2485 = vmatmul.mubr.f32.gmra.mxu0 %v2125
      %v2486 = vpop.f32.mrf.mxu0
      %v2487 = vadd.f32 0.0, %v2486
      %v2488 = vpop.f32.mrf.mxu0
      %2489 = vmatprep.mubr.f32.mxu0 0.0
      %2490 = vmatmul.mubr.f32.gmra.mxu0 %v2128
      %v2491 = vpop.f32.mrf.mxu0
      %v2492 = vadd.f32 0.0, %v2491
      %v2493 = vpop.f32.mrf.mxu0
      %2494 = vmatprep.mubr.f32.mxu0 0.0
      %2495 = vmatmul.mubr.f32.gmra.mxu0 %v2131
      %v2496 = vpop.f32.mrf.mxu0
      %v2497 = vadd.f32 0.0, %v2496
      %v2498 = vpop.f32.mrf.mxu0
      %2499 = vmatprep.mubr.f32.mxu0 0.0
      %2500 = vmatmul.mubr.f32.gmra.mxu0 %v2134
      %v2501 = vpop.f32.mrf.mxu0
      %v2502 = vadd.f32 0.0, %v2501
      %v2503 = vpop.f32.mrf.mxu0
      %2504 = vmatprep.mubr.f32.mxu0 0.0
      %2505 = vmatmul.mubr.f32.gmra.mxu0 %v2137
      %v2506 = vpop.f32.mrf.mxu0
      %v2507 = vadd.f32 0.0, %v2506
      %v2508 = vpop.f32.mrf.mxu0
      %2509 = vmatprep.mubr.f32.mxu0 0.0
      %2510 = vmatmul.mubr.f32.gmra.mxu0 %v2140
      %v2511 = vpop.f32.mrf.mxu0
      %v2512 = vadd.f32 0.0, %v2511
      %v2513 = vpop.f32.mrf.mxu0
      %2514 = vmatprep.mubr.f32.mxu0 0.0
      %2515 = vmatmul.mubr.f32.gmra.mxu0 %v2143
      %v2516 = vpop.f32.mrf.mxu0
      %v2517 = vadd.f32 0.0, %v2516
      %v2518 = vpop.f32.mrf.mxu0
      %2519 = vmatprep.mubr.f32.mxu0 0.0
      %2520 = vmatmul.mubr.f32.gmra.mxu0 %v2146
      %v2521 = vpop.f32.mrf.mxu0
      %v2522 = vadd.f32 0.0, %v2521
      %v2523 = vpop.f32.mrf.mxu0
      %2524 = vmatprep.mubr.f32.mxu0 0.0
      %2525 = vmatmul.mubr.f32.gmra.mxu0 %v2149
      %v2526 = vpop.f32.mrf.mxu0
      %v2527 = vadd.f32 0.0, %v2526
      %v2528 = vpop.f32.mrf.mxu0
      %2529 = vmatprep.mubr.f32.mxu0 0.0
      %2530 = vmatmul.mubr.f32.gmra.mxu0 %v2152
      %v2531 = vpop.f32.mrf.mxu0
      %v2532 = vadd.f32 0.0, %v2531
      %v2533 = vpop.f32.mrf.mxu0
      %2534 = vmatprep.mubr.f32.mxu0 0.0
      %2535 = vmatmul.mubr.f32.gmra.mxu0 %v2155
      %v2536 = vpop.f32.mrf.mxu0
      %v2537 = vadd.f32 0.0, %v2536
      %v2538 = vpop.f32.mrf.mxu0
      %2539 = vmatprep.mubr.f32.mxu0 0.0
      %2540 = vmatmul.mubr.f32.gmra.mxu0 %v2158
      %v2541 = vpop.f32.mrf.mxu0
      %v2542 = vadd.f32 0.0, %v2541
      %v2543 = vpop.f32.mrf.mxu0
      %2544 = vmatprep.mubr.f32.mxu0 0.0
      %2545 = vmatmul.mubr.f32.gmra.mxu0 %v2161
      %v2546 = vpop.f32.mrf.mxu0
      %v2547 = vadd.f32 0.0, %v2546
      %v2548 = vpop.f32.mrf.mxu0
      %2549 = vmatprep.mubr.f32.mxu0 0.0
      %2550 = vmatmul.mubr.f32.gmra.mxu0 %v2164
      %v2551 = vpop.f32.mrf.mxu0
      %v2552 = vadd.f32 0.0, %v2551
      %v2553 = vpop.f32.mrf.mxu0
      %2554 = vmatprep.mubr.f32.mxu0 0.0
      %2555 = vmatmul.mubr.f32.gmra.mxu0 %v2167
      %v2556 = vpop.f32.mrf.mxu0
      %v2557 = vadd.f32 0.0, %v2556
      %v2558 = vpop.f32.mrf.mxu0
      %2559 = vmatprep.mubr.f32.mxu0 0.0
      %2560 = vmatmul.mubr.f32.gmra.mxu0 %v2170
      %v2561 = vpop.f32.mrf.mxu0
      %v2562 = vadd.f32 0.0, %v2561
      %v2563 = vpop.f32.mrf.mxu0
      %2564 = vmatprep.mubr.f32.mxu0 0.0
      %2565 = vmatmul.mubr.f32.gmra.mxu0 %v2173
      %v2566 = vpop.f32.mrf.mxu0
      %v2567 = vadd.f32 0.0, %v2566
      %v2568 = vpop.f32.mrf.mxu0
      %2569 = vmatprep.mubr.f32.mxu0 0.0
      %2570 = vmatmul.mubr.f32.gmra.mxu0 %v2176
      %v2571 = vpop.f32.mrf.mxu0
      %v2572 = vadd.f32 0.0, %v2571
      %v2573 = vpop.f32.mrf.mxu0
      %2574 = vmatprep.mubr.f32.mxu0 0.0
      %2575 = vmatmul.mubr.f32.gmra.mxu0 %v2179
      %v2576 = vpop.f32.mrf.mxu0
      %v2577 = vadd.f32 0.0, %v2576
      %v2578 = vpop.f32.mrf.mxu0
      %2579 = vmatprep.mubr.f32.mxu0 0.0
      %2580 = vmatmul.mubr.f32.gmra.mxu0 %v2182
      %v2581 = vpop.f32.mrf.mxu0
      %v2582 = vadd.f32 0.0, %v2581
      %v2583 = vpop.f32.mrf.mxu0
      %2584 = vmatprep.mubr.f32.mxu0 0.0
      %2585 = vmatmul.mubr.f32.gmra.mxu0 %v2185
      %v2586 = vpop.f32.mrf.mxu0
      %v2587 = vadd.f32 0.0, %v2586
      %v2588 = vpop.f32.mrf.mxu0
      %2589 = vmatprep.mubr.f32.mxu0 0.0
      %2590 = vmatmul.mubr.f32.gmra.mxu0 %v2188
      %v2591 = vpop.f32.mrf.mxu0
      %v2592 = vadd.f32 0.0, %v2591
      %v2593 = vpop.f32.mrf.mxu0
      %2594 = vmatprep.mubr.f32.mxu0 0.0
      %2595 = vmatmul.mubr.f32.gmra.mxu0 %v2191
      %v2596 = vpop.f32.mrf.mxu0
      %v2597 = vadd.f32 0.0, %v2596
      %v2598 = vpop.f32.mrf.mxu0
      %2599 = vmatprep.mubr.f32.mxu0 0.0
      %2600 = vmatmul.mubr.f32.gmra.mxu0 %v2194
      %v2601 = vpop.f32.mrf.mxu0
      %v2602 = vadd.f32 0.0, %v2601
      %v2603 = vpop.f32.mrf.mxu0
      %2604 = vmatprep.mubr.f32.mxu0 0.0
      %2605 = vmatmul.mubr.f32.gmra.mxu0 %v2197
      %v2606 = vpop.f32.mrf.mxu0
      %v2607 = vadd.f32 0.0, %v2606
      %v2608 = vpop.f32.mrf.mxu0
      %2609 = vmatprep.mubr.f32.mxu0 0.0
      %2610 = vmatmul.mubr.f32.gmra.mxu0 %v2200
      %v2611 = vpop.f32.mrf.mxu0
      %v2612 = vadd.f32 0.0, %v2611
      %v2613 = vpop.f32.mrf.mxu0
      %2614 = vmatprep.mubr.f32.mxu0 0.0
      %2615 = vmatmul.mubr.f32.gmra.mxu0 %v2203
      %v2616 = vpop.f32.mrf.mxu0
      %v2617 = vadd.f32 0.0, %v2616
      %v2618 = vpop.f32.mrf.mxu0
      %2619 = vmatprep.mubr.f32.mxu0 0.0
      %2620 = vmatmul.mubr.f32.gmra.mxu0 %v2206
      %v2621 = vpop.f32.mrf.mxu0
      %v2622 = vadd.f32 0.0, %v2621
      %v2623 = vpop.f32.mrf.mxu0
      %2624 = vmatprep.mubr.f32.mxu0 0.0
      %2625 = vmatmul.mubr.f32.gmra.mxu0 %v2209
      %v2626 = vpop.f32.mrf.mxu0
      %v2627 = vadd.f32 0.0, %v2626
      %v2628 = vpop.f32.mrf.mxu0
      %2629 = vmatprep.mubr.f32.mxu0 0.0
      %2630 = vmatmul.mubr.f32.gmra.mxu0 %v2212
      %v2631 = vpop.f32.mrf.mxu0
      %v2632 = vadd.f32 0.0, %v2631
      %v2633 = vpop.f32.mrf.mxu0
      %2634 = vmatprep.mubr.f32.mxu0 0.0
      %2635 = vmatmul.mubr.f32.gmra.mxu0 %v2215
      %v2636 = vpop.f32.mrf.mxu0
      %v2637 = vadd.f32 0.0, %v2636
      %v2638 = vpop.f32.mrf.mxu0
      %2639 = vmatprep.mubr.f32.mxu0 0.0
      %2640 = vmatmul.mubr.f32.gmra.mxu0 %v2218
      %v2641 = vpop.f32.mrf.mxu0
      %v2642 = vadd.f32 0.0, %v2641
      %v2643 = vpop.f32.mrf.mxu0
      %2644 = vmatprep.mubr.f32.mxu0 0.0
      %2645 = vmatmul.mubr.f32.gmra.mxu0 %v2221
      %v2646 = vpop.f32.mrf.mxu0
      %v2647 = vadd.f32 0.0, %v2646
      %v2648 = vpop.f32.mrf.mxu0
      %2649 = vmatprep.mubr.f32.mxu0 0.0
      %2650 = vmatmul.mubr.f32.gmra.mxu0 %v2224
      %v2651 = vpop.f32.mrf.mxu0
      %v2652 = vadd.f32 0.0, %v2651
      %v2653 = vpop.f32.mrf.mxu0
      %2654 = vmatprep.mubr.f32.mxu0 0.0
      %2655 = vmatmul.mubr.f32.gmra.mxu0 %v2227
      %v2656 = vpop.f32.mrf.mxu0
      %v2657 = vadd.f32 0.0, %v2656
      %v2658 = vpop.f32.mrf.mxu0
      %2659 = vmatprep.mubr.f32.mxu0 0.0
      %2660 = vmatmul.mubr.f32.gmra.mxu0 %v2230
      %v2661 = vpop.f32.mrf.mxu0
      %v2662 = vadd.f32 0.0, %v2661
      %v2663 = vpop.f32.mrf.mxu0
      %2664 = vmatprep.mubr.f32.mxu0 0.0
      %2665 = vmatmul.mubr.f32.gmra.mxu0 %v2233
      %v2666 = vpop.f32.mrf.mxu0
      %v2667 = vadd.f32 0.0, %v2666
      %v2668 = vpop.f32.mrf.mxu0
      %2669 = vmatprep.mubr.f32.mxu0 0.0
      %2670 = vmatmul.mubr.f32.gmra.mxu0 %v2236
      %v2671 = vpop.f32.mrf.mxu0
      %v2672 = vadd.f32 0.0, %v2671
      %v2673 = vpop.f32.mrf.mxu0
      %2674 = vmatprep.mubr.f32.mxu0 0.0
      %2675 = vmatmul.mubr.f32.gmra.mxu0 %v2239
      %v2676 = vpop.f32.mrf.mxu0
      %v2677 = vadd.f32 0.0, %v2676
      %v2678 = vpop.f32.mrf.mxu0
      %2679 = vmatprep.mubr.f32.mxu0 0.0
      %2680 = vmatmul.mubr.f32.gmra.mxu0 %v2242
      %v2681 = vpop.f32.mrf.mxu0
      %v2682 = vadd.f32 0.0, %v2681
      %v2683 = vpop.f32.mrf.mxu0
      %2684 = vmatprep.mubr.f32.mxu0 0.0
      %2685 = vmatmul.mubr.f32.gmra.mxu0 %v2245
      %v2686 = vpop.f32.mrf.mxu0
      %v2687 = vadd.f32 0.0, %v2686
      %v2688 = vpop.f32.mrf.mxu0
      %2689 = vmatprep.mubr.f32.mxu0 0.0
      %2690 = vmatmul.mubr.f32.gmra.mxu0 %v2248
      %v2691 = vpop.f32.mrf.mxu0
      %v2692 = vadd.f32 0.0, %v2691
      %v2693 = vpop.f32.mrf.mxu0
      %2694 = vmatprep.mubr.f32.mxu0 0.0
      %2695 = vmatmul.mubr.f32.gmra.mxu0 %v2251
      %v2696 = vpop.f32.mrf.mxu0
      %v2697 = vadd.f32 0.0, %v2696
      %v2698 = vpop.f32.mrf.mxu0
      %2699 = vmatprep.mubr.f32.mxu0 0.0
      %2700 = vmatmul.mubr.f32.gmra.mxu0 %v2254
      %v2701 = vpop.f32.mrf.mxu0
      %v2702 = vadd.f32 0.0, %v2701
      %v2703 = vpop.f32.mrf.mxu0
      %2704 = vmatprep.mubr.f32.mxu0 0.0
      %2705 = vmatmul.mubr.f32.gmra.mxu0 %v2257
      %v2706 = vpop.f32.mrf.mxu0
      %v2707 = vadd.f32 0.0, %v2706
      %v2708 = vpop.f32.mrf.mxu0
      %2709 = vmatprep.mubr.f32.mxu0 0.0
      %2710 = vmatmul.mubr.f32.gmra.mxu0 %v2260
      %v2711 = vpop.f32.mrf.mxu0
      %v2712 = vadd.f32 0.0, %v2711
      %v2713 = vpop.f32.mrf.mxu0
      %2714 = vmatprep.mubr.f32.mxu0 0.0
      %2715 = vmatmul.mubr.f32.gmra.mxu0 %v2263
      %v2716 = vpop.f32.mrf.mxu0
      %v2717 = vadd.f32 0.0, %v2716
      %v2718 = vpop.f32.mrf.mxu0
      %2719 = vmatprep.mubr.f32.mxu0 0.0
      %2720 = vmatmul.mubr.f32.gmra.mxu0 %v2266
      %v2721 = vpop.f32.mrf.mxu0
      %v2722 = vadd.f32 0.0, %v2721
      %v2723 = vpop.f32.mrf.mxu0
      %2724 = vmatprep.mubr.f32.mxu0 0.0
      %2725 = vmatmul.mubr.f32.gmra.mxu0 %v2269
      %v2726 = vpop.f32.mrf.mxu0
      %v2727 = vadd.f32 0.0, %v2726
      %v2728 = vpop.f32.mrf.mxu0
      %2729 = vmatprep.mubr.f32.mxu0 0.0
      %2730 = vmatmul.mubr.f32.gmra.mxu0 %v2272
      %v2731 = vpop.f32.mrf.mxu0
      %v2732 = vadd.f32 0.0, %v2731
      %v2733 = vpop.f32.mrf.mxu0
      %2734 = vmatprep.mubr.f32.mxu0 0.0
      %2735 = vmatmul.mubr.f32.gmra.mxu0 %v2275
      %v2736 = vpop.f32.mrf.mxu0
      %v2737 = vadd.f32 0.0, %v2736
      %v2738 = vpop.f32.mrf.mxu0
      %2739 = vmatprep.mubr.f32.mxu0 0.0
      %2740 = vmatmul.mubr.f32.gmra.mxu0 %v2278
      %v2741 = vpop.f32.mrf.mxu0
      %v2742 = vadd.f32 0.0, %v2741
      %v2743 = vpop.f32.mrf.mxu0
      %2744 = vdwg.mxu0
      %v2745 = vadd.f32 %v1886, %v2347
      %v2746 = vadd.f32 %v1887, %v2352
      %v2747 = vadd.f32 %v1888, %v2357
      %v2748 = vadd.f32 %v1889, %v2362
      %v2749 = vadd.f32 %v1890, %v2372
      %v2750 = vadd.f32 %v1891, %v2377
      %v2751 = vadd.f32 %v1892, %v2382
      %v2752 = vadd.f32 %v1893, %v2387
      %v2753 = vadd.f32 %v1894, %v2397
      %v2754 = vadd.f32 %v1895, %v2402
      %v2755 = vadd.f32 %v1896, %v2407
      %v2756 = vadd.f32 %v1897, %v2412
      %v2757 = vadd.f32 %v1898, %v2422
      %v2758 = vadd.f32 %v1899, %v2427
      %v2759 = vadd.f32 %v1900, %v2432
      %v2760 = vadd.f32 %v1901, %v2437
      %v2761 = vadd.f32 %v1902, %v2447
      %v2762 = vadd.f32 %v1903, %v2452
      %v2763 = vadd.f32 %v1904, %v2457
      %v2764 = vadd.f32 %v1905, %v2462
      %v2765 = vadd.f32 %v1906, %v2472
      %v2766 = vadd.f32 %v1907, %v2477
      %v2767 = vadd.f32 %v1908, %v2482
      %v2768 = vadd.f32 %v1909, %v2487
      %v2769 = vadd.f32 %v1910, %v2497
      %v2770 = vadd.f32 %v1911, %v2502
      %v2771 = vadd.f32 %v1912, %v2507
      %v2772 = vadd.f32 %v1913, %v2512
      %v2773 = vadd.f32 %v1914, %v2522
      %v2774 = vadd.f32 %v1915, %v2527
      %v2775 = vadd.f32 %v1916, %v2532
      %v2776 = vadd.f32 %v1917, %v2537
      %v2777 = vadd.f32 %v1918, %v2547
      %v2778 = vadd.f32 %v1919, %v2552
      %v2779 = vadd.f32 %v1920, %v2557
      %v2780 = vadd.f32 %v1921, %v2562
      %v2781 = vadd.f32 %v1922, %v2572
      %v2782 = vadd.f32 %v1923, %v2577
      %v2783 = vadd.f32 %v1924, %v2582
      %v2784 = vadd.f32 %v1925, %v2587
      %v2785 = vadd.f32 %v1926, %v2597
      %v2786 = vadd.f32 %v1927, %v2602
      %v2787 = vadd.f32 %v1928, %v2607
      %v2788 = vadd.f32 %v1929, %v2612
      %v2789 = vadd.f32 %v1930, %v2622
      %v2790 = vadd.f32 %v1931, %v2627
      %v2791 = vadd.f32 %v1932, %v2632
      %v2792 = vadd.f32 %v1933, %v2637
      %v2793 = vadd.f32 %v1934, %v2647
      %v2794 = vadd.f32 %v1935, %v2652
      %v2795 = vadd.f32 %v1936, %v2657
      %v2796 = vadd.f32 %v1937, %v2662
      %v2797 = vadd.f32 %v1938, %v2672
      %v2798 = vadd.f32 %v1939, %v2677
      %v2799 = vadd.f32 %v1940, %v2682
      %v2800 = vadd.f32 %v1941, %v2687
      %v2801 = vadd.f32 %v1942, %v2697
      %v2802 = vadd.f32 %v1943, %v2702
      %v2803 = vadd.f32 %v1944, %v2707
      %v2804 = vadd.f32 %v1945, %v2712
      %v2805 = vadd.f32 %v1946, %v2722
      %v2806 = vadd.f32 %v1947, %v2727
      %v2807 = vadd.f32 %v1948, %v2732
      %v2808 = vadd.f32 %v1949, %v2737
      %v2889 = vrot.slane %v2347, 1
      %v2890 = vrot.slane %v2352, 1
      %v2891 = vsel %vm1148, %v2889, %v2890
      %v2892 = vrot.slane %v2357, 1
      %v2893 = vsel %vm1148, %v2890, %v2892
      %v2894 = vrot.slane %v2362, 1
      %v2895 = vsel %vm1148, %v2892, %v2894
      %v2896 = vrot.slane %v2367, 1
      %v2897 = vsel %vm1148, %v2894, %v2896
      %v2898 = vrot.slane %v2372, 1
      %v2899 = vrot.slane %v2377, 1
      %v2900 = vsel %vm1148, %v2898, %v2899
      %v2901 = vrot.slane %v2382, 1
      %v2902 = vsel %vm1148, %v2899, %v2901
      %v2903 = vrot.slane %v2387, 1
      %v2904 = vsel %vm1148, %v2901, %v2903
      %v2905 = vrot.slane %v2392, 1
      %v2906 = vsel %vm1148, %v2903, %v2905
      %v2907 = vrot.slane %v2397, 1
      %v2908 = vrot.slane %v2402, 1
      %v2909 = vsel %vm1148, %v2907, %v2908
      %v2910 = vrot.slane %v2407, 1
      %v2911 = vsel %vm1148, %v2908, %v2910
      %v2912 = vrot.slane %v2412, 1
      %v2913 = vsel %vm1148, %v2910, %v2912
      %v2914 = vrot.slane %v2417, 1
      %v2915 = vsel %vm1148, %v2912, %v2914
      %v2916 = vrot.slane %v2422, 1
      %v2917 = vrot.slane %v2427, 1
      %v2918 = vsel %vm1148, %v2916, %v2917
      %v2919 = vrot.slane %v2432, 1
      %v2920 = vsel %vm1148, %v2917, %v2919
      %v2921 = vrot.slane %v2437, 1
      %v2922 = vsel %vm1148, %v2919, %v2921
      %v2923 = vrot.slane %v2442, 1
      %v2924 = vsel %vm1148, %v2921, %v2923
      %v2925 = vrot.slane %v2447, 1
      %v2926 = vrot.slane %v2452, 1
      %v2927 = vsel %vm1148, %v2925, %v2926
      %v2928 = vrot.slane %v2457, 1
      %v2929 = vsel %vm1148, %v2926, %v2928
      %v2930 = vrot.slane %v2462, 1
      %v2931 = vsel %vm1148, %v2928, %v2930
      %v2932 = vrot.slane %v2467, 1
      %v2933 = vsel %vm1148, %v2930, %v2932
      %v2934 = vrot.slane %v2472, 1
      %v2935 = vrot.slane %v2477, 1
      %v2936 = vsel %vm1148, %v2934, %v2935
      %v2937 = vrot.slane %v2482, 1
      %v2938 = vsel %vm1148, %v2935, %v2937
      %v2939 = vrot.slane %v2487, 1
      %v2940 = vsel %vm1148, %v2937, %v2939
      %v2941 = vrot.slane %v2492, 1
      %v2942 = vsel %vm1148, %v2939, %v2941
      %v2943 = vrot.slane %v2497, 1
      %v2944 = vrot.slane %v2502, 1
      %v2945 = vsel %vm1148, %v2943, %v2944
      %v2946 = vrot.slane %v2507, 1
      %v2947 = vsel %vm1148, %v2944, %v2946
      %v2948 = vrot.slane %v2512, 1
      %v2949 = vsel %vm1148, %v2946, %v2948
      %v2950 = vrot.slane %v2517, 1
      %v2951 = vsel %vm1148, %v2948, %v2950
      %v2952 = vrot.slane %v2522, 1
      %v2953 = vrot.slane %v2527, 1
      %v2954 = vsel %vm1148, %v2952, %v2953
      %v2955 = vrot.slane %v2532, 1
      %v2956 = vsel %vm1148, %v2953, %v2955
      %v2957 = vrot.slane %v2537, 1
      %v2958 = vsel %vm1148, %v2955, %v2957
      %v2959 = vrot.slane %v2542, 1
      %v2960 = vsel %vm1148, %v2957, %v2959
      %v2961 = vrot.slane %v2547, 1
      %v2962 = vrot.slane %v2552, 1
      %v2963 = vsel %vm1148, %v2961, %v2962
      %v2964 = vrot.slane %v2557, 1
      %v2965 = vsel %vm1148, %v2962, %v2964
      %v2966 = vrot.slane %v2562, 1
      %v2967 = vsel %vm1148, %v2964, %v2966
      %v2968 = vrot.slane %v2567, 1
      %v2969 = vsel %vm1148, %v2966, %v2968
      %v2970 = vrot.slane %v2572, 1
      %v2971 = vrot.slane %v2577, 1
      %v2972 = vsel %vm1148, %v2970, %v2971
      %v2973 = vrot.slane %v2582, 1
      %v2974 = vsel %vm1148, %v2971, %v2973
      %v2975 = vrot.slane %v2587, 1
      %v2976 = vsel %vm1148, %v2973, %v2975
      %v2977 = vrot.slane %v2592, 1
      %v2978 = vsel %vm1148, %v2975, %v2977
      %v2979 = vrot.slane %v2597, 1
      %v2980 = vrot.slane %v2602, 1
      %v2981 = vsel %vm1148, %v2979, %v2980
      %v2982 = vrot.slane %v2607, 1
      %v2983 = vsel %vm1148, %v2980, %v2982
      %v2984 = vrot.slane %v2612, 1
      %v2985 = vsel %vm1148, %v2982, %v2984
      %v2986 = vrot.slane %v2617, 1
      %v2987 = vsel %vm1148, %v2984, %v2986
      %v2988 = vrot.slane %v2622, 1
      %v2989 = vrot.slane %v2627, 1
      %v2990 = vsel %vm1148, %v2988, %v2989
      %v2991 = vrot.slane %v2632, 1
      %v2992 = vsel %vm1148, %v2989, %v2991
      %v2993 = vrot.slane %v2637, 1
      %v2994 = vsel %vm1148, %v2991, %v2993
      %v2995 = vrot.slane %v2642, 1
      %v2996 = vsel %vm1148, %v2993, %v2995
      %v2997 = vrot.slane %v2647, 1
      %v2998 = vrot.slane %v2652, 1
      %v2999 = vsel %vm1148, %v2997, %v2998
      %v3000 = vrot.slane %v2657, 1
      %v3001 = vsel %vm1148, %v2998, %v3000
      %v3002 = vrot.slane %v2662, 1
      %v3003 = vsel %vm1148, %v3000, %v3002
      %v3004 = vrot.slane %v2667, 1
      %v3005 = vsel %vm1148, %v3002, %v3004
      %v3006 = vrot.slane %v2672, 1
      %v3007 = vrot.slane %v2677, 1
      %v3008 = vsel %vm1148, %v3006, %v3007
      %v3009 = vrot.slane %v2682, 1
      %v3010 = vsel %vm1148, %v3007, %v3009
      %v3011 = vrot.slane %v2687, 1
      %v3012 = vsel %vm1148, %v3009, %v3011
      %v3013 = vrot.slane %v2692, 1
      %v3014 = vsel %vm1148, %v3011, %v3013
      %v3015 = vrot.slane %v2697, 1
      %v3016 = vrot.slane %v2702, 1
      %v3017 = vsel %vm1148, %v3015, %v3016
      %v3018 = vrot.slane %v2707, 1
      %v3019 = vsel %vm1148, %v3016, %v3018
      %v3020 = vrot.slane %v2712, 1
      %v3021 = vsel %vm1148, %v3018, %v3020
      %v3022 = vrot.slane %v2717, 1
      %v3023 = vsel %vm1148, %v3020, %v3022
      %v3024 = vrot.slane %v2722, 1
      %v3025 = vrot.slane %v2727, 1
      %v3026 = vsel %vm1148, %v3024, %v3025
      %v3027 = vrot.slane %v2732, 1
      %v3028 = vsel %vm1148, %v3025, %v3027
      %v3029 = vrot.slane %v2737, 1
      %v3030 = vsel %vm1148, %v3027, %v3029
      %v3031 = vrot.slane %v2742, 1
      %v3032 = vsel %vm1148, %v3029, %v3031
      %3033 = vrot.lane.b32.xlu0 %v2891, 125
      %v3034 = vpop.permute.xlu0 %3033
      %3035 = vrot.lane.b32.xlu0 %v2893, 125
      %v3036 = vpop.permute.xlu0 %3035
      %3037 = vrot.lane.b32.xlu0 %v2895, 125
      %v3038 = vpop.permute.xlu0 %3037
      %3039 = vrot.lane.b32.xlu0 %v2897, 125
      %v3040 = vpop.permute.xlu0 %3039
      %3041 = vrot.lane.b32.xlu0 %v2900, 125
      %v3042 = vpop.permute.xlu0 %3041
      %3043 = vrot.lane.b32.xlu0 %v2902, 125
      %v3044 = vpop.permute.xlu0 %3043
      %3045 = vrot.lane.b32.xlu0 %v2904, 125
      %v3046 = vpop.permute.xlu0 %3045
      %3047 = vrot.lane.b32.xlu0 %v2906, 125
      %v3048 = vpop.permute.xlu0 %3047
      %3049 = vrot.lane.b32.xlu0 %v2909, 125
      %v3050 = vpop.permute.xlu0 %3049
      %3051 = vrot.lane.b32.xlu0 %v2911, 125
      %v3052 = vpop.permute.xlu0 %3051
      %3053 = vrot.lane.b32.xlu0 %v2913, 125
      %v3054 = vpop.permute.xlu0 %3053
      %3055 = vrot.lane.b32.xlu0 %v2915, 125
      %v3056 = vpop.permute.xlu0 %3055
      %3057 = vrot.lane.b32.xlu0 %v2918, 125
      %v3058 = vpop.permute.xlu0 %3057
      %3059 = vrot.lane.b32.xlu0 %v2920, 125
      %v3060 = vpop.permute.xlu0 %3059
      %3061 = vrot.lane.b32.xlu0 %v2922, 125
      %v3062 = vpop.permute.xlu0 %3061
      %3063 = vrot.lane.b32.xlu0 %v2924, 125
      %v3064 = vpop.permute.xlu0 %3063
      %3065 = vrot.lane.b32.xlu0 %v2927, 125
      %v3066 = vpop.permute.xlu0 %3065
      %3067 = vrot.lane.b32.xlu0 %v2929, 125
      %v3068 = vpop.permute.xlu0 %3067
      %3069 = vrot.lane.b32.xlu0 %v2931, 125
      %v3070 = vpop.permute.xlu0 %3069
      %3071 = vrot.lane.b32.xlu0 %v2933, 125
      %v3072 = vpop.permute.xlu0 %3071
      %3073 = vrot.lane.b32.xlu0 %v2936, 125
      %v3074 = vpop.permute.xlu0 %3073
      %3075 = vrot.lane.b32.xlu0 %v2938, 125
      %v3076 = vpop.permute.xlu0 %3075
      %3077 = vrot.lane.b32.xlu0 %v2940, 125
      %v3078 = vpop.permute.xlu0 %3077
      %3079 = vrot.lane.b32.xlu0 %v2942, 125
      %v3080 = vpop.permute.xlu0 %3079
      %3081 = vrot.lane.b32.xlu0 %v2945, 125
      %v3082 = vpop.permute.xlu0 %3081
      %3083 = vrot.lane.b32.xlu0 %v2947, 125
      %v3084 = vpop.permute.xlu0 %3083
      %3085 = vrot.lane.b32.xlu0 %v2949, 125
      %v3086 = vpop.permute.xlu0 %3085
      %3087 = vrot.lane.b32.xlu0 %v2951, 125
      %v3088 = vpop.permute.xlu0 %3087
      %3089 = vrot.lane.b32.xlu0 %v2954, 125
      %v3090 = vpop.permute.xlu0 %3089
      %3091 = vrot.lane.b32.xlu0 %v2956, 125
      %v3092 = vpop.permute.xlu0 %3091
      %3093 = vrot.lane.b32.xlu0 %v2958, 125
      %v3094 = vpop.permute.xlu0 %3093
      %3095 = vrot.lane.b32.xlu0 %v2960, 125
      %v3096 = vpop.permute.xlu0 %3095
      %3097 = vrot.lane.b32.xlu0 %v2963, 125
      %v3098 = vpop.permute.xlu0 %3097
      %3099 = vrot.lane.b32.xlu0 %v2965, 125
      %v3100 = vpop.permute.xlu0 %3099
      %3101 = vrot.lane.b32.xlu0 %v2967, 125
      %v3102 = vpop.permute.xlu0 %3101
      %3103 = vrot.lane.b32.xlu0 %v2969, 125
      %v3104 = vpop.permute.xlu0 %3103
      %3105 = vrot.lane.b32.xlu0 %v2972, 125
      %v3106 = vpop.permute.xlu0 %3105
      %3107 = vrot.lane.b32.xlu0 %v2974, 125
      %v3108 = vpop.permute.xlu0 %3107
      %3109 = vrot.lane.b32.xlu0 %v2976, 125
      %v3110 = vpop.permute.xlu0 %3109
      %3111 = vrot.lane.b32.xlu0 %v2978, 125
      %v3112 = vpop.permute.xlu0 %3111
      %3113 = vrot.lane.b32.xlu0 %v2981, 125
      %v3114 = vpop.permute.xlu0 %3113
      %3115 = vrot.lane.b32.xlu0 %v2983, 125
      %v3116 = vpop.permute.xlu0 %3115
      %3117 = vrot.lane.b32.xlu0 %v2985, 125
      %v3118 = vpop.permute.xlu0 %3117
      %3119 = vrot.lane.b32.xlu0 %v2987, 125
      %v3120 = vpop.permute.xlu0 %3119
      %3121 = vrot.lane.b32.xlu0 %v2990, 125
      %v3122 = vpop.permute.xlu0 %3121
      %3123 = vrot.lane.b32.xlu0 %v2992, 125
      %v3124 = vpop.permute.xlu0 %3123
      %3125 = vrot.lane.b32.xlu0 %v2994, 125
      %v3126 = vpop.permute.xlu0 %3125
      %3127 = vrot.lane.b32.xlu0 %v2996, 125
      %v3128 = vpop.permute.xlu0 %3127
      %3129 = vrot.lane.b32.xlu0 %v2999, 125
      %v3130 = vpop.permute.xlu0 %3129
      %3131 = vrot.lane.b32.xlu0 %v3001, 125
      %v3132 = vpop.permute.xlu0 %3131
      %3133 = vrot.lane.b32.xlu0 %v3003, 125
      %v3134 = vpop.permute.xlu0 %3133
      %3135 = vrot.lane.b32.xlu0 %v3005, 125
      %v3136 = vpop.permute.xlu0 %3135
      %3137 = vrot.lane.b32.xlu0 %v3008, 125
      %v3138 = vpop.permute.xlu0 %3137
      %3139 = vrot.lane.b32.xlu0 %v3010, 125
      %v3140 = vpop.permute.xlu0 %3139
      %3141 = vrot.lane.b32.xlu0 %v3012, 125
      %v3142 = vpop.permute.xlu0 %3141
      %3143 = vrot.lane.b32.xlu0 %v3014, 125
      %v3144 = vpop.permute.xlu0 %3143
      %3145 = vrot.lane.b32.xlu0 %v3017, 125
      %v3146 = vpop.permute.xlu0 %3145
      %3147 = vrot.lane.b32.xlu0 %v3019, 125
      %v3148 = vpop.permute.xlu0 %3147
      %3149 = vrot.lane.b32.xlu0 %v3021, 125
      %v3150 = vpop.permute.xlu0 %3149
      %3151 = vrot.lane.b32.xlu0 %v3023, 125
      %v3152 = vpop.permute.xlu0 %3151
      %3153 = vrot.lane.b32.xlu0 %v3026, 125
      %v3154 = vpop.permute.xlu0 %3153
      %3155 = vrot.lane.b32.xlu0 %v3028, 125
      %v3156 = vpop.permute.xlu0 %3155
      %3157 = vrot.lane.b32.xlu0 %v3030, 125
      %v3158 = vpop.permute.xlu0 %3157
      %3159 = vrot.lane.b32.xlu0 %v3032, 125
      %v3160 = vpop.permute.xlu0 %3159
      %v3225 = vadd.f32 %v2745, %v3034
      %v3226 = vadd.f32 %v2746, %v3036
      %v3227 = vadd.f32 %v2747, %v3038
      %v3228 = vadd.f32 %v2748, %v3040
      %v3229 = vadd.f32 %v2749, %v3042
      %v3230 = vadd.f32 %v2750, %v3044
      %v3231 = vadd.f32 %v2751, %v3046
      %v3232 = vadd.f32 %v2752, %v3048
      %v3233 = vadd.f32 %v2753, %v3050
      %v3234 = vadd.f32 %v2754, %v3052
      %v3235 = vadd.f32 %v2755, %v3054
      %v3236 = vadd.f32 %v2756, %v3056
      %v3237 = vadd.f32 %v2757, %v3058
      %v3238 = vadd.f32 %v2758, %v3060
      %v3239 = vadd.f32 %v2759, %v3062
      %v3240 = vadd.f32 %v2760, %v3064
      %v3241 = vadd.f32 %v2761, %v3066
      %v3242 = vadd.f32 %v2762, %v3068
      %v3243 = vadd.f32 %v2763, %v3070
      %v3244 = vadd.f32 %v2764, %v3072
      %v3245 = vadd.f32 %v2765, %v3074
      %v3246 = vadd.f32 %v2766, %v3076
      %v3247 = vadd.f32 %v2767, %v3078
      %v3248 = vadd.f32 %v2768, %v3080
      %v3249 = vadd.f32 %v2769, %v3082
      %v3250 = vadd.f32 %v2770, %v3084
      %v3251 = vadd.f32 %v2771, %v3086
      %v3252 = vadd.f32 %v2772, %v3088
      %v3253 = vadd.f32 %v2773, %v3090
      %v3254 = vadd.f32 %v2774, %v3092
      %v3255 = vadd.f32 %v2775, %v3094
      %v3256 = vadd.f32 %v2776, %v3096
      %v3257 = vadd.f32 %v2777, %v3098
      %v3258 = vadd.f32 %v2778, %v3100
      %v3259 = vadd.f32 %v2779, %v3102
      %v3260 = vadd.f32 %v2780, %v3104
      %v3261 = vadd.f32 %v2781, %v3106
      %v3262 = vadd.f32 %v2782, %v3108
      %v3263 = vadd.f32 %v2783, %v3110
      %v3264 = vadd.f32 %v2784, %v3112
      %v3265 = vadd.f32 %v2785, %v3114
      %v3266 = vadd.f32 %v2786, %v3116
      %v3267 = vadd.f32 %v2787, %v3118
      %v3268 = vadd.f32 %v2788, %v3120
      %v3269 = vadd.f32 %v2789, %v3122
      %v3270 = vadd.f32 %v2790, %v3124
      %v3271 = vadd.f32 %v2791, %v3126
      %v3272 = vadd.f32 %v2792, %v3128
      %v3273 = vadd.f32 %v2793, %v3130
      %v3274 = vadd.f32 %v2794, %v3132
      %v3275 = vadd.f32 %v2795, %v3134
      %v3276 = vadd.f32 %v2796, %v3136
      %v3277 = vadd.f32 %v2797, %v3138
      %v3278 = vadd.f32 %v2798, %v3140
      %v3279 = vadd.f32 %v2799, %v3142
      %v3280 = vadd.f32 %v2800, %v3144
      %v3281 = vadd.f32 %v2801, %v3146
      %v3282 = vadd.f32 %v2802, %v3148
      %v3283 = vadd.f32 %v2803, %v3150
      %v3284 = vadd.f32 %v2804, %v3152
      %v3285 = vadd.f32 %v2805, %v3154
      %v3286 = vadd.f32 %v2806, %v3156
      %v3287 = vadd.f32 %v2807, %v3158
      %v3288 = vadd.f32 %v2808, %v3160
      %v3289 = vrot.slane %v2347, 2
      %v3290 = vrot.slane %v2352, 2
      %v3291 = vsel %vm1549, %v3289, %v3290
      %v3292 = vrot.slane %v2357, 2
      %v3293 = vsel %vm1549, %v3290, %v3292
      %v3294 = vrot.slane %v2362, 2
      %v3295 = vsel %vm1549, %v3292, %v3294
      %v3296 = vrot.slane %v2367, 2
      %v3297 = vsel %vm1549, %v3294, %v3296
      %v3298 = vrot.slane %v2372, 2
      %v3299 = vrot.slane %v2377, 2
      %v3300 = vsel %vm1549, %v3298, %v3299
      %v3301 = vrot.slane %v2382, 2
      %v3302 = vsel %vm1549, %v3299, %v3301
      %v3303 = vrot.slane %v2387, 2
      %v3304 = vsel %vm1549, %v3301, %v3303
      %v3305 = vrot.slane %v2392, 2
      %v3306 = vsel %vm1549, %v3303, %v3305
      %v3307 = vrot.slane %v2397, 2
      %v3308 = vrot.slane %v2402, 2
      %v3309 = vsel %vm1549, %v3307, %v3308
      %v3310 = vrot.slane %v2407, 2
      %v3311 = vsel %vm1549, %v3308, %v3310
      %v3312 = vrot.slane %v2412, 2
      %v3313 = vsel %vm1549, %v3310, %v3312
      %v3314 = vrot.slane %v2417, 2
      %v3315 = vsel %vm1549, %v3312, %v3314
      %v3316 = vrot.slane %v2422, 2
      %v3317 = vrot.slane %v2427, 2
      %v3318 = vsel %vm1549, %v3316, %v3317
      %v3319 = vrot.slane %v2432, 2
      %v3320 = vsel %vm1549, %v3317, %v3319
      %v3321 = vrot.slane %v2437, 2
      %v3322 = vsel %vm1549, %v3319, %v3321
      %v3323 = vrot.slane %v2442, 2
      %v3324 = vsel %vm1549, %v3321, %v3323
      %v3325 = vrot.slane %v2447, 2
      %v3326 = vrot.slane %v2452, 2
      %v3327 = vsel %vm1549, %v3325, %v3326
      %v3328 = vrot.slane %v2457, 2
      %v3329 = vsel %vm1549, %v3326, %v3328
      %v3330 = vrot.slane %v2462, 2
      %v3331 = vsel %vm1549, %v3328, %v3330
      %v3332 = vrot.slane %v2467, 2
      %v3333 = vsel %vm1549, %v3330, %v3332
      %v3334 = vrot.slane %v2472, 2
      %v3335 = vrot.slane %v2477, 2
      %v3336 = vsel %vm1549, %v3334, %v3335
      %v3337 = vrot.slane %v2482, 2
      %v3338 = vsel %vm1549, %v3335, %v3337
      %v3339 = vrot.slane %v2487, 2
      %v3340 = vsel %vm1549, %v3337, %v3339
      %v3341 = vrot.slane %v2492, 2
      %v3342 = vsel %vm1549, %v3339, %v3341
      %v3343 = vrot.slane %v2497, 2
      %v3344 = vrot.slane %v2502, 2
      %v3345 = vsel %vm1549, %v3343, %v3344
      %v3346 = vrot.slane %v2507, 2
      %v3347 = vsel %vm1549, %v3344, %v3346
      %v3348 = vrot.slane %v2512, 2
      %v3349 = vsel %vm1549, %v3346, %v3348
      %v3350 = vrot.slane %v2517, 2
      %v3351 = vsel %vm1549, %v3348, %v3350
      %v3352 = vrot.slane %v2522, 2
      %v3353 = vrot.slane %v2527, 2
      %v3354 = vsel %vm1549, %v3352, %v3353
      %v3355 = vrot.slane %v2532, 2
      %v3356 = vsel %vm1549, %v3353, %v3355
      %v3357 = vrot.slane %v2537, 2
      %v3358 = vsel %vm1549, %v3355, %v3357
      %v3359 = vrot.slane %v2542, 2
      %v3360 = vsel %vm1549, %v3357, %v3359
      %v3361 = vrot.slane %v2547, 2
      %v3362 = vrot.slane %v2552, 2
      %v3363 = vsel %vm1549, %v3361, %v3362
      %v3364 = vrot.slane %v2557, 2
      %v3365 = vsel %vm1549, %v3362, %v3364
      %v3366 = vrot.slane %v2562, 2
      %v3367 = vsel %vm1549, %v3364, %v3366
      %v3368 = vrot.slane %v2567, 2
      %v3369 = vsel %vm1549, %v3366, %v3368
      %v3370 = vrot.slane %v2572, 2
      %v3371 = vrot.slane %v2577, 2
      %v3372 = vsel %vm1549, %v3370, %v3371
      %v3373 = vrot.slane %v2582, 2
      %v3374 = vsel %vm1549, %v3371, %v3373
      %v3375 = vrot.slane %v2587, 2
      %v3376 = vsel %vm1549, %v3373, %v3375
      %v3377 = vrot.slane %v2592, 2
      %v3378 = vsel %vm1549, %v3375, %v3377
      %v3379 = vrot.slane %v2597, 2
      %v3380 = vrot.slane %v2602, 2
      %v3381 = vsel %vm1549, %v3379, %v3380
      %v3382 = vrot.slane %v2607, 2
      %v3383 = vsel %vm1549, %v3380, %v3382
      %v3384 = vrot.slane %v2612, 2
      %v3385 = vsel %vm1549, %v3382, %v3384
      %v3386 = vrot.slane %v2617, 2
      %v3387 = vsel %vm1549, %v3384, %v3386
      %v3388 = vrot.slane %v2622, 2
      %v3389 = vrot.slane %v2627, 2
      %v3390 = vsel %vm1549, %v3388, %v3389
      %v3391 = vrot.slane %v2632, 2
      %v3392 = vsel %vm1549, %v3389, %v3391
      %v3393 = vrot.slane %v2637, 2
      %v3394 = vsel %vm1549, %v3391, %v3393
      %v3395 = vrot.slane %v2642, 2
      %v3396 = vsel %vm1549, %v3393, %v3395
      %v3397 = vrot.slane %v2647, 2
      %v3398 = vrot.slane %v2652, 2
      %v3399 = vsel %vm1549, %v3397, %v3398
      %v3400 = vrot.slane %v2657, 2
      %v3401 = vsel %vm1549, %v3398, %v3400
      %v3402 = vrot.slane %v2662, 2
      %v3403 = vsel %vm1549, %v3400, %v3402
      %v3404 = vrot.slane %v2667, 2
      %v3405 = vsel %vm1549, %v3402, %v3404
      %v3406 = vrot.slane %v2672, 2
      %v3407 = vrot.slane %v2677, 2
      %v3408 = vsel %vm1549, %v3406, %v3407
      %v3409 = vrot.slane %v2682, 2
      %v3410 = vsel %vm1549, %v3407, %v3409
      %v3411 = vrot.slane %v2687, 2
      %v3412 = vsel %vm1549, %v3409, %v3411
      %v3413 = vrot.slane %v2692, 2
      %v3414 = vsel %vm1549, %v3411, %v3413
      %v3415 = vrot.slane %v2697, 2
      %v3416 = vrot.slane %v2702, 2
      %v3417 = vsel %vm1549, %v3415, %v3416
      %v3418 = vrot.slane %v2707, 2
      %v3419 = vsel %vm1549, %v3416, %v3418
      %v3420 = vrot.slane %v2712, 2
      %v3421 = vsel %vm1549, %v3418, %v3420
      %v3422 = vrot.slane %v2717, 2
      %v3423 = vsel %vm1549, %v3420, %v3422
      %v3424 = vrot.slane %v2722, 2
      %v3425 = vrot.slane %v2727, 2
      %v3426 = vsel %vm1549, %v3424, %v3425
      %v3427 = vrot.slane %v2732, 2
      %v3428 = vsel %vm1549, %v3425, %v3427
      %v3429 = vrot.slane %v2737, 2
      %v3430 = vsel %vm1549, %v3427, %v3429
      %v3431 = vrot.slane %v2742, 2
      %v3432 = vsel %vm1549, %v3429, %v3431
      %3433 = vrot.lane.b32.xlu0 %v3291, 122
      %v3434 = vpop.permute.xlu0 %3433
      %3435 = vrot.lane.b32.xlu0 %v3293, 122
      %v3436 = vpop.permute.xlu0 %3435
      %3437 = vrot.lane.b32.xlu0 %v3295, 122
      %v3438 = vpop.permute.xlu0 %3437
      %3439 = vrot.lane.b32.xlu0 %v3297, 122
      %v3440 = vpop.permute.xlu0 %3439
      %3441 = vrot.lane.b32.xlu0 %v3300, 122
      %v3442 = vpop.permute.xlu0 %3441
      %3443 = vrot.lane.b32.xlu0 %v3302, 122
      %v3444 = vpop.permute.xlu0 %3443
      %3445 = vrot.lane.b32.xlu0 %v3304, 122
      %v3446 = vpop.permute.xlu0 %3445
      %3447 = vrot.lane.b32.xlu0 %v3306, 122
      %v3448 = vpop.permute.xlu0 %3447
      %3449 = vrot.lane.b32.xlu0 %v3309, 122
      %v3450 = vpop.permute.xlu0 %3449
      %3451 = vrot.lane.b32.xlu0 %v3311, 122
      %v3452 = vpop.permute.xlu0 %3451
      %3453 = vrot.lane.b32.xlu0 %v3313, 122
      %v3454 = vpop.permute.xlu0 %3453
      %3455 = vrot.lane.b32.xlu0 %v3315, 122
      %v3456 = vpop.permute.xlu0 %3455
      %3457 = vrot.lane.b32.xlu0 %v3318, 122
      %v3458 = vpop.permute.xlu0 %3457
      %3459 = vrot.lane.b32.xlu0 %v3320, 122
      %v3460 = vpop.permute.xlu0 %3459
      %3461 = vrot.lane.b32.xlu0 %v3322, 122
      %v3462 = vpop.permute.xlu0 %3461
      %3463 = vrot.lane.b32.xlu0 %v3324, 122
      %v3464 = vpop.permute.xlu0 %3463
      %3465 = vrot.lane.b32.xlu0 %v3327, 122
      %v3466 = vpop.permute.xlu0 %3465
      %3467 = vrot.lane.b32.xlu0 %v3329, 122
      %v3468 = vpop.permute.xlu0 %3467
      %3469 = vrot.lane.b32.xlu0 %v3331, 122
      %v3470 = vpop.permute.xlu0 %3469
      %3471 = vrot.lane.b32.xlu0 %v3333, 122
      %v3472 = vpop.permute.xlu0 %3471
      %3473 = vrot.lane.b32.xlu0 %v3336, 122
      %v3474 = vpop.permute.xlu0 %3473
      %3475 = vrot.lane.b32.xlu0 %v3338, 122
      %v3476 = vpop.permute.xlu0 %3475
      %3477 = vrot.lane.b32.xlu0 %v3340, 122
      %v3478 = vpop.permute.xlu0 %3477
      %3479 = vrot.lane.b32.xlu0 %v3342, 122
      %v3480 = vpop.permute.xlu0 %3479
      %3481 = vrot.lane.b32.xlu0 %v3345, 122
      %v3482 = vpop.permute.xlu0 %3481
      %3483 = vrot.lane.b32.xlu0 %v3347, 122
      %v3484 = vpop.permute.xlu0 %3483
      %3485 = vrot.lane.b32.xlu0 %v3349, 122
      %v3486 = vpop.permute.xlu0 %3485
      %3487 = vrot.lane.b32.xlu0 %v3351, 122
      %v3488 = vpop.permute.xlu0 %3487
      %3489 = vrot.lane.b32.xlu0 %v3354, 122
      %v3490 = vpop.permute.xlu0 %3489
      %3491 = vrot.lane.b32.xlu0 %v3356, 122
      %v3492 = vpop.permute.xlu0 %3491
      %3493 = vrot.lane.b32.xlu0 %v3358, 122
      %v3494 = vpop.permute.xlu0 %3493
      %3495 = vrot.lane.b32.xlu0 %v3360, 122
      %v3496 = vpop.permute.xlu0 %3495
      %3497 = vrot.lane.b32.xlu0 %v3363, 122
      %v3498 = vpop.permute.xlu0 %3497
      %3499 = vrot.lane.b32.xlu0 %v3365, 122
      %v3500 = vpop.permute.xlu0 %3499
      %3501 = vrot.lane.b32.xlu0 %v3367, 122
      %v3502 = vpop.permute.xlu0 %3501
      %3503 = vrot.lane.b32.xlu0 %v3369, 122
      %v3504 = vpop.permute.xlu0 %3503
      %3505 = vrot.lane.b32.xlu0 %v3372, 122
      %v3506 = vpop.permute.xlu0 %3505
      %3507 = vrot.lane.b32.xlu0 %v3374, 122
      %v3508 = vpop.permute.xlu0 %3507
      %3509 = vrot.lane.b32.xlu0 %v3376, 122
      %v3510 = vpop.permute.xlu0 %3509
      %3511 = vrot.lane.b32.xlu0 %v3378, 122
      %v3512 = vpop.permute.xlu0 %3511
      %3513 = vrot.lane.b32.xlu0 %v3381, 122
      %v3514 = vpop.permute.xlu0 %3513
      %3515 = vrot.lane.b32.xlu0 %v3383, 122
      %v3516 = vpop.permute.xlu0 %3515
      %3517 = vrot.lane.b32.xlu0 %v3385, 122
      %v3518 = vpop.permute.xlu0 %3517
      %3519 = vrot.lane.b32.xlu0 %v3387, 122
      %v3520 = vpop.permute.xlu0 %3519
      %3521 = vrot.lane.b32.xlu0 %v3390, 122
      %v3522 = vpop.permute.xlu0 %3521
      %3523 = vrot.lane.b32.xlu0 %v3392, 122
      %v3524 = vpop.permute.xlu0 %3523
      %3525 = vrot.lane.b32.xlu0 %v3394, 122
      %v3526 = vpop.permute.xlu0 %3525
      %3527 = vrot.lane.b32.xlu0 %v3396, 122
      %v3528 = vpop.permute.xlu0 %3527
      %3529 = vrot.lane.b32.xlu0 %v3399, 122
      %v3530 = vpop.permute.xlu0 %3529
      %3531 = vrot.lane.b32.xlu0 %v3401, 122
      %v3532 = vpop.permute.xlu0 %3531
      %3533 = vrot.lane.b32.xlu0 %v3403, 122
      %v3534 = vpop.permute.xlu0 %3533
      %3535 = vrot.lane.b32.xlu0 %v3405, 122
      %v3536 = vpop.permute.xlu0 %3535
      %3537 = vrot.lane.b32.xlu0 %v3408, 122
      %v3538 = vpop.permute.xlu0 %3537
      %3539 = vrot.lane.b32.xlu0 %v3410, 122
      %v3540 = vpop.permute.xlu0 %3539
      %3541 = vrot.lane.b32.xlu0 %v3412, 122
      %v3542 = vpop.permute.xlu0 %3541
      %3543 = vrot.lane.b32.xlu0 %v3414, 122
      %v3544 = vpop.permute.xlu0 %3543
      %3545 = vrot.lane.b32.xlu0 %v3417, 122
      %v3546 = vpop.permute.xlu0 %3545
      %3547 = vrot.lane.b32.xlu0 %v3419, 122
      %v3548 = vpop.permute.xlu0 %3547
      %3549 = vrot.lane.b32.xlu0 %v3421, 122
      %v3550 = vpop.permute.xlu0 %3549
      %3551 = vrot.lane.b32.xlu0 %v3423, 122
      %v3552 = vpop.permute.xlu0 %3551
      %3553 = vrot.lane.b32.xlu0 %v3426, 122
      %v3554 = vpop.permute.xlu0 %3553
      %3555 = vrot.lane.b32.xlu0 %v3428, 122
      %v3556 = vpop.permute.xlu0 %3555
      %3557 = vrot.lane.b32.xlu0 %v3430, 122
      %v3558 = vpop.permute.xlu0 %3557
      %3559 = vrot.lane.b32.xlu0 %v3432, 122
      %v3560 = vpop.permute.xlu0 %3559
      %v3625 = vadd.f32 %v3225, %v3434
      %v3626 = vadd.f32 %v3226, %v3436
      %v3627 = vadd.f32 %v3227, %v3438
      %v3628 = vadd.f32 %v3228, %v3440
      %v3629 = vadd.f32 %v3229, %v3442
      %v3630 = vadd.f32 %v3230, %v3444
      %v3631 = vadd.f32 %v3231, %v3446
      %v3632 = vadd.f32 %v3232, %v3448
      %v3633 = vadd.f32 %v3233, %v3450
      %v3634 = vadd.f32 %v3234, %v3452
      %v3635 = vadd.f32 %v3235, %v3454
      %v3636 = vadd.f32 %v3236, %v3456
      %v3637 = vadd.f32 %v3237, %v3458
      %v3638 = vadd.f32 %v3238, %v3460
      %v3639 = vadd.f32 %v3239, %v3462
      %v3640 = vadd.f32 %v3240, %v3464
      %v3641 = vadd.f32 %v3241, %v3466
      %v3642 = vadd.f32 %v3242, %v3468
      %v3643 = vadd.f32 %v3243, %v3470
      %v3644 = vadd.f32 %v3244, %v3472
      %v3645 = vadd.f32 %v3245, %v3474
      %v3646 = vadd.f32 %v3246, %v3476
      %v3647 = vadd.f32 %v3247, %v3478
      %v3648 = vadd.f32 %v3248, %v3480
      %v3649 = vadd.f32 %v3249, %v3482
      %v3650 = vadd.f32 %v3250, %v3484
      %v3651 = vadd.f32 %v3251, %v3486
      %v3652 = vadd.f32 %v3252, %v3488
      %v3653 = vadd.f32 %v3253, %v3490
      %v3654 = vadd.f32 %v3254, %v3492
      %v3655 = vadd.f32 %v3255, %v3494
      %v3656 = vadd.f32 %v3256, %v3496
      %v3657 = vadd.f32 %v3257, %v3498
      %v3658 = vadd.f32 %v3258, %v3500
      %v3659 = vadd.f32 %v3259, %v3502
      %v3660 = vadd.f32 %v3260, %v3504
      %v3661 = vadd.f32 %v3261, %v3506
      %v3662 = vadd.f32 %v3262, %v3508
      %v3663 = vadd.f32 %v3263, %v3510
      %v3664 = vadd.f32 %v3264, %v3512
      %v3665 = vadd.f32 %v3265, %v3514
      %v3666 = vadd.f32 %v3266, %v3516
      %v3667 = vadd.f32 %v3267, %v3518
      %v3668 = vadd.f32 %v3268, %v3520
      %v3669 = vadd.f32 %v3269, %v3522
      %v3670 = vadd.f32 %v3270, %v3524
      %v3671 = vadd.f32 %v3271, %v3526
      %v3672 = vadd.f32 %v3272, %v3528
      %v3673 = vadd.f32 %v3273, %v3530
      %v3674 = vadd.f32 %v3274, %v3532
      %v3675 = vadd.f32 %v3275, %v3534
      %v3676 = vadd.f32 %v3276, %v3536
      %v3677 = vadd.f32 %v3277, %v3538
      %v3678 = vadd.f32 %v3278, %v3540
      %v3679 = vadd.f32 %v3279, %v3542
      %v3680 = vadd.f32 %v3280, %v3544
      %v3681 = vadd.f32 %v3281, %v3546
      %v3682 = vadd.f32 %v3282, %v3548
      %v3683 = vadd.f32 %v3283, %v3550
      %v3684 = vadd.f32 %v3284, %v3552
      %v3685 = vadd.f32 %v3285, %v3554
      %v3686 = vadd.f32 %v3286, %v3556
      %v3687 = vadd.f32 %v3287, %v3558
      %v3688 = vadd.f32 %v3288, %v3560
      %s3689 = scalar_lea.vmem %s198, 80
      %v3690 = vld [vmem:[%s3689] sm:$0xff]
      %v3691 = vld [vmem:[%s3689 + $0x8] sm:$0xff]
      %v3692 = vld [vmem:[%s3689 + $0x10] sm:$0xff]
      %v3693 = vld [vmem:[%s3689 + $0x18] sm:$0xff]
      %v3694 = vld [vmem:[%s3689 + $0x20] sm:$0xff]
      %v3695 = vld [vmem:[%s3689 + $0x28] sm:$0xff]
      %v3696 = vld [vmem:[%s3689 + $0x30] sm:$0xff]
      %v3697 = vld [vmem:[%s3689 + $0x38] sm:$0xff]
      %v3698 = vld [vmem:[%s3689 + $0x40] sm:$0xff]
      %v3699 = vld [vmem:[%s3689 + $0x48] sm:$0xff]
      %v3700 = vld [vmem:[%s3689 + $0x50] sm:$0xff]
      %v3701 = vld [vmem:[%s3689 + $0x58] sm:$0xff]
      %v3702 = vld [vmem:[%s3689 + $0x60] sm:$0xff]
      %v3703 = vld [vmem:[%s3689 + $0x68] sm:$0xff]
      %v3704 = vld [vmem:[%s3689 + $0x70] sm:$0xff]
      %v3705 = vld [vmem:[%s3689 + $0x78] sm:$0xff]
      %v3706 = vld [vmem:[%s3689 + $0x80] sm:$0xff]
      %v3707 = vld [vmem:[%s3689 + $0x88] sm:$0xff]
      %v3708 = vld [vmem:[%s3689 + $0x90] sm:$0xff]
      %v3709 = vld [vmem:[%s3689 + $0x98] sm:$0xff]
      %v3710 = vld [vmem:[%s3689 + $0xa0] sm:$0xff]
      %v3711 = vld [vmem:[%s3689 + $0xa8] sm:$0xff]
      %v3712 = vld [vmem:[%s3689 + $0xb0] sm:$0xff]
      %v3713 = vld [vmem:[%s3689 + $0xb8] sm:$0xff]
      %v3714 = vld [vmem:[%s3689 + $0xc0] sm:$0xff]
      %v3715 = vld [vmem:[%s3689 + $0xc8] sm:$0xff]
      %v3716 = vld [vmem:[%s3689 + $0xd0] sm:$0xff]
      %v3717 = vld [vmem:[%s3689 + $0xd8] sm:$0xff]
      %v3718 = vld [vmem:[%s3689 + $0xe0] sm:$0xff]
      %v3719 = vld [vmem:[%s3689 + $0xe8] sm:$0xff]
      %v3720 = vld [vmem:[%s3689 + $0xf0] sm:$0xff]
      %v3721 = vld [vmem:[%s3689 + $0xf8] sm:$0xff]
      %v3722 = vld [vmem:[%s3689 + $0x100] sm:$0xff]
      %v3723 = vld [vmem:[%s3689 + $0x108] sm:$0xff]
      %v3724 = vld [vmem:[%s3689 + $0x110] sm:$0xff]
      %v3725 = vld [vmem:[%s3689 + $0x118] sm:$0xff]
      %v3726 = vld [vmem:[%s3689 + $0x120] sm:$0xff]
      %v3727 = vld [vmem:[%s3689 + $0x128] sm:$0xff]
      %v3728 = vld [vmem:[%s3689 + $0x130] sm:$0xff]
      %v3729 = vld [vmem:[%s3689 + $0x138] sm:$0xff]
      %v3730 = vld [vmem:[%s3689 + $0x140] sm:$0xff]
      %v3731 = vld [vmem:[%s3689 + $0x148] sm:$0xff]
      %v3732 = vld [vmem:[%s3689 + $0x150] sm:$0xff]
      %v3733 = vld [vmem:[%s3689 + $0x158] sm:$0xff]
      %v3734 = vld [vmem:[%s3689 + $0x160] sm:$0xff]
      %v3735 = vld [vmem:[%s3689 + $0x168] sm:$0xff]
      %v3736 = vld [vmem:[%s3689 + $0x170] sm:$0xff]
      %v3737 = vld [vmem:[%s3689 + $0x178] sm:$0xff]
      %v3738 = vld [vmem:[%s3689 + $0x180] sm:$0xff]
      %v3739 = vld [vmem:[%s3689 + $0x188] sm:$0xff]
      %v3740 = vld [vmem:[%s3689 + $0x190] sm:$0xff]
      %v3741 = vld [vmem:[%s3689 + $0x198] sm:$0xff]
      %v3742 = vld [vmem:[%s3689 + $0x1a0] sm:$0xff]
      %v3743 = vld [vmem:[%s3689 + $0x1a8] sm:$0xff]
      %v3744 = vld [vmem:[%s3689 + $0x1b0] sm:$0xff]
      %v3745 = vld [vmem:[%s3689 + $0x1b8] sm:$0xff]
      %v3746 = vld [vmem:[%s3689 + $0x1c0] sm:$0xff]
      %v3747 = vld [vmem:[%s3689 + $0x1c8] sm:$0xff]
      %v3748 = vld [vmem:[%s3689 + $0x1d0] sm:$0xff]
      %v3749 = vld [vmem:[%s3689 + $0x1d8] sm:$0xff]
      %v3750 = vld [vmem:[%s3689 + $0x1e0] sm:$0xff]
      %v3751 = vld [vmem:[%s3689 + $0x1e8] sm:$0xff]
      %v3752 = vld [vmem:[%s3689 + $0x1f0] sm:$0xff]
      %v3753 = vld [vmem:[%s3689 + $0x1f8] sm:$0xff]
      %v3754 = vld [vmem:[%s3689 + $0x200] sm:$0xff]
      %v3755 = vld [vmem:[%s3689 + $0x208] sm:$0xff]
      %v3756 = vld [vmem:[%s3689 + $0x210] sm:$0xff]
      %v3757 = vld [vmem:[%s3689 + $0x218] sm:$0xff]
      %v3758 = vld [vmem:[%s3689 + $0x220] sm:$0xff]
      %v3759 = vld [vmem:[%s3689 + $0x228] sm:$0xff]
      %v3760 = vld [vmem:[%s3689 + $0x230] sm:$0xff]
      %v3761 = vld [vmem:[%s3689 + $0x238] sm:$0xff]
      %v3762 = vld [vmem:[%s3689 + $0x240] sm:$0xff]
      %v3763 = vld [vmem:[%s3689 + $0x248] sm:$0xff]
      %v3764 = vld [vmem:[%s3689 + $0x250] sm:$0xff]
      %v3765 = vld [vmem:[%s3689 + $0x258] sm:$0xff]
      %v3766 = vld [vmem:[%s3689 + $0x260] sm:$0xff]
      %v3767 = vld [vmem:[%s3689 + $0x268] sm:$0xff]
      %v3768 = vld [vmem:[%s3689 + $0x270] sm:$0xff]
      %v3769 = vld [vmem:[%s3689 + $0x278] sm:$0xff]
      %s3770 = scalar_lea.vmem %s1, 128
      %v3771 = vld [vmem:[%s3770] sm:$0xff]
      %v3772 = vld [vmem:[%s3770 + $0x8] sm:$0xff]
      %v3773 = vld [vmem:[%s3770 + $0x10] sm:$0xff]
      %v3774 = vld [vmem:[%s3770 + $0x18] sm:$0xff]
      %v3775 = vld [vmem:[%s3770 + $0x20] sm:$0xff]
      %v3776 = vld [vmem:[%s3770 + $0x28] sm:$0xff]
      %v3777 = vld [vmem:[%s3770 + $0x30] sm:$0xff]
      %v3778 = vld [vmem:[%s3770 + $0x38] sm:$0xff]
      %v3780 = vsel %vm298, %v3690, 0
      %v3783 = vsel %vm298, %v3691, 0
      %v3786 = vsel %vm298, %v3692, 0
      %v3789 = vsel %vm298, %v3693, 0
      %v3792 = vsel %vm298, %v3694, 0
      %v3795 = vsel %vm298, %v3695, 0
      %v3798 = vsel %vm298, %v3696, 0
      %v3801 = vsel %vm298, %v3697, 0
      %v3804 = vsel %vm298, %v3698, 0
      %v3807 = vsel %vm298, %v3699, 0
      %v3810 = vsel %vm298, %v3700, 0
      %v3813 = vsel %vm298, %v3701, 0
      %v3816 = vsel %vm298, %v3702, 0
      %v3819 = vsel %vm298, %v3703, 0
      %v3822 = vsel %vm298, %v3704, 0
      %v3825 = vsel %vm298, %v3705, 0
      %v3828 = vsel %vm298, %v3706, 0
      %v3831 = vsel %vm298, %v3707, 0
      %v3834 = vsel %vm298, %v3708, 0
      %v3837 = vsel %vm298, %v3709, 0
      %v3840 = vsel %vm298, %v3710, 0
      %v3843 = vsel %vm298, %v3711, 0
      %v3846 = vsel %vm298, %v3712, 0
      %v3849 = vsel %vm298, %v3713, 0
      %v3852 = vsel %vm298, %v3714, 0
      %v3855 = vsel %vm298, %v3715, 0
      %v3858 = vsel %vm298, %v3716, 0
      %v3861 = vsel %vm298, %v3717, 0
      %v3864 = vsel %vm298, %v3718, 0
      %v3867 = vsel %vm298, %v3719, 0
      %v3870 = vsel %vm298, %v3720, 0
      %v3873 = vsel %vm298, %v3721, 0
      %v3876 = vsel %vm298, %v3722, 0
      %v3879 = vsel %vm298, %v3723, 0
      %v3882 = vsel %vm298, %v3724, 0
      %v3885 = vsel %vm298, %v3725, 0
      %v3888 = vsel %vm298, %v3726, 0
      %v3891 = vsel %vm298, %v3727, 0
      %v3894 = vsel %vm298, %v3728, 0
      %v3897 = vsel %vm298, %v3729, 0
      %v3900 = vsel %vm298, %v3730, 0
      %v3903 = vsel %vm298, %v3731, 0
      %v3906 = vsel %vm298, %v3732, 0
      %v3909 = vsel %vm298, %v3733, 0
      %v3912 = vsel %vm298, %v3734, 0
      %v3915 = vsel %vm298, %v3735, 0
      %v3918 = vsel %vm298, %v3736, 0
      %v3921 = vsel %vm298, %v3737, 0
      %v3924 = vsel %vm298, %v3738, 0
      %v3927 = vsel %vm298, %v3739, 0
      %v3930 = vsel %vm298, %v3740, 0
      %v3933 = vsel %vm298, %v3741, 0
      %v3936 = vsel %vm298, %v3742, 0
      %v3939 = vsel %vm298, %v3743, 0
      %v3942 = vsel %vm298, %v3744, 0
      %v3945 = vsel %vm298, %v3745, 0
      %v3948 = vsel %vm298, %v3746, 0
      %v3951 = vsel %vm298, %v3747, 0
      %v3954 = vsel %vm298, %v3748, 0
      %v3957 = vsel %vm298, %v3749, 0
      %v3960 = vsel %vm298, %v3750, 0
      %v3963 = vsel %vm298, %v3751, 0
      %v3966 = vsel %vm298, %v3752, 0
      %v3969 = vsel %vm298, %v3753, 0
      %v3972 = vsel %vm298, %v3754, 0
      %v3975 = vsel %vm298, %v3755, 0
      %v3978 = vsel %vm298, %v3756, 0
      %v3981 = vsel %vm298, %v3757, 0
      %v3984 = vsel %vm298, %v3758, 0
      %v3987 = vsel %vm298, %v3759, 0
      %v3990 = vsel %vm298, %v3760, 0
      %v3993 = vsel %vm298, %v3761, 0
      %v3996 = vsel %vm298, %v3762, 0
      %v3999 = vsel %vm298, %v3763, 0
      %v4002 = vsel %vm298, %v3764, 0
      %v4005 = vsel %vm298, %v3765, 0
      %v4008 = vsel %vm298, %v3766, 0
      %v4011 = vsel %vm298, %v3767, 0
      %v4014 = vsel %vm298, %v3768, 0
      %v4017 = vsel %vm298, %v3769, 0
      %4019 = vmatprep.subr.mxu0 0.0
      %4020 = vmatpush1.msra.mxu0 0.0
      %4021 = vmatprep.subr.mxu0 0.0
      %4022 = vmatpush1.msra.mxu0 0.0
      %4023 = vmatprep.subr.mxu0 0.0
      %4024 = vmatpush1.msra.mxu0 0.0
      %4025 = vmatprep.subr.mxu0 0.0
      %4026 = vmatpush1.msra.mxu0 0.0
      %4027 = vmatprep.subr.mxu0 0.0
      %4028 = vmatpush1.msra.mxu0 0.0
      %4029 = vmatprep.subr.mxu0 0.0
      %4030 = vmatpush1.msra.mxu0 0.0
      %4031 = vmatprep.subr.mxu0 0.0
      %4032 = vmatpush1.msra.mxu0 0.0
      %4033 = vmatprep.subr.mxu0 0.0
      %4034 = vmatpush1.msra.mxu0 0.0
      %4035 = vmatprep.subr.mxu0 0.0
      %4036 = vmatpush1.msra.mxu0 %v3778
      %4037 = vmatprep.subr.mxu0 0.0
      %4038 = vmatpush1.msra.mxu0 %v3777
      %4039 = vmatprep.subr.mxu0 0.0
      %4040 = vmatpush1.msra.mxu0 %v3776
      %4041 = vmatprep.subr.mxu0 0.0
      %4042 = vmatpush1.msra.mxu0 %v3775
      %4043 = vmatprep.subr.mxu0 0.0
      %4044 = vmatpush1.msra.mxu0 %v3774
      %4045 = vmatprep.subr.mxu0 0.0
      %4046 = vmatpush1.msra.mxu0 %v3773
      %4047 = vmatprep.subr.mxu0 0.0
      %4048 = vmatpush1.msra.mxu0 %v3772
      %4049 = vmatprep.subr.mxu0 0.0
      %4050 = vmatpush1.msra.mxu0 %v3771
      %4051 = vmatprep.subr.mxu0 0.0
      %4052 = vmatpush2.msra.mxu0 0.0
      %4053 = vmatprep.subr.mxu0 0.0
      %4054 = vmatpush2.msra.mxu0 0.0
      %4055 = vmatprep.subr.mxu0 0.0
      %4056 = vmatpush2.msra.mxu0 0.0
      %4057 = vmatprep.subr.mxu0 0.0
      %4058 = vmatpush2.msra.mxu0 0.0
      %4059 = vmatprep.subr.mxu0 0.0
      %4060 = vmatpush2.msra.mxu0 0.0
      %4061 = vmatprep.subr.mxu0 0.0
      %4062 = vmatpush2.msra.mxu0 0.0
      %4063 = vmatprep.subr.mxu0 0.0
      %4064 = vmatpush2.msra.mxu0 0.0
      %4065 = vmatprep.subr.mxu0 0.0
      %4066 = vmatpush2.msra.mxu0 0.0
      %4067 = vmatprep.subr.mxu0 0.0
      %4068 = vmatpush2.msra.mxu0 0.0
      %4069 = vmatprep.subr.mxu0 0.0
      %4070 = vmatpush2.msra.mxu0 0.0
      %4071 = vmatprep.subr.mxu0 0.0
      %4072 = vmatpush2.msra.mxu0 0.0
      %4073 = vmatprep.subr.mxu0 0.0
      %4074 = vmatpush2.msra.mxu0 0.0
      %4075 = vmatprep.subr.mxu0 0.0
      %4076 = vmatpush2.msra.mxu0 0.0
      %4077 = vmatprep.subr.mxu0 0.0
      %4078 = vmatpush2.msra.mxu0 0.0
      %4079 = vmatprep.subr.mxu0 0.0
      %4080 = vmatpush2.msra.mxu0 0.0
      %4081 = vmatprep.subr.mxu0 0.0
      %4082 = vmatpush2.msra.mxu0 0.0
      %4083 = vmatprep.mubr.f32.mxu0 0.0
      %4084 = vmatmul.mubr.f32.gmra.mxu0 %v3780
      %v4085 = vpop.f32.mrf.mxu0
      %v4086 = vadd.f32 0.0, %v4085
      %v4087 = vpop.f32.mrf.mxu0
      %4088 = vmatprep.mubr.f32.mxu0 0.0
      %4089 = vmatmul.mubr.f32.gmra.mxu0 %v3783
      %v4090 = vpop.f32.mrf.mxu0
      %v4091 = vadd.f32 0.0, %v4090
      %v4092 = vpop.f32.mrf.mxu0
      %4093 = vmatprep.mubr.f32.mxu0 0.0
      %4094 = vmatmul.mubr.f32.gmra.mxu0 %v3786
      %v4095 = vpop.f32.mrf.mxu0
      %v4096 = vadd.f32 0.0, %v4095
      %v4097 = vpop.f32.mrf.mxu0
      %4098 = vmatprep.mubr.f32.mxu0 0.0
      %4099 = vmatmul.mubr.f32.gmra.mxu0 %v3789
      %v4100 = vpop.f32.mrf.mxu0
      %v4101 = vadd.f32 0.0, %v4100
      %v4102 = vpop.f32.mrf.mxu0
      %4103 = vmatprep.mubr.f32.mxu0 0.0
      %4104 = vmatmul.mubr.f32.gmra.mxu0 %v3792
      %v4105 = vpop.f32.mrf.mxu0
      %v4106 = vadd.f32 0.0, %v4105
      %v4107 = vpop.f32.mrf.mxu0
      %4108 = vmatprep.mubr.f32.mxu0 0.0
      %4109 = vmatmul.mubr.f32.gmra.mxu0 %v3795
      %v4110 = vpop.f32.mrf.mxu0
      %v4111 = vadd.f32 0.0, %v4110
      %v4112 = vpop.f32.mrf.mxu0
      %4113 = vmatprep.mubr.f32.mxu0 0.0
      %4114 = vmatmul.mubr.f32.gmra.mxu0 %v3798
      %v4115 = vpop.f32.mrf.mxu0
      %v4116 = vadd.f32 0.0, %v4115
      %v4117 = vpop.f32.mrf.mxu0
      %4118 = vmatprep.mubr.f32.mxu0 0.0
      %4119 = vmatmul.mubr.f32.gmra.mxu0 %v3801
      %v4120 = vpop.f32.mrf.mxu0
      %v4121 = vadd.f32 0.0, %v4120
      %v4122 = vpop.f32.mrf.mxu0
      %4123 = vmatprep.mubr.f32.mxu0 0.0
      %4124 = vmatmul.mubr.f32.gmra.mxu0 %v3804
      %v4125 = vpop.f32.mrf.mxu0
      %v4126 = vadd.f32 0.0, %v4125
      %v4127 = vpop.f32.mrf.mxu0
      %4128 = vmatprep.mubr.f32.mxu0 0.0
      %4129 = vmatmul.mubr.f32.gmra.mxu0 %v3807
      %v4130 = vpop.f32.mrf.mxu0
      %v4131 = vadd.f32 0.0, %v4130
      %v4132 = vpop.f32.mrf.mxu0
      %4133 = vmatprep.mubr.f32.mxu0 0.0
      %4134 = vmatmul.mubr.f32.gmra.mxu0 %v3810
      %v4135 = vpop.f32.mrf.mxu0
      %v4136 = vadd.f32 0.0, %v4135
      %v4137 = vpop.f32.mrf.mxu0
      %4138 = vmatprep.mubr.f32.mxu0 0.0
      %4139 = vmatmul.mubr.f32.gmra.mxu0 %v3813
      %v4140 = vpop.f32.mrf.mxu0
      %v4141 = vadd.f32 0.0, %v4140
      %v4142 = vpop.f32.mrf.mxu0
      %4143 = vmatprep.mubr.f32.mxu0 0.0
      %4144 = vmatmul.mubr.f32.gmra.mxu0 %v3816
      %v4145 = vpop.f32.mrf.mxu0
      %v4146 = vadd.f32 0.0, %v4145
      %v4147 = vpop.f32.mrf.mxu0
      %4148 = vmatprep.mubr.f32.mxu0 0.0
      %4149 = vmatmul.mubr.f32.gmra.mxu0 %v3819
      %v4150 = vpop.f32.mrf.mxu0
      %v4151 = vadd.f32 0.0, %v4150
      %v4152 = vpop.f32.mrf.mxu0
      %4153 = vmatprep.mubr.f32.mxu0 0.0
      %4154 = vmatmul.mubr.f32.gmra.mxu0 %v3822
      %v4155 = vpop.f32.mrf.mxu0
      %v4156 = vadd.f32 0.0, %v4155
      %v4157 = vpop.f32.mrf.mxu0
      %4158 = vmatprep.mubr.f32.mxu0 0.0
      %4159 = vmatmul.mubr.f32.gmra.mxu0 %v3825
      %v4160 = vpop.f32.mrf.mxu0
      %v4161 = vadd.f32 0.0, %v4160
      %v4162 = vpop.f32.mrf.mxu0
      %4163 = vmatprep.mubr.f32.mxu0 0.0
      %4164 = vmatmul.mubr.f32.gmra.mxu0 %v3828
      %v4165 = vpop.f32.mrf.mxu0
      %v4166 = vadd.f32 0.0, %v4165
      %v4167 = vpop.f32.mrf.mxu0
      %4168 = vmatprep.mubr.f32.mxu0 0.0
      %4169 = vmatmul.mubr.f32.gmra.mxu0 %v3831
      %v4170 = vpop.f32.mrf.mxu0
      %v4171 = vadd.f32 0.0, %v4170
      %v4172 = vpop.f32.mrf.mxu0
      %4173 = vmatprep.mubr.f32.mxu0 0.0
      %4174 = vmatmul.mubr.f32.gmra.mxu0 %v3834
      %v4175 = vpop.f32.mrf.mxu0
      %v4176 = vadd.f32 0.0, %v4175
      %v4177 = vpop.f32.mrf.mxu0
      %4178 = vmatprep.mubr.f32.mxu0 0.0
      %4179 = vmatmul.mubr.f32.gmra.mxu0 %v3837
      %v4180 = vpop.f32.mrf.mxu0
      %v4181 = vadd.f32 0.0, %v4180
      %v4182 = vpop.f32.mrf.mxu0
      %4183 = vmatprep.mubr.f32.mxu0 0.0
      %4184 = vmatmul.mubr.f32.gmra.mxu0 %v3840
      %v4185 = vpop.f32.mrf.mxu0
      %v4186 = vadd.f32 0.0, %v4185
      %v4187 = vpop.f32.mrf.mxu0
      %4188 = vmatprep.mubr.f32.mxu0 0.0
      %4189 = vmatmul.mubr.f32.gmra.mxu0 %v3843
      %v4190 = vpop.f32.mrf.mxu0
      %v4191 = vadd.f32 0.0, %v4190
      %v4192 = vpop.f32.mrf.mxu0
      %4193 = vmatprep.mubr.f32.mxu0 0.0
      %4194 = vmatmul.mubr.f32.gmra.mxu0 %v3846
      %v4195 = vpop.f32.mrf.mxu0
      %v4196 = vadd.f32 0.0, %v4195
      %v4197 = vpop.f32.mrf.mxu0
      %4198 = vmatprep.mubr.f32.mxu0 0.0
      %4199 = vmatmul.mubr.f32.gmra.mxu0 %v3849
      %v4200 = vpop.f32.mrf.mxu0
      %v4201 = vadd.f32 0.0, %v4200
      %v4202 = vpop.f32.mrf.mxu0
      %4203 = vmatprep.mubr.f32.mxu0 0.0
      %4204 = vmatmul.mubr.f32.gmra.mxu0 %v3852
      %v4205 = vpop.f32.mrf.mxu0
      %v4206 = vadd.f32 0.0, %v4205
      %v4207 = vpop.f32.mrf.mxu0
      %4208 = vmatprep.mubr.f32.mxu0 0.0
      %4209 = vmatmul.mubr.f32.gmra.mxu0 %v3855
      %v4210 = vpop.f32.mrf.mxu0
      %v4211 = vadd.f32 0.0, %v4210
      %v4212 = vpop.f32.mrf.mxu0
      %4213 = vmatprep.mubr.f32.mxu0 0.0
      %4214 = vmatmul.mubr.f32.gmra.mxu0 %v3858
      %v4215 = vpop.f32.mrf.mxu0
      %v4216 = vadd.f32 0.0, %v4215
      %v4217 = vpop.f32.mrf.mxu0
      %4218 = vmatprep.mubr.f32.mxu0 0.0
      %4219 = vmatmul.mubr.f32.gmra.mxu0 %v3861
      %v4220 = vpop.f32.mrf.mxu0
      %v4221 = vadd.f32 0.0, %v4220
      %v4222 = vpop.f32.mrf.mxu0
      %4223 = vmatprep.mubr.f32.mxu0 0.0
      %4224 = vmatmul.mubr.f32.gmra.mxu0 %v3864
      %v4225 = vpop.f32.mrf.mxu0
      %v4226 = vadd.f32 0.0, %v4225
      %v4227 = vpop.f32.mrf.mxu0
      %4228 = vmatprep.mubr.f32.mxu0 0.0
      %4229 = vmatmul.mubr.f32.gmra.mxu0 %v3867
      %v4230 = vpop.f32.mrf.mxu0
      %v4231 = vadd.f32 0.0, %v4230
      %v4232 = vpop.f32.mrf.mxu0
      %4233 = vmatprep.mubr.f32.mxu0 0.0
      %4234 = vmatmul.mubr.f32.gmra.mxu0 %v3870
      %v4235 = vpop.f32.mrf.mxu0
      %v4236 = vadd.f32 0.0, %v4235
      %v4237 = vpop.f32.mrf.mxu0
      %4238 = vmatprep.mubr.f32.mxu0 0.0
      %4239 = vmatmul.mubr.f32.gmra.mxu0 %v3873
      %v4240 = vpop.f32.mrf.mxu0
      %v4241 = vadd.f32 0.0, %v4240
      %v4242 = vpop.f32.mrf.mxu0
      %4243 = vmatprep.mubr.f32.mxu0 0.0
      %4244 = vmatmul.mubr.f32.gmra.mxu0 %v3876
      %v4245 = vpop.f32.mrf.mxu0
      %v4246 = vadd.f32 0.0, %v4245
      %v4247 = vpop.f32.mrf.mxu0
      %4248 = vmatprep.mubr.f32.mxu0 0.0
      %4249 = vmatmul.mubr.f32.gmra.mxu0 %v3879
      %v4250 = vpop.f32.mrf.mxu0
      %v4251 = vadd.f32 0.0, %v4250
      %v4252 = vpop.f32.mrf.mxu0
      %4253 = vmatprep.mubr.f32.mxu0 0.0
      %4254 = vmatmul.mubr.f32.gmra.mxu0 %v3882
      %v4255 = vpop.f32.mrf.mxu0
      %v4256 = vadd.f32 0.0, %v4255
      %v4257 = vpop.f32.mrf.mxu0
      %4258 = vmatprep.mubr.f32.mxu0 0.0
      %4259 = vmatmul.mubr.f32.gmra.mxu0 %v3885
      %v4260 = vpop.f32.mrf.mxu0
      %v4261 = vadd.f32 0.0, %v4260
      %v4262 = vpop.f32.mrf.mxu0
      %4263 = vmatprep.mubr.f32.mxu0 0.0
      %4264 = vmatmul.mubr.f32.gmra.mxu0 %v3888
      %v4265 = vpop.f32.mrf.mxu0
      %v4266 = vadd.f32 0.0, %v4265
      %v4267 = vpop.f32.mrf.mxu0
      %4268 = vmatprep.mubr.f32.mxu0 0.0
      %4269 = vmatmul.mubr.f32.gmra.mxu0 %v3891
      %v4270 = vpop.f32.mrf.mxu0
      %v4271 = vadd.f32 0.0, %v4270
      %v4272 = vpop.f32.mrf.mxu0
      %4273 = vmatprep.mubr.f32.mxu0 0.0
      %4274 = vmatmul.mubr.f32.gmra.mxu0 %v3894
      %v4275 = vpop.f32.mrf.mxu0
      %v4276 = vadd.f32 0.0, %v4275
      %v4277 = vpop.f32.mrf.mxu0
      %4278 = vmatprep.mubr.f32.mxu0 0.0
      %4279 = vmatmul.mubr.f32.gmra.mxu0 %v3897
      %v4280 = vpop.f32.mrf.mxu0
      %v4281 = vadd.f32 0.0, %v4280
      %v4282 = vpop.f32.mrf.mxu0
      %4283 = vmatprep.mubr.f32.mxu0 0.0
      %4284 = vmatmul.mubr.f32.gmra.mxu0 %v3900
      %v4285 = vpop.f32.mrf.mxu0
      %v4286 = vadd.f32 0.0, %v4285
      %v4287 = vpop.f32.mrf.mxu0
      %4288 = vmatprep.mubr.f32.mxu0 0.0
      %4289 = vmatmul.mubr.f32.gmra.mxu0 %v3903
      %v4290 = vpop.f32.mrf.mxu0
      %v4291 = vadd.f32 0.0, %v4290
      %v4292 = vpop.f32.mrf.mxu0
      %4293 = vmatprep.mubr.f32.mxu0 0.0
      %4294 = vmatmul.mubr.f32.gmra.mxu0 %v3906
      %v4295 = vpop.f32.mrf.mxu0
      %v4296 = vadd.f32 0.0, %v4295
      %v4297 = vpop.f32.mrf.mxu0
      %4298 = vmatprep.mubr.f32.mxu0 0.0
      %4299 = vmatmul.mubr.f32.gmra.mxu0 %v3909
      %v4300 = vpop.f32.mrf.mxu0
      %v4301 = vadd.f32 0.0, %v4300
      %v4302 = vpop.f32.mrf.mxu0
      %4303 = vmatprep.mubr.f32.mxu0 0.0
      %4304 = vmatmul.mubr.f32.gmra.mxu0 %v3912
      %v4305 = vpop.f32.mrf.mxu0
      %v4306 = vadd.f32 0.0, %v4305
      %v4307 = vpop.f32.mrf.mxu0
      %4308 = vmatprep.mubr.f32.mxu0 0.0
      %4309 = vmatmul.mubr.f32.gmra.mxu0 %v3915
      %v4310 = vpop.f32.mrf.mxu0
      %v4311 = vadd.f32 0.0, %v4310
      %v4312 = vpop.f32.mrf.mxu0
      %4313 = vmatprep.mubr.f32.mxu0 0.0
      %4314 = vmatmul.mubr.f32.gmra.mxu0 %v3918
      %v4315 = vpop.f32.mrf.mxu0
      %v4316 = vadd.f32 0.0, %v4315
      %v4317 = vpop.f32.mrf.mxu0
      %4318 = vmatprep.mubr.f32.mxu0 0.0
      %4319 = vmatmul.mubr.f32.gmra.mxu0 %v3921
      %v4320 = vpop.f32.mrf.mxu0
      %v4321 = vadd.f32 0.0, %v4320
      %v4322 = vpop.f32.mrf.mxu0
      %4323 = vmatprep.mubr.f32.mxu0 0.0
      %4324 = vmatmul.mubr.f32.gmra.mxu0 %v3924
      %v4325 = vpop.f32.mrf.mxu0
      %v4326 = vadd.f32 0.0, %v4325
      %v4327 = vpop.f32.mrf.mxu0
      %4328 = vmatprep.mubr.f32.mxu0 0.0
      %4329 = vmatmul.mubr.f32.gmra.mxu0 %v3927
      %v4330 = vpop.f32.mrf.mxu0
      %v4331 = vadd.f32 0.0, %v4330
      %v4332 = vpop.f32.mrf.mxu0
      %4333 = vmatprep.mubr.f32.mxu0 0.0
      %4334 = vmatmul.mubr.f32.gmra.mxu0 %v3930
      %v4335 = vpop.f32.mrf.mxu0
      %v4336 = vadd.f32 0.0, %v4335
      %v4337 = vpop.f32.mrf.mxu0
      %4338 = vmatprep.mubr.f32.mxu0 0.0
      %4339 = vmatmul.mubr.f32.gmra.mxu0 %v3933
      %v4340 = vpop.f32.mrf.mxu0
      %v4341 = vadd.f32 0.0, %v4340
      %v4342 = vpop.f32.mrf.mxu0
      %4343 = vmatprep.mubr.f32.mxu0 0.0
      %4344 = vmatmul.mubr.f32.gmra.mxu0 %v3936
      %v4345 = vpop.f32.mrf.mxu0
      %v4346 = vadd.f32 0.0, %v4345
      %v4347 = vpop.f32.mrf.mxu0
      %4348 = vmatprep.mubr.f32.mxu0 0.0
      %4349 = vmatmul.mubr.f32.gmra.mxu0 %v3939
      %v4350 = vpop.f32.mrf.mxu0
      %v4351 = vadd.f32 0.0, %v4350
      %v4352 = vpop.f32.mrf.mxu0
      %4353 = vmatprep.mubr.f32.mxu0 0.0
      %4354 = vmatmul.mubr.f32.gmra.mxu0 %v3942
      %v4355 = vpop.f32.mrf.mxu0
      %v4356 = vadd.f32 0.0, %v4355
      %v4357 = vpop.f32.mrf.mxu0
      %4358 = vmatprep.mubr.f32.mxu0 0.0
      %4359 = vmatmul.mubr.f32.gmra.mxu0 %v3945
      %v4360 = vpop.f32.mrf.mxu0
      %v4361 = vadd.f32 0.0, %v4360
      %v4362 = vpop.f32.mrf.mxu0
      %4363 = vmatprep.mubr.f32.mxu0 0.0
      %4364 = vmatmul.mubr.f32.gmra.mxu0 %v3948
      %v4365 = vpop.f32.mrf.mxu0
      %v4366 = vadd.f32 0.0, %v4365
      %v4367 = vpop.f32.mrf.mxu0
      %4368 = vmatprep.mubr.f32.mxu0 0.0
      %4369 = vmatmul.mubr.f32.gmra.mxu0 %v3951
      %v4370 = vpop.f32.mrf.mxu0
      %v4371 = vadd.f32 0.0, %v4370
      %v4372 = vpop.f32.mrf.mxu0
      %4373 = vmatprep.mubr.f32.mxu0 0.0
      %4374 = vmatmul.mubr.f32.gmra.mxu0 %v3954
      %v4375 = vpop.f32.mrf.mxu0
      %v4376 = vadd.f32 0.0, %v4375
      %v4377 = vpop.f32.mrf.mxu0
      %4378 = vmatprep.mubr.f32.mxu0 0.0
      %4379 = vmatmul.mubr.f32.gmra.mxu0 %v3957
      %v4380 = vpop.f32.mrf.mxu0
      %v4381 = vadd.f32 0.0, %v4380
      %v4382 = vpop.f32.mrf.mxu0
      %4383 = vmatprep.mubr.f32.mxu0 0.0
      %4384 = vmatmul.mubr.f32.gmra.mxu0 %v3960
      %v4385 = vpop.f32.mrf.mxu0
      %v4386 = vadd.f32 0.0, %v4385
      %v4387 = vpop.f32.mrf.mxu0
      %4388 = vmatprep.mubr.f32.mxu0 0.0
      %4389 = vmatmul.mubr.f32.gmra.mxu0 %v3963
      %v4390 = vpop.f32.mrf.mxu0
      %v4391 = vadd.f32 0.0, %v4390
      %v4392 = vpop.f32.mrf.mxu0
      %4393 = vmatprep.mubr.f32.mxu0 0.0
      %4394 = vmatmul.mubr.f32.gmra.mxu0 %v3966
      %v4395 = vpop.f32.mrf.mxu0
      %v4396 = vadd.f32 0.0, %v4395
      %v4397 = vpop.f32.mrf.mxu0
      %4398 = vmatprep.mubr.f32.mxu0 0.0
      %4399 = vmatmul.mubr.f32.gmra.mxu0 %v3969
      %v4400 = vpop.f32.mrf.mxu0
      %v4401 = vadd.f32 0.0, %v4400
      %v4402 = vpop.f32.mrf.mxu0
      %4403 = vmatprep.mubr.f32.mxu0 0.0
      %4404 = vmatmul.mubr.f32.gmra.mxu0 %v3972
      %v4405 = vpop.f32.mrf.mxu0
      %v4406 = vadd.f32 0.0, %v4405
      %v4407 = vpop.f32.mrf.mxu0
      %4408 = vmatprep.mubr.f32.mxu0 0.0
      %4409 = vmatmul.mubr.f32.gmra.mxu0 %v3975
      %v4410 = vpop.f32.mrf.mxu0
      %v4411 = vadd.f32 0.0, %v4410
      %v4412 = vpop.f32.mrf.mxu0
      %4413 = vmatprep.mubr.f32.mxu0 0.0
      %4414 = vmatmul.mubr.f32.gmra.mxu0 %v3978
      %v4415 = vpop.f32.mrf.mxu0
      %v4416 = vadd.f32 0.0, %v4415
      %v4417 = vpop.f32.mrf.mxu0
      %4418 = vmatprep.mubr.f32.mxu0 0.0
      %4419 = vmatmul.mubr.f32.gmra.mxu0 %v3981
      %v4420 = vpop.f32.mrf.mxu0
      %v4421 = vadd.f32 0.0, %v4420
      %v4422 = vpop.f32.mrf.mxu0
      %4423 = vmatprep.mubr.f32.mxu0 0.0
      %4424 = vmatmul.mubr.f32.gmra.mxu0 %v3984
      %v4425 = vpop.f32.mrf.mxu0
      %v4426 = vadd.f32 0.0, %v4425
      %v4427 = vpop.f32.mrf.mxu0
      %4428 = vmatprep.mubr.f32.mxu0 0.0
      %4429 = vmatmul.mubr.f32.gmra.mxu0 %v3987
      %v4430 = vpop.f32.mrf.mxu0
      %v4431 = vadd.f32 0.0, %v4430
      %v4432 = vpop.f32.mrf.mxu0
      %4433 = vmatprep.mubr.f32.mxu0 0.0
      %4434 = vmatmul.mubr.f32.gmra.mxu0 %v3990
      %v4435 = vpop.f32.mrf.mxu0
      %v4436 = vadd.f32 0.0, %v4435
      %v4437 = vpop.f32.mrf.mxu0
      %4438 = vmatprep.mubr.f32.mxu0 0.0
      %4439 = vmatmul.mubr.f32.gmra.mxu0 %v3993
      %v4440 = vpop.f32.mrf.mxu0
      %v4441 = vadd.f32 0.0, %v4440
      %v4442 = vpop.f32.mrf.mxu0
      %4443 = vmatprep.mubr.f32.mxu0 0.0
      %4444 = vmatmul.mubr.f32.gmra.mxu0 %v3996
      %v4445 = vpop.f32.mrf.mxu0
      %v4446 = vadd.f32 0.0, %v4445
      %v4447 = vpop.f32.mrf.mxu0
      %4448 = vmatprep.mubr.f32.mxu0 0.0
      %4449 = vmatmul.mubr.f32.gmra.mxu0 %v3999
      %v4450 = vpop.f32.mrf.mxu0
      %v4451 = vadd.f32 0.0, %v4450
      %v4452 = vpop.f32.mrf.mxu0
      %4453 = vmatprep.mubr.f32.mxu0 0.0
      %4454 = vmatmul.mubr.f32.gmra.mxu0 %v4002
      %v4455 = vpop.f32.mrf.mxu0
      %v4456 = vadd.f32 0.0, %v4455
      %v4457 = vpop.f32.mrf.mxu0
      %4458 = vmatprep.mubr.f32.mxu0 0.0
      %4459 = vmatmul.mubr.f32.gmra.mxu0 %v4005
      %v4460 = vpop.f32.mrf.mxu0
      %v4461 = vadd.f32 0.0, %v4460
      %v4462 = vpop.f32.mrf.mxu0
      %4463 = vmatprep.mubr.f32.mxu0 0.0
      %4464 = vmatmul.mubr.f32.gmra.mxu0 %v4008
      %v4465 = vpop.f32.mrf.mxu0
      %v4466 = vadd.f32 0.0, %v4465
      %v4467 = vpop.f32.mrf.mxu0
      %4468 = vmatprep.mubr.f32.mxu0 0.0
      %4469 = vmatmul.mubr.f32.gmra.mxu0 %v4011
      %v4470 = vpop.f32.mrf.mxu0
      %v4471 = vadd.f32 0.0, %v4470
      %v4472 = vpop.f32.mrf.mxu0
      %4473 = vmatprep.mubr.f32.mxu0 0.0
      %4474 = vmatmul.mubr.f32.gmra.mxu0 %v4014
      %v4475 = vpop.f32.mrf.mxu0
      %v4476 = vadd.f32 0.0, %v4475
      %v4477 = vpop.f32.mrf.mxu0
      %4478 = vmatprep.mubr.f32.mxu0 0.0
      %4479 = vmatmul.mubr.f32.gmra.mxu0 %v4017
      %v4480 = vpop.f32.mrf.mxu0
      %v4481 = vadd.f32 0.0, %v4480
      %v4482 = vpop.f32.mrf.mxu0
      %4483 = vdwg.mxu0
      %v4484 = vadd.f32 %v3625, %v4086
      %v4485 = vadd.f32 %v3626, %v4091
      %v4486 = vadd.f32 %v3627, %v4096
      %v4487 = vadd.f32 %v3628, %v4101
      %v4488 = vadd.f32 %v3629, %v4111
      %v4489 = vadd.f32 %v3630, %v4116
      %v4490 = vadd.f32 %v3631, %v4121
      %v4491 = vadd.f32 %v3632, %v4126
      %v4492 = vadd.f32 %v3633, %v4136
      %v4493 = vadd.f32 %v3634, %v4141
      %v4494 = vadd.f32 %v3635, %v4146
      %v4495 = vadd.f32 %v3636, %v4151
      %v4496 = vadd.f32 %v3637, %v4161
      %v4497 = vadd.f32 %v3638, %v4166
      %v4498 = vadd.f32 %v3639, %v4171
      %v4499 = vadd.f32 %v3640, %v4176
      %v4500 = vadd.f32 %v3641, %v4186
      %v4501 = vadd.f32 %v3642, %v4191
      %v4502 = vadd.f32 %v3643, %v4196
      %v4503 = vadd.f32 %v3644, %v4201
      %v4504 = vadd.f32 %v3645, %v4211
      %v4505 = vadd.f32 %v3646, %v4216
      %v4506 = vadd.f32 %v3647, %v4221
      %v4507 = vadd.f32 %v3648, %v4226
      %v4508 = vadd.f32 %v3649, %v4236
      %v4509 = vadd.f32 %v3650, %v4241
      %v4510 = vadd.f32 %v3651, %v4246
      %v4511 = vadd.f32 %v3652, %v4251
      %v4512 = vadd.f32 %v3653, %v4261
      %v4513 = vadd.f32 %v3654, %v4266
      %v4514 = vadd.f32 %v3655, %v4271
      %v4515 = vadd.f32 %v3656, %v4276
      %v4516 = vadd.f32 %v3657, %v4286
      %v4517 = vadd.f32 %v3658, %v4291
      %v4518 = vadd.f32 %v3659, %v4296
      %v4519 = vadd.f32 %v3660, %v4301
      %v4520 = vadd.f32 %v3661, %v4311
      %v4521 = vadd.f32 %v3662, %v4316
      %v4522 = vadd.f32 %v3663, %v4321
      %v4523 = vadd.f32 %v3664, %v4326
      %v4524 = vadd.f32 %v3665, %v4336
      %v4525 = vadd.f32 %v3666, %v4341
      %v4526 = vadd.f32 %v3667, %v4346
      %v4527 = vadd.f32 %v3668, %v4351
      %v4528 = vadd.f32 %v3669, %v4361
      %v4529 = vadd.f32 %v3670, %v4366
      %v4530 = vadd.f32 %v3671, %v4371
      %v4531 = vadd.f32 %v3672, %v4376
      %v4532 = vadd.f32 %v3673, %v4386
      %v4533 = vadd.f32 %v3674, %v4391
      %v4534 = vadd.f32 %v3675, %v4396
      %v4535 = vadd.f32 %v3676, %v4401
      %v4536 = vadd.f32 %v3677, %v4411
      %v4537 = vadd.f32 %v3678, %v4416
      %v4538 = vadd.f32 %v3679, %v4421
      %v4539 = vadd.f32 %v3680, %v4426
      %v4540 = vadd.f32 %v3681, %v4436
      %v4541 = vadd.f32 %v3682, %v4441
      %v4542 = vadd.f32 %v3683, %v4446
      %v4543 = vadd.f32 %v3684, %v4451
      %v4544 = vadd.f32 %v3685, %v4461
      %v4545 = vadd.f32 %v3686, %v4466
      %v4546 = vadd.f32 %v3687, %v4471
      %v4547 = vadd.f32 %v3688, %v4476
      %v4628 = vrot.slane %v4086, 1
      %v4629 = vrot.slane %v4091, 1
      %v4630 = vsel %vm1148, %v4628, %v4629
      %v4631 = vrot.slane %v4096, 1
      %v4632 = vsel %vm1148, %v4629, %v4631
      %v4633 = vrot.slane %v4101, 1
      %v4634 = vsel %vm1148, %v4631, %v4633
      %v4635 = vrot.slane %v4106, 1
      %v4636 = vsel %vm1148, %v4633, %v4635
      %v4637 = vrot.slane %v4111, 1
      %v4638 = vrot.slane %v4116, 1
      %v4639 = vsel %vm1148, %v4637, %v4638
      %v4640 = vrot.slane %v4121, 1
      %v4641 = vsel %vm1148, %v4638, %v4640
      %v4642 = vrot.slane %v4126, 1
      %v4643 = vsel %vm1148, %v4640, %v4642
      %v4644 = vrot.slane %v4131, 1
      %v4645 = vsel %vm1148, %v4642, %v4644
      %v4646 = vrot.slane %v4136, 1
      %v4647 = vrot.slane %v4141, 1
      %v4648 = vsel %vm1148, %v4646, %v4647
      %v4649 = vrot.slane %v4146, 1
      %v4650 = vsel %vm1148, %v4647, %v4649
      %v4651 = vrot.slane %v4151, 1
      %v4652 = vsel %vm1148, %v4649, %v4651
      %v4653 = vrot.slane %v4156, 1
      %v4654 = vsel %vm1148, %v4651, %v4653
      %v4655 = vrot.slane %v4161, 1
      %v4656 = vrot.slane %v4166, 1
      %v4657 = vsel %vm1148, %v4655, %v4656
      %v4658 = vrot.slane %v4171, 1
      %v4659 = vsel %vm1148, %v4656, %v4658
      %v4660 = vrot.slane %v4176, 1
      %v4661 = vsel %vm1148, %v4658, %v4660
      %v4662 = vrot.slane %v4181, 1
      %v4663 = vsel %vm1148, %v4660, %v4662
      %v4664 = vrot.slane %v4186, 1
      %v4665 = vrot.slane %v4191, 1
      %v4666 = vsel %vm1148, %v4664, %v4665
      %v4667 = vrot.slane %v4196, 1
      %v4668 = vsel %vm1148, %v4665, %v4667
      %v4669 = vrot.slane %v4201, 1
      %v4670 = vsel %vm1148, %v4667, %v4669
      %v4671 = vrot.slane %v4206, 1
      %v4672 = vsel %vm1148, %v4669, %v4671
      %v4673 = vrot.slane %v4211, 1
      %v4674 = vrot.slane %v4216, 1
      %v4675 = vsel %vm1148, %v4673, %v4674
      %v4676 = vrot.slane %v4221, 1
      %v4677 = vsel %vm1148, %v4674, %v4676
      %v4678 = vrot.slane %v4226, 1
      %v4679 = vsel %vm1148, %v4676, %v4678
      %v4680 = vrot.slane %v4231, 1
      %v4681 = vsel %vm1148, %v4678, %v4680
      %v4682 = vrot.slane %v4236, 1
      %v4683 = vrot.slane %v4241, 1
      %v4684 = vsel %vm1148, %v4682, %v4683
      %v4685 = vrot.slane %v4246, 1
      %v4686 = vsel %vm1148, %v4683, %v4685
      %v4687 = vrot.slane %v4251, 1
      %v4688 = vsel %vm1148, %v4685, %v4687
      %v4689 = vrot.slane %v4256, 1
      %v4690 = vsel %vm1148, %v4687, %v4689
      %v4691 = vrot.slane %v4261, 1
      %v4692 = vrot.slane %v4266, 1
      %v4693 = vsel %vm1148, %v4691, %v4692
      %v4694 = vrot.slane %v4271, 1
      %v4695 = vsel %vm1148, %v4692, %v4694
      %v4696 = vrot.slane %v4276, 1
      %v4697 = vsel %vm1148, %v4694, %v4696
      %v4698 = vrot.slane %v4281, 1
      %v4699 = vsel %vm1148, %v4696, %v4698
      %v4700 = vrot.slane %v4286, 1
      %v4701 = vrot.slane %v4291, 1
      %v4702 = vsel %vm1148, %v4700, %v4701
      %v4703 = vrot.slane %v4296, 1
      %v4704 = vsel %vm1148, %v4701, %v4703
      %v4705 = vrot.slane %v4301, 1
      %v4706 = vsel %vm1148, %v4703, %v4705
      %v4707 = vrot.slane %v4306, 1
      %v4708 = vsel %vm1148, %v4705, %v4707
      %v4709 = vrot.slane %v4311, 1
      %v4710 = vrot.slane %v4316, 1
      %v4711 = vsel %vm1148, %v4709, %v4710
      %v4712 = vrot.slane %v4321, 1
      %v4713 = vsel %vm1148, %v4710, %v4712
      %v4714 = vrot.slane %v4326, 1
      %v4715 = vsel %vm1148, %v4712, %v4714
      %v4716 = vrot.slane %v4331, 1
      %v4717 = vsel %vm1148, %v4714, %v4716
      %v4718 = vrot.slane %v4336, 1
      %v4719 = vrot.slane %v4341, 1
      %v4720 = vsel %vm1148, %v4718, %v4719
      %v4721 = vrot.slane %v4346, 1
      %v4722 = vsel %vm1148, %v4719, %v4721
      %v4723 = vrot.slane %v4351, 1
      %v4724 = vsel %vm1148, %v4721, %v4723
      %v4725 = vrot.slane %v4356, 1
      %v4726 = vsel %vm1148, %v4723, %v4725
      %v4727 = vrot.slane %v4361, 1
      %v4728 = vrot.slane %v4366, 1
      %v4729 = vsel %vm1148, %v4727, %v4728
      %v4730 = vrot.slane %v4371, 1
      %v4731 = vsel %vm1148, %v4728, %v4730
      %v4732 = vrot.slane %v4376, 1
      %v4733 = vsel %vm1148, %v4730, %v4732
      %v4734 = vrot.slane %v4381, 1
      %v4735 = vsel %vm1148, %v4732, %v4734
      %v4736 = vrot.slane %v4386, 1
      %v4737 = vrot.slane %v4391, 1
      %v4738 = vsel %vm1148, %v4736, %v4737
      %v4739 = vrot.slane %v4396, 1
      %v4740 = vsel %vm1148, %v4737, %v4739
      %v4741 = vrot.slane %v4401, 1
      %v4742 = vsel %vm1148, %v4739, %v4741
      %v4743 = vrot.slane %v4406, 1
      %v4744 = vsel %vm1148, %v4741, %v4743
      %v4745 = vrot.slane %v4411, 1
      %v4746 = vrot.slane %v4416, 1
      %v4747 = vsel %vm1148, %v4745, %v4746
      %v4748 = vrot.slane %v4421, 1
      %v4749 = vsel %vm1148, %v4746, %v4748
      %v4750 = vrot.slane %v4426, 1
      %v4751 = vsel %vm1148, %v4748, %v4750
      %v4752 = vrot.slane %v4431, 1
      %v4753 = vsel %vm1148, %v4750, %v4752
      %v4754 = vrot.slane %v4436, 1
      %v4755 = vrot.slane %v4441, 1
      %v4756 = vsel %vm1148, %v4754, %v4755
      %v4757 = vrot.slane %v4446, 1
      %v4758 = vsel %vm1148, %v4755, %v4757
      %v4759 = vrot.slane %v4451, 1
      %v4760 = vsel %vm1148, %v4757, %v4759
      %v4761 = vrot.slane %v4456, 1
      %v4762 = vsel %vm1148, %v4759, %v4761
      %v4763 = vrot.slane %v4461, 1
      %v4764 = vrot.slane %v4466, 1
      %v4765 = vsel %vm1148, %v4763, %v4764
      %v4766 = vrot.slane %v4471, 1
      %v4767 = vsel %vm1148, %v4764, %v4766
      %v4768 = vrot.slane %v4476, 1
      %v4769 = vsel %vm1148, %v4766, %v4768
      %v4770 = vrot.slane %v4481, 1
      %v4771 = vsel %vm1148, %v4768, %v4770
      %4772 = vrot.lane.b32.xlu0 %v4630, 125
      %v4773 = vpop.permute.xlu0 %4772
      %4774 = vrot.lane.b32.xlu0 %v4632, 125
      %v4775 = vpop.permute.xlu0 %4774
      %4776 = vrot.lane.b32.xlu0 %v4634, 125
      %v4777 = vpop.permute.xlu0 %4776
      %4778 = vrot.lane.b32.xlu0 %v4636, 125
      %v4779 = vpop.permute.xlu0 %4778
      %4780 = vrot.lane.b32.xlu0 %v4639, 125
      %v4781 = vpop.permute.xlu0 %4780
      %4782 = vrot.lane.b32.xlu0 %v4641, 125
      %v4783 = vpop.permute.xlu0 %4782
      %4784 = vrot.lane.b32.xlu0 %v4643, 125
      %v4785 = vpop.permute.xlu0 %4784
      %4786 = vrot.lane.b32.xlu0 %v4645, 125
      %v4787 = vpop.permute.xlu0 %4786
      %4788 = vrot.lane.b32.xlu0 %v4648, 125
      %v4789 = vpop.permute.xlu0 %4788
      %4790 = vrot.lane.b32.xlu0 %v4650, 125
      %v4791 = vpop.permute.xlu0 %4790
      %4792 = vrot.lane.b32.xlu0 %v4652, 125
      %v4793 = vpop.permute.xlu0 %4792
      %4794 = vrot.lane.b32.xlu0 %v4654, 125
      %v4795 = vpop.permute.xlu0 %4794
      %4796 = vrot.lane.b32.xlu0 %v4657, 125
      %v4797 = vpop.permute.xlu0 %4796
      %4798 = vrot.lane.b32.xlu0 %v4659, 125
      %v4799 = vpop.permute.xlu0 %4798
      %4800 = vrot.lane.b32.xlu0 %v4661, 125
      %v4801 = vpop.permute.xlu0 %4800
      %4802 = vrot.lane.b32.xlu0 %v4663, 125
      %v4803 = vpop.permute.xlu0 %4802
      %4804 = vrot.lane.b32.xlu0 %v4666, 125
      %v4805 = vpop.permute.xlu0 %4804
      %4806 = vrot.lane.b32.xlu0 %v4668, 125
      %v4807 = vpop.permute.xlu0 %4806
      %4808 = vrot.lane.b32.xlu0 %v4670, 125
      %v4809 = vpop.permute.xlu0 %4808
      %4810 = vrot.lane.b32.xlu0 %v4672, 125
      %v4811 = vpop.permute.xlu0 %4810
      %4812 = vrot.lane.b32.xlu0 %v4675, 125
      %v4813 = vpop.permute.xlu0 %4812
      %4814 = vrot.lane.b32.xlu0 %v4677, 125
      %v4815 = vpop.permute.xlu0 %4814
      %4816 = vrot.lane.b32.xlu0 %v4679, 125
      %v4817 = vpop.permute.xlu0 %4816
      %4818 = vrot.lane.b32.xlu0 %v4681, 125
      %v4819 = vpop.permute.xlu0 %4818
      %4820 = vrot.lane.b32.xlu0 %v4684, 125
      %v4821 = vpop.permute.xlu0 %4820
      %4822 = vrot.lane.b32.xlu0 %v4686, 125
      %v4823 = vpop.permute.xlu0 %4822
      %4824 = vrot.lane.b32.xlu0 %v4688, 125
      %v4825 = vpop.permute.xlu0 %4824
      %4826 = vrot.lane.b32.xlu0 %v4690, 125
      %v4827 = vpop.permute.xlu0 %4826
      %4828 = vrot.lane.b32.xlu0 %v4693, 125
      %v4829 = vpop.permute.xlu0 %4828
      %4830 = vrot.lane.b32.xlu0 %v4695, 125
      %v4831 = vpop.permute.xlu0 %4830
      %4832 = vrot.lane.b32.xlu0 %v4697, 125
      %v4833 = vpop.permute.xlu0 %4832
      %4834 = vrot.lane.b32.xlu0 %v4699, 125
      %v4835 = vpop.permute.xlu0 %4834
      %4836 = vrot.lane.b32.xlu0 %v4702, 125
      %v4837 = vpop.permute.xlu0 %4836
      %4838 = vrot.lane.b32.xlu0 %v4704, 125
      %v4839 = vpop.permute.xlu0 %4838
      %4840 = vrot.lane.b32.xlu0 %v4706, 125
      %v4841 = vpop.permute.xlu0 %4840
      %4842 = vrot.lane.b32.xlu0 %v4708, 125
      %v4843 = vpop.permute.xlu0 %4842
      %4844 = vrot.lane.b32.xlu0 %v4711, 125
      %v4845 = vpop.permute.xlu0 %4844
      %4846 = vrot.lane.b32.xlu0 %v4713, 125
      %v4847 = vpop.permute.xlu0 %4846
      %4848 = vrot.lane.b32.xlu0 %v4715, 125
      %v4849 = vpop.permute.xlu0 %4848
      %4850 = vrot.lane.b32.xlu0 %v4717, 125
      %v4851 = vpop.permute.xlu0 %4850
      %4852 = vrot.lane.b32.xlu0 %v4720, 125
      %v4853 = vpop.permute.xlu0 %4852
      %4854 = vrot.lane.b32.xlu0 %v4722, 125
      %v4855 = vpop.permute.xlu0 %4854
      %4856 = vrot.lane.b32.xlu0 %v4724, 125
      %v4857 = vpop.permute.xlu0 %4856
      %4858 = vrot.lane.b32.xlu0 %v4726, 125
      %v4859 = vpop.permute.xlu0 %4858
      %4860 = vrot.lane.b32.xlu0 %v4729, 125
      %v4861 = vpop.permute.xlu0 %4860
      %4862 = vrot.lane.b32.xlu0 %v4731, 125
      %v4863 = vpop.permute.xlu0 %4862
      %4864 = vrot.lane.b32.xlu0 %v4733, 125
      %v4865 = vpop.permute.xlu0 %4864
      %4866 = vrot.lane.b32.xlu0 %v4735, 125
      %v4867 = vpop.permute.xlu0 %4866
      %4868 = vrot.lane.b32.xlu0 %v4738, 125
      %v4869 = vpop.permute.xlu0 %4868
      %4870 = vrot.lane.b32.xlu0 %v4740, 125
      %v4871 = vpop.permute.xlu0 %4870
      %4872 = vrot.lane.b32.xlu0 %v4742, 125
      %v4873 = vpop.permute.xlu0 %4872
      %4874 = vrot.lane.b32.xlu0 %v4744, 125
      %v4875 = vpop.permute.xlu0 %4874
      %4876 = vrot.lane.b32.xlu0 %v4747, 125
      %v4877 = vpop.permute.xlu0 %4876
      %4878 = vrot.lane.b32.xlu0 %v4749, 125
      %v4879 = vpop.permute.xlu0 %4878
      %4880 = vrot.lane.b32.xlu0 %v4751, 125
      %v4881 = vpop.permute.xlu0 %4880
      %4882 = vrot.lane.b32.xlu0 %v4753, 125
      %v4883 = vpop.permute.xlu0 %4882
      %4884 = vrot.lane.b32.xlu0 %v4756, 125
      %v4885 = vpop.permute.xlu0 %4884
      %4886 = vrot.lane.b32.xlu0 %v4758, 125
      %v4887 = vpop.permute.xlu0 %4886
      %4888 = vrot.lane.b32.xlu0 %v4760, 125
      %v4889 = vpop.permute.xlu0 %4888
      %4890 = vrot.lane.b32.xlu0 %v4762, 125
      %v4891 = vpop.permute.xlu0 %4890
      %4892 = vrot.lane.b32.xlu0 %v4765, 125
      %v4893 = vpop.permute.xlu0 %4892
      %4894 = vrot.lane.b32.xlu0 %v4767, 125
      %v4895 = vpop.permute.xlu0 %4894
      %4896 = vrot.lane.b32.xlu0 %v4769, 125
      %v4897 = vpop.permute.xlu0 %4896
      %4898 = vrot.lane.b32.xlu0 %v4771, 125
      %v4899 = vpop.permute.xlu0 %4898
      %v4964 = vadd.f32 %v4484, %v4773
      %v4965 = vadd.f32 %v4485, %v4775
      %v4966 = vadd.f32 %v4486, %v4777
      %v4967 = vadd.f32 %v4487, %v4779
      %v4968 = vadd.f32 %v4488, %v4781
      %v4969 = vadd.f32 %v4489, %v4783
      %v4970 = vadd.f32 %v4490, %v4785
      %v4971 = vadd.f32 %v4491, %v4787
      %v4972 = vadd.f32 %v4492, %v4789
      %v4973 = vadd.f32 %v4493, %v4791
      %v4974 = vadd.f32 %v4494, %v4793
      %v4975 = vadd.f32 %v4495, %v4795
      %v4976 = vadd.f32 %v4496, %v4797
      %v4977 = vadd.f32 %v4497, %v4799
      %v4978 = vadd.f32 %v4498, %v4801
      %v4979 = vadd.f32 %v4499, %v4803
      %v4980 = vadd.f32 %v4500, %v4805
      %v4981 = vadd.f32 %v4501, %v4807
      %v4982 = vadd.f32 %v4502, %v4809
      %v4983 = vadd.f32 %v4503, %v4811
      %v4984 = vadd.f32 %v4504, %v4813
      %v4985 = vadd.f32 %v4505, %v4815
      %v4986 = vadd.f32 %v4506, %v4817
      %v4987 = vadd.f32 %v4507, %v4819
      %v4988 = vadd.f32 %v4508, %v4821
      %v4989 = vadd.f32 %v4509, %v4823
      %v4990 = vadd.f32 %v4510, %v4825
      %v4991 = vadd.f32 %v4511, %v4827
      %v4992 = vadd.f32 %v4512, %v4829
      %v4993 = vadd.f32 %v4513, %v4831
      %v4994 = vadd.f32 %v4514, %v4833
      %v4995 = vadd.f32 %v4515, %v4835
      %v4996 = vadd.f32 %v4516, %v4837
      %v4997 = vadd.f32 %v4517, %v4839
      %v4998 = vadd.f32 %v4518, %v4841
      %v4999 = vadd.f32 %v4519, %v4843
      %v5000 = vadd.f32 %v4520, %v4845
      %v5001 = vadd.f32 %v4521, %v4847
      %v5002 = vadd.f32 %v4522, %v4849
      %v5003 = vadd.f32 %v4523, %v4851
      %v5004 = vadd.f32 %v4524, %v4853
      %v5005 = vadd.f32 %v4525, %v4855
      %v5006 = vadd.f32 %v4526, %v4857
      %v5007 = vadd.f32 %v4527, %v4859
      %v5008 = vadd.f32 %v4528, %v4861
      %v5009 = vadd.f32 %v4529, %v4863
      %v5010 = vadd.f32 %v4530, %v4865
      %v5011 = vadd.f32 %v4531, %v4867
      %v5012 = vadd.f32 %v4532, %v4869
      %v5013 = vadd.f32 %v4533, %v4871
      %v5014 = vadd.f32 %v4534, %v4873
      %v5015 = vadd.f32 %v4535, %v4875
      %v5016 = vadd.f32 %v4536, %v4877
      %v5017 = vadd.f32 %v4537, %v4879
      %v5018 = vadd.f32 %v4538, %v4881
      %v5019 = vadd.f32 %v4539, %v4883
      %v5020 = vadd.f32 %v4540, %v4885
      %v5021 = vadd.f32 %v4541, %v4887
      %v5022 = vadd.f32 %v4542, %v4889
      %v5023 = vadd.f32 %v4543, %v4891
      %v5024 = vadd.f32 %v4544, %v4893
      %v5025 = vadd.f32 %v4545, %v4895
      %v5026 = vadd.f32 %v4546, %v4897
      %v5027 = vadd.f32 %v4547, %v4899
      %v5028 = vrot.slane %v4086, 2
      %v5029 = vrot.slane %v4091, 2
      %v5030 = vsel %vm1549, %v5028, %v5029
      %v5031 = vrot.slane %v4096, 2
      %v5032 = vsel %vm1549, %v5029, %v5031
      %v5033 = vrot.slane %v4101, 2
      %v5034 = vsel %vm1549, %v5031, %v5033
      %v5035 = vrot.slane %v4106, 2
      %v5036 = vsel %vm1549, %v5033, %v5035
      %v5037 = vrot.slane %v4111, 2
      %v5038 = vrot.slane %v4116, 2
      %v5039 = vsel %vm1549, %v5037, %v5038
      %v5040 = vrot.slane %v4121, 2
      %v5041 = vsel %vm1549, %v5038, %v5040
      %v5042 = vrot.slane %v4126, 2
      %v5043 = vsel %vm1549, %v5040, %v5042
      %v5044 = vrot.slane %v4131, 2
      %v5045 = vsel %vm1549, %v5042, %v5044
      %v5046 = vrot.slane %v4136, 2
      %v5047 = vrot.slane %v4141, 2
      %v5048 = vsel %vm1549, %v5046, %v5047
      %v5049 = vrot.slane %v4146, 2
      %v5050 = vsel %vm1549, %v5047, %v5049
      %v5051 = vrot.slane %v4151, 2
      %v5052 = vsel %vm1549, %v5049, %v5051
      %v5053 = vrot.slane %v4156, 2
      %v5054 = vsel %vm1549, %v5051, %v5053
      %v5055 = vrot.slane %v4161, 2
      %v5056 = vrot.slane %v4166, 2
      %v5057 = vsel %vm1549, %v5055, %v5056
      %v5058 = vrot.slane %v4171, 2
      %v5059 = vsel %vm1549, %v5056, %v5058
      %v5060 = vrot.slane %v4176, 2
      %v5061 = vsel %vm1549, %v5058, %v5060
      %v5062 = vrot.slane %v4181, 2
      %v5063 = vsel %vm1549, %v5060, %v5062
      %v5064 = vrot.slane %v4186, 2
      %v5065 = vrot.slane %v4191, 2
      %v5066 = vsel %vm1549, %v5064, %v5065
      %v5067 = vrot.slane %v4196, 2
      %v5068 = vsel %vm1549, %v5065, %v5067
      %v5069 = vrot.slane %v4201, 2
      %v5070 = vsel %vm1549, %v5067, %v5069
      %v5071 = vrot.slane %v4206, 2
      %v5072 = vsel %vm1549, %v5069, %v5071
      %v5073 = vrot.slane %v4211, 2
      %v5074 = vrot.slane %v4216, 2
      %v5075 = vsel %vm1549, %v5073, %v5074
      %v5076 = vrot.slane %v4221, 2
      %v5077 = vsel %vm1549, %v5074, %v5076
      %v5078 = vrot.slane %v4226, 2
      %v5079 = vsel %vm1549, %v5076, %v5078
      %v5080 = vrot.slane %v4231, 2
      %v5081 = vsel %vm1549, %v5078, %v5080
      %v5082 = vrot.slane %v4236, 2
      %v5083 = vrot.slane %v4241, 2
      %v5084 = vsel %vm1549, %v5082, %v5083
      %v5085 = vrot.slane %v4246, 2
      %v5086 = vsel %vm1549, %v5083, %v5085
      %v5087 = vrot.slane %v4251, 2
      %v5088 = vsel %vm1549, %v5085, %v5087
      %v5089 = vrot.slane %v4256, 2
      %v5090 = vsel %vm1549, %v5087, %v5089
      %v5091 = vrot.slane %v4261, 2
      %v5092 = vrot.slane %v4266, 2
      %v5093 = vsel %vm1549, %v5091, %v5092
      %v5094 = vrot.slane %v4271, 2
      %v5095 = vsel %vm1549, %v5092, %v5094
      %v5096 = vrot.slane %v4276, 2
      %v5097 = vsel %vm1549, %v5094, %v5096
      %v5098 = vrot.slane %v4281, 2
      %v5099 = vsel %vm1549, %v5096, %v5098
      %v5100 = vrot.slane %v4286, 2
      %v5101 = vrot.slane %v4291, 2
      %v5102 = vsel %vm1549, %v5100, %v5101
      %v5103 = vrot.slane %v4296, 2
      %v5104 = vsel %vm1549, %v5101, %v5103
      %v5105 = vrot.slane %v4301, 2
      %v5106 = vsel %vm1549, %v5103, %v5105
      %v5107 = vrot.slane %v4306, 2
      %v5108 = vsel %vm1549, %v5105, %v5107
      %v5109 = vrot.slane %v4311, 2
      %v5110 = vrot.slane %v4316, 2
      %v5111 = vsel %vm1549, %v5109, %v5110
      %v5112 = vrot.slane %v4321, 2
      %v5113 = vsel %vm1549, %v5110, %v5112
      %v5114 = vrot.slane %v4326, 2
      %v5115 = vsel %vm1549, %v5112, %v5114
      %v5116 = vrot.slane %v4331, 2
      %v5117 = vsel %vm1549, %v5114, %v5116
      %v5118 = vrot.slane %v4336, 2
      %v5119 = vrot.slane %v4341, 2
      %v5120 = vsel %vm1549, %v5118, %v5119
      %v5121 = vrot.slane %v4346, 2
      %v5122 = vsel %vm1549, %v5119, %v5121
      %v5123 = vrot.slane %v4351, 2
      %v5124 = vsel %vm1549, %v5121, %v5123
      %v5125 = vrot.slane %v4356, 2
      %v5126 = vsel %vm1549, %v5123, %v5125
      %v5127 = vrot.slane %v4361, 2
      %v5128 = vrot.slane %v4366, 2
      %v5129 = vsel %vm1549, %v5127, %v5128
      %v5130 = vrot.slane %v4371, 2
      %v5131 = vsel %vm1549, %v5128, %v5130
      %v5132 = vrot.slane %v4376, 2
      %v5133 = vsel %vm1549, %v5130, %v5132
      %v5134 = vrot.slane %v4381, 2
      %v5135 = vsel %vm1549, %v5132, %v5134
      %v5136 = vrot.slane %v4386, 2
      %v5137 = vrot.slane %v4391, 2
      %v5138 = vsel %vm1549, %v5136, %v5137
      %v5139 = vrot.slane %v4396, 2
      %v5140 = vsel %vm1549, %v5137, %v5139
      %v5141 = vrot.slane %v4401, 2
      %v5142 = vsel %vm1549, %v5139, %v5141
      %v5143 = vrot.slane %v4406, 2
      %v5144 = vsel %vm1549, %v5141, %v5143
      %v5145 = vrot.slane %v4411, 2
      %v5146 = vrot.slane %v4416, 2
      %v5147 = vsel %vm1549, %v5145, %v5146
      %v5148 = vrot.slane %v4421, 2
      %v5149 = vsel %vm1549, %v5146, %v5148
      %v5150 = vrot.slane %v4426, 2
      %v5151 = vsel %vm1549, %v5148, %v5150
      %v5152 = vrot.slane %v4431, 2
      %v5153 = vsel %vm1549, %v5150, %v5152
      %v5154 = vrot.slane %v4436, 2
      %v5155 = vrot.slane %v4441, 2
      %v5156 = vsel %vm1549, %v5154, %v5155
      %v5157 = vrot.slane %v4446, 2
      %v5158 = vsel %vm1549, %v5155, %v5157
      %v5159 = vrot.slane %v4451, 2
      %v5160 = vsel %vm1549, %v5157, %v5159
      %v5161 = vrot.slane %v4456, 2
      %v5162 = vsel %vm1549, %v5159, %v5161
      %v5163 = vrot.slane %v4461, 2
      %v5164 = vrot.slane %v4466, 2
      %v5165 = vsel %vm1549, %v5163, %v5164
      %v5166 = vrot.slane %v4471, 2
      %v5167 = vsel %vm1549, %v5164, %v5166
      %v5168 = vrot.slane %v4476, 2
      %v5169 = vsel %vm1549, %v5166, %v5168
      %v5170 = vrot.slane %v4481, 2
      %v5171 = vsel %vm1549, %v5168, %v5170
      %5172 = vrot.lane.b32.xlu0 %v5030, 122
      %v5173 = vpop.permute.xlu0 %5172
      %5174 = vrot.lane.b32.xlu0 %v5032, 122
      %v5175 = vpop.permute.xlu0 %5174
      %5176 = vrot.lane.b32.xlu0 %v5034, 122
      %v5177 = vpop.permute.xlu0 %5176
      %5178 = vrot.lane.b32.xlu0 %v5036, 122
      %v5179 = vpop.permute.xlu0 %5178
      %5180 = vrot.lane.b32.xlu0 %v5039, 122
      %v5181 = vpop.permute.xlu0 %5180
      %5182 = vrot.lane.b32.xlu0 %v5041, 122
      %v5183 = vpop.permute.xlu0 %5182
      %5184 = vrot.lane.b32.xlu0 %v5043, 122
      %v5185 = vpop.permute.xlu0 %5184
      %5186 = vrot.lane.b32.xlu0 %v5045, 122
      %v5187 = vpop.permute.xlu0 %5186
      %5188 = vrot.lane.b32.xlu0 %v5048, 122
      %v5189 = vpop.permute.xlu0 %5188
      %5190 = vrot.lane.b32.xlu0 %v5050, 122
      %v5191 = vpop.permute.xlu0 %5190
      %5192 = vrot.lane.b32.xlu0 %v5052, 122
      %v5193 = vpop.permute.xlu0 %5192
      %5194 = vrot.lane.b32.xlu0 %v5054, 122
      %v5195 = vpop.permute.xlu0 %5194
      %5196 = vrot.lane.b32.xlu0 %v5057, 122
      %v5197 = vpop.permute.xlu0 %5196
      %5198 = vrot.lane.b32.xlu0 %v5059, 122
      %v5199 = vpop.permute.xlu0 %5198
      %5200 = vrot.lane.b32.xlu0 %v5061, 122
      %v5201 = vpop.permute.xlu0 %5200
      %5202 = vrot.lane.b32.xlu0 %v5063, 122
      %v5203 = vpop.permute.xlu0 %5202
      %5204 = vrot.lane.b32.xlu0 %v5066, 122
      %v5205 = vpop.permute.xlu0 %5204
      %5206 = vrot.lane.b32.xlu0 %v5068, 122
      %v5207 = vpop.permute.xlu0 %5206
      %5208 = vrot.lane.b32.xlu0 %v5070, 122
      %v5209 = vpop.permute.xlu0 %5208
      %5210 = vrot.lane.b32.xlu0 %v5072, 122
      %v5211 = vpop.permute.xlu0 %5210
      %5212 = vrot.lane.b32.xlu0 %v5075, 122
      %v5213 = vpop.permute.xlu0 %5212
      %5214 = vrot.lane.b32.xlu0 %v5077, 122
      %v5215 = vpop.permute.xlu0 %5214
      %5216 = vrot.lane.b32.xlu0 %v5079, 122
      %v5217 = vpop.permute.xlu0 %5216
      %5218 = vrot.lane.b32.xlu0 %v5081, 122
      %v5219 = vpop.permute.xlu0 %5218
      %5220 = vrot.lane.b32.xlu0 %v5084, 122
      %v5221 = vpop.permute.xlu0 %5220
      %5222 = vrot.lane.b32.xlu0 %v5086, 122
      %v5223 = vpop.permute.xlu0 %5222
      %5224 = vrot.lane.b32.xlu0 %v5088, 122
      %v5225 = vpop.permute.xlu0 %5224
      %5226 = vrot.lane.b32.xlu0 %v5090, 122
      %v5227 = vpop.permute.xlu0 %5226
      %5228 = vrot.lane.b32.xlu0 %v5093, 122
      %v5229 = vpop.permute.xlu0 %5228
      %5230 = vrot.lane.b32.xlu0 %v5095, 122
      %v5231 = vpop.permute.xlu0 %5230
      %5232 = vrot.lane.b32.xlu0 %v5097, 122
      %v5233 = vpop.permute.xlu0 %5232
      %5234 = vrot.lane.b32.xlu0 %v5099, 122
      %v5235 = vpop.permute.xlu0 %5234
      %5236 = vrot.lane.b32.xlu0 %v5102, 122
      %v5237 = vpop.permute.xlu0 %5236
      %5238 = vrot.lane.b32.xlu0 %v5104, 122
      %v5239 = vpop.permute.xlu0 %5238
      %5240 = vrot.lane.b32.xlu0 %v5106, 122
      %v5241 = vpop.permute.xlu0 %5240
      %5242 = vrot.lane.b32.xlu0 %v5108, 122
      %v5243 = vpop.permute.xlu0 %5242
      %5244 = vrot.lane.b32.xlu0 %v5111, 122
      %v5245 = vpop.permute.xlu0 %5244
      %5246 = vrot.lane.b32.xlu0 %v5113, 122
      %v5247 = vpop.permute.xlu0 %5246
      %5248 = vrot.lane.b32.xlu0 %v5115, 122
      %v5249 = vpop.permute.xlu0 %5248
      %5250 = vrot.lane.b32.xlu0 %v5117, 122
      %v5251 = vpop.permute.xlu0 %5250
      %5252 = vrot.lane.b32.xlu0 %v5120, 122
      %v5253 = vpop.permute.xlu0 %5252
      %5254 = vrot.lane.b32.xlu0 %v5122, 122
      %v5255 = vpop.permute.xlu0 %5254
      %5256 = vrot.lane.b32.xlu0 %v5124, 122
      %v5257 = vpop.permute.xlu0 %5256
      %5258 = vrot.lane.b32.xlu0 %v5126, 122
      %v5259 = vpop.permute.xlu0 %5258
      %5260 = vrot.lane.b32.xlu0 %v5129, 122
      %v5261 = vpop.permute.xlu0 %5260
      %5262 = vrot.lane.b32.xlu0 %v5131, 122
      %v5263 = vpop.permute.xlu0 %5262
      %5264 = vrot.lane.b32.xlu0 %v5133, 122
      %v5265 = vpop.permute.xlu0 %5264
      %5266 = vrot.lane.b32.xlu0 %v5135, 122
      %v5267 = vpop.permute.xlu0 %5266
      %5268 = vrot.lane.b32.xlu0 %v5138, 122
      %v5269 = vpop.permute.xlu0 %5268
      %5270 = vrot.lane.b32.xlu0 %v5140, 122
      %v5271 = vpop.permute.xlu0 %5270
      %5272 = vrot.lane.b32.xlu0 %v5142, 122
      %v5273 = vpop.permute.xlu0 %5272
      %5274 = vrot.lane.b32.xlu0 %v5144, 122
      %v5275 = vpop.permute.xlu0 %5274
      %5276 = vrot.lane.b32.xlu0 %v5147, 122
      %v5277 = vpop.permute.xlu0 %5276
      %5278 = vrot.lane.b32.xlu0 %v5149, 122
      %v5279 = vpop.permute.xlu0 %5278
      %5280 = vrot.lane.b32.xlu0 %v5151, 122
      %v5281 = vpop.permute.xlu0 %5280
      %5282 = vrot.lane.b32.xlu0 %v5153, 122
      %v5283 = vpop.permute.xlu0 %5282
      %5284 = vrot.lane.b32.xlu0 %v5156, 122
      %v5285 = vpop.permute.xlu0 %5284
      %5286 = vrot.lane.b32.xlu0 %v5158, 122
      %v5287 = vpop.permute.xlu0 %5286
      %5288 = vrot.lane.b32.xlu0 %v5160, 122
      %v5289 = vpop.permute.xlu0 %5288
      %5290 = vrot.lane.b32.xlu0 %v5162, 122
      %v5291 = vpop.permute.xlu0 %5290
      %5292 = vrot.lane.b32.xlu0 %v5165, 122
      %v5293 = vpop.permute.xlu0 %5292
      %5294 = vrot.lane.b32.xlu0 %v5167, 122
      %v5295 = vpop.permute.xlu0 %5294
      %5296 = vrot.lane.b32.xlu0 %v5169, 122
      %v5297 = vpop.permute.xlu0 %5296
      %5298 = vrot.lane.b32.xlu0 %v5171, 122
      %v5299 = vpop.permute.xlu0 %5298
      %v5364 = vadd.f32 %v4964, %v5173
      %v5365 = vadd.f32 %v4965, %v5175
      %v5366 = vadd.f32 %v4966, %v5177
      %v5367 = vadd.f32 %v4967, %v5179
      %v5368 = vadd.f32 %v4968, %v5181
      %v5369 = vadd.f32 %v4969, %v5183
      %v5370 = vadd.f32 %v4970, %v5185
      %v5371 = vadd.f32 %v4971, %v5187
      %v5372 = vadd.f32 %v4972, %v5189
      %v5373 = vadd.f32 %v4973, %v5191
      %v5374 = vadd.f32 %v4974, %v5193
      %v5375 = vadd.f32 %v4975, %v5195
      %v5376 = vadd.f32 %v4976, %v5197
      %v5377 = vadd.f32 %v4977, %v5199
      %v5378 = vadd.f32 %v4978, %v5201
      %v5379 = vadd.f32 %v4979, %v5203
      %v5380 = vadd.f32 %v4980, %v5205
      %v5381 = vadd.f32 %v4981, %v5207
      %v5382 = vadd.f32 %v4982, %v5209
      %v5383 = vadd.f32 %v4983, %v5211
      %v5384 = vadd.f32 %v4984, %v5213
      %v5385 = vadd.f32 %v4985, %v5215
      %v5386 = vadd.f32 %v4986, %v5217
      %v5387 = vadd.f32 %v4987, %v5219
      %v5388 = vadd.f32 %v4988, %v5221
      %v5389 = vadd.f32 %v4989, %v5223
      %v5390 = vadd.f32 %v4990, %v5225
      %v5391 = vadd.f32 %v4991, %v5227
      %v5392 = vadd.f32 %v4992, %v5229
      %v5393 = vadd.f32 %v4993, %v5231
      %v5394 = vadd.f32 %v4994, %v5233
      %v5395 = vadd.f32 %v4995, %v5235
      %v5396 = vadd.f32 %v4996, %v5237
      %v5397 = vadd.f32 %v4997, %v5239
      %v5398 = vadd.f32 %v4998, %v5241
      %v5399 = vadd.f32 %v4999, %v5243
      %v5400 = vadd.f32 %v5000, %v5245
      %v5401 = vadd.f32 %v5001, %v5247
      %v5402 = vadd.f32 %v5002, %v5249
      %v5403 = vadd.f32 %v5003, %v5251
      %v5404 = vadd.f32 %v5004, %v5253
      %v5405 = vadd.f32 %v5005, %v5255
      %v5406 = vadd.f32 %v5006, %v5257
      %v5407 = vadd.f32 %v5007, %v5259
      %v5408 = vadd.f32 %v5008, %v5261
      %v5409 = vadd.f32 %v5009, %v5263
      %v5410 = vadd.f32 %v5010, %v5265
      %v5411 = vadd.f32 %v5011, %v5267
      %v5412 = vadd.f32 %v5012, %v5269
      %v5413 = vadd.f32 %v5013, %v5271
      %v5414 = vadd.f32 %v5014, %v5273
      %v5415 = vadd.f32 %v5015, %v5275
      %v5416 = vadd.f32 %v5016, %v5277
      %v5417 = vadd.f32 %v5017, %v5279
      %v5418 = vadd.f32 %v5018, %v5281
      %v5419 = vadd.f32 %v5019, %v5283
      %v5420 = vadd.f32 %v5020, %v5285
      %v5421 = vadd.f32 %v5021, %v5287
      %v5422 = vadd.f32 %v5022, %v5289
      %v5423 = vadd.f32 %v5023, %v5291
      %v5424 = vadd.f32 %v5024, %v5293
      %v5425 = vadd.f32 %v5025, %v5295
      %v5426 = vadd.f32 %v5026, %v5297
      %v5427 = vadd.f32 %v5027, %v5299
      %v5428 = vld [vmem:[%s2] sm:$0x1]
      %v5430 = vlaneseq
      %v5431 = vshrl.u32 %v5430, 7
      %v5432 = vsub.s32 0, %v5431
      %v5433 = vrot.slane %v5428, %v5432
      %v5435 = vadd.f32 %v5364, %v5433
      %v5436 = vadd.f32 %v5365, %v5433
      %v5437 = vadd.f32 %v5366, %v5433
      %v5438 = vadd.f32 %v5367, %v5433
      %v5439 = vadd.f32 %v5368, %v5433
      %v5440 = vadd.f32 %v5369, %v5433
      %v5441 = vadd.f32 %v5370, %v5433
      %v5442 = vadd.f32 %v5371, %v5433
      %v5443 = vadd.f32 %v5372, %v5433
      %v5444 = vadd.f32 %v5373, %v5433
      %v5445 = vadd.f32 %v5374, %v5433
      %v5446 = vadd.f32 %v5375, %v5433
      %v5447 = vadd.f32 %v5376, %v5433
      %v5448 = vadd.f32 %v5377, %v5433
      %v5449 = vadd.f32 %v5378, %v5433
      %v5450 = vadd.f32 %v5379, %v5433
      %v5451 = vadd.f32 %v5380, %v5433
      %v5452 = vadd.f32 %v5381, %v5433
      %v5453 = vadd.f32 %v5382, %v5433
      %v5454 = vadd.f32 %v5383, %v5433
      %v5455 = vadd.f32 %v5384, %v5433
      %v5456 = vadd.f32 %v5385, %v5433
      %v5457 = vadd.f32 %v5386, %v5433
      %v5458 = vadd.f32 %v5387, %v5433
      %v5459 = vadd.f32 %v5388, %v5433
      %v5460 = vadd.f32 %v5389, %v5433
      %v5461 = vadd.f32 %v5390, %v5433
      %v5462 = vadd.f32 %v5391, %v5433
      %v5463 = vadd.f32 %v5392, %v5433
      %v5464 = vadd.f32 %v5393, %v5433
      %v5465 = vadd.f32 %v5394, %v5433
      %v5466 = vadd.f32 %v5395, %v5433
      %v5467 = vadd.f32 %v5396, %v5433
      %v5468 = vadd.f32 %v5397, %v5433
      %v5469 = vadd.f32 %v5398, %v5433
      %v5470 = vadd.f32 %v5399, %v5433
      %v5471 = vadd.f32 %v5400, %v5433
      %v5472 = vadd.f32 %v5401, %v5433
      %v5473 = vadd.f32 %v5402, %v5433
      %v5474 = vadd.f32 %v5403, %v5433
      %v5475 = vadd.f32 %v5404, %v5433
      %v5476 = vadd.f32 %v5405, %v5433
      %v5477 = vadd.f32 %v5406, %v5433
      %v5478 = vadd.f32 %v5407, %v5433
      %v5479 = vadd.f32 %v5408, %v5433
      %v5480 = vadd.f32 %v5409, %v5433
      %v5481 = vadd.f32 %v5410, %v5433
      %v5482 = vadd.f32 %v5411, %v5433
      %v5483 = vadd.f32 %v5412, %v5433
      %v5484 = vadd.f32 %v5413, %v5433
      %v5485 = vadd.f32 %v5414, %v5433
      %v5486 = vadd.f32 %v5415, %v5433
      %v5487 = vadd.f32 %v5416, %v5433
      %v5488 = vadd.f32 %v5417, %v5433
      %v5489 = vadd.f32 %v5418, %v5433
      %v5490 = vadd.f32 %v5419, %v5433
      %v5491 = vadd.f32 %v5420, %v5433
      %v5492 = vadd.f32 %v5421, %v5433
      %v5493 = vadd.f32 %v5422, %v5433
      %v5494 = vadd.f32 %v5423, %v5433
      %v5495 = vadd.f32 %v5424, %v5433
      %v5496 = vadd.f32 %v5425, %v5433
      %v5497 = vadd.f32 %v5426, %v5433
      %v5498 = vadd.f32 %v5427, %v5433
      %vm5499 = vcmask 23552
      %5500 = vst.msk [vmem:[%s208] sm:$0xff] %vm5499, %v5435
      %5501 = vst.msk [vmem:[%s208 + $0x8] sm:$0xff] %vm5499, %v5436
      %5502 = vst.msk [vmem:[%s208 + $0x10] sm:$0xff] %vm5499, %v5437
      %5503 = vst.msk [vmem:[%s208 + $0x18] sm:$0xff] %vm5499, %v5438
      %5504 = vst.msk [vmem:[%s208 + $0x20] sm:$0xff] %vm5499, %v5439
      %5505 = vst.msk [vmem:[%s208 + $0x28] sm:$0xff] %vm5499, %v5440
      %5506 = vst.msk [vmem:[%s208 + $0x30] sm:$0xff] %vm5499, %v5441
      %5507 = vst.msk [vmem:[%s208 + $0x38] sm:$0xff] %vm5499, %v5442
      %5508 = vst.msk [vmem:[%s208 + $0x40] sm:$0xff] %vm5499, %v5443
      %5509 = vst.msk [vmem:[%s208 + $0x48] sm:$0xff] %vm5499, %v5444
      %5510 = vst.msk [vmem:[%s208 + $0x50] sm:$0xff] %vm5499, %v5445
      %5511 = vst.msk [vmem:[%s208 + $0x58] sm:$0xff] %vm5499, %v5446
      %5512 = vst.msk [vmem:[%s208 + $0x60] sm:$0xff] %vm5499, %v5447
      %5513 = vst.msk [vmem:[%s208 + $0x68] sm:$0xff] %vm5499, %v5448
      %5514 = vst.msk [vmem:[%s208 + $0x70] sm:$0xff] %vm5499, %v5449
      %5515 = vst.msk [vmem:[%s208 + $0x78] sm:$0xff] %vm5499, %v5450
      %5516 = vst.msk [vmem:[%s208 + $0x80] sm:$0xff] %vm5499, %v5451
      %5517 = vst.msk [vmem:[%s208 + $0x88] sm:$0xff] %vm5499, %v5452
      %5518 = vst.msk [vmem:[%s208 + $0x90] sm:$0xff] %vm5499, %v5453
      %5519 = vst.msk [vmem:[%s208 + $0x98] sm:$0xff] %vm5499, %v5454
      %5520 = vst.msk [vmem:[%s208 + $0xa0] sm:$0xff] %vm5499, %v5455
      %5521 = vst.msk [vmem:[%s208 + $0xa8] sm:$0xff] %vm5499, %v5456
      %5522 = vst.msk [vmem:[%s208 + $0xb0] sm:$0xff] %vm5499, %v5457
      %5523 = vst.msk [vmem:[%s208 + $0xb8] sm:$0xff] %vm5499, %v5458
      %5524 = vst.msk [vmem:[%s208 + $0xc0] sm:$0xff] %vm5499, %v5459
      %5525 = vst.msk [vmem:[%s208 + $0xc8] sm:$0xff] %vm5499, %v5460
      %5526 = vst.msk [vmem:[%s208 + $0xd0] sm:$0xff] %vm5499, %v5461
      %5527 = vst.msk [vmem:[%s208 + $0xd8] sm:$0xff] %vm5499, %v5462
      %5528 = vst.msk [vmem:[%s208 + $0xe0] sm:$0xff] %vm5499, %v5463
      %5529 = vst.msk [vmem:[%s208 + $0xe8] sm:$0xff] %vm5499, %v5464
      %5530 = vst.msk [vmem:[%s208 + $0xf0] sm:$0xff] %vm5499, %v5465
      %5531 = vst.msk [vmem:[%s208 + $0xf8] sm:$0xff] %vm5499, %v5466
      %5532 = vst.msk [vmem:[%s208 + $0x100] sm:$0xff] %vm5499, %v5467
      %5533 = vst.msk [vmem:[%s208 + $0x108] sm:$0xff] %vm5499, %v5468
      %5534 = vst.msk [vmem:[%s208 + $0x110] sm:$0xff] %vm5499, %v5469
      %5535 = vst.msk [vmem:[%s208 + $0x118] sm:$0xff] %vm5499, %v5470
      %5536 = vst.msk [vmem:[%s208 + $0x120] sm:$0xff] %vm5499, %v5471
      %5537 = vst.msk [vmem:[%s208 + $0x128] sm:$0xff] %vm5499, %v5472
      %5538 = vst.msk [vmem:[%s208 + $0x130] sm:$0xff] %vm5499, %v5473
      %5539 = vst.msk [vmem:[%s208 + $0x138] sm:$0xff] %vm5499, %v5474
      %5540 = vst.msk [vmem:[%s208 + $0x140] sm:$0xff] %vm5499, %v5475
      %5541 = vst.msk [vmem:[%s208 + $0x148] sm:$0xff] %vm5499, %v5476
      %5542 = vst.msk [vmem:[%s208 + $0x150] sm:$0xff] %vm5499, %v5477
      %5543 = vst.msk [vmem:[%s208 + $0x158] sm:$0xff] %vm5499, %v5478
      %5544 = vst.msk [vmem:[%s208 + $0x160] sm:$0xff] %vm5499, %v5479
      %5545 = vst.msk [vmem:[%s208 + $0x168] sm:$0xff] %vm5499, %v5480
      %5546 = vst.msk [vmem:[%s208 + $0x170] sm:$0xff] %vm5499, %v5481
      %5547 = vst.msk [vmem:[%s208 + $0x178] sm:$0xff] %vm5499, %v5482
      %5548 = vst.msk [vmem:[%s208 + $0x180] sm:$0xff] %vm5499, %v5483
      %5549 = vst.msk [vmem:[%s208 + $0x188] sm:$0xff] %vm5499, %v5484
      %5550 = vst.msk [vmem:[%s208 + $0x190] sm:$0xff] %vm5499, %v5485
      %5551 = vst.msk [vmem:[%s208 + $0x198] sm:$0xff] %vm5499, %v5486
      %5552 = vst.msk [vmem:[%s208 + $0x1a0] sm:$0xff] %vm5499, %v5487
      %5553 = vst.msk [vmem:[%s208 + $0x1a8] sm:$0xff] %vm5499, %v5488
      %5554 = vst.msk [vmem:[%s208 + $0x1b0] sm:$0xff] %vm5499, %v5489
      %5555 = vst.msk [vmem:[%s208 + $0x1b8] sm:$0xff] %vm5499, %v5490
      %5556 = vst.msk [vmem:[%s208 + $0x1c0] sm:$0xff] %vm5499, %v5491
      %5557 = vst.msk [vmem:[%s208 + $0x1c8] sm:$0xff] %vm5499, %v5492
      %5558 = vst.msk [vmem:[%s208 + $0x1d0] sm:$0xff] %vm5499, %v5493
      %5559 = vst.msk [vmem:[%s208 + $0x1d8] sm:$0xff] %vm5499, %v5494
      %5560 = vst.msk [vmem:[%s208 + $0x1e0] sm:$0xff] %vm5499, %v5495
      %5561 = vst.msk [vmem:[%s208 + $0x1e8] sm:$0xff] %vm5499, %v5496
      %5562 = vst.msk [vmem:[%s208 + $0x1f0] sm:$0xff] %vm5499, %v5497
      %5563 = vst.msk [vmem:[%s208 + $0x1f8] sm:$0xff] %vm5499, %v5498
      %s5564 = smul.u32 16, %s19
      %p5565 = scmp.lt.s32.totalorder %s18, 1
      %s5566 = scalar_select %p5565, %s18, 1
      %p5567 = scmp.lt.s32.totalorder %s5564, 31
      %s5568 = scalar_select %p5567, %s5564, 31
      %s5569 = smul.addr %s5568, 4
      %s5570 = smul.addr %s5566, 128
      %s5571 = sadd.s32 %s5569, %s5570
      %s5572 = smul.addr %s5571, 8
      %s5573 = scalar_lea.vmem %s3, %s5572
      // Predicated region
      $region33: #{decoder1_forward.1} parent=31 // pred_check
        %p5574 = pneg %p116
      $region34: #{decoder1_forward.1} parent=31 // pred_check_branch
        %5576 = sbr.rel (%p5574) target = $region36
      $region35: #{decoder1_forward.1} parent=31 // pred_region
        %s5577 = smul.u32 16, %s19
      $region36: #{decoder1_forward.1} parent=31 // pred_fallthru
        _
    $region32: #{decoder1_forward.1} parent=5 // pred_fallthru
      _
    %p5578 = scmp.le.s32.totalorder 2, %s9
    // Predicated region
    $region37: #{decoder1_forward.1} parent=5 // pred_check
      %p5579 = pneg %p5578
    $region38: #{decoder1_forward.1} parent=5 // pred_check_branch
      %5581 = sbr.rel (%p5579) target = $region40
    $region39: #{decoder1_forward.1} parent=5 // pred_region
      %s5582 = ssub.s32 %s9, 2
      // Predicated region
      $region41: #{decoder1_forward.1} parent=39 // pred_check
        %p5583 = pneg %p122
      $region42: #{decoder1_forward.1} parent=39 // pred_check_branch
        %5585 = sbr.rel (%p5583) target = $region44
      $region43: #{decoder1_forward.1} parent=39 // pred_region
        %s5586 = smul.u32 16, %s21
        %p5587 = scmp.lt.s32.totalorder %s20, 1
        %s5588 = scalar_select %p5587, %s20, 1
        %p5589 = scmp.lt.s32.totalorder %s5586, 31
        %s5590 = scalar_select %p5589, %s5586, 31
        %s5591 = smul.addr %s5590, 4
        %s5592 = smul.addr %s5588, 128
        %s5593 = sadd.s32 %s5591, %s5592
        %s5594 = smul.addr %s5593, 8
        %s5595 = scalar_lea.vmem %s3, %s5594
      $region44: #{decoder1_forward.1} parent=39 // pred_fallthru
        _
    $region40: #{decoder1_forward.1} parent=5 // pred_fallthru
      _
  $region6: #{decoder1_forward.1} parent=0 // loop_footer
    %s13 = sadd.s32 1, %s9
  $region7: #{decoder1_forward.1} parent=0 // loop_footer_branch
    %8 = sbr.rel target = $region3
  $region8: #{decoder1_forward.1} parent=0 // loop_exit
    _

</llo_original>
